<compile_context>
chip_gen: v6e
topology: v6e:2x2x1
jax: 0.10.0
libtpu: 0.0.40
codegen_flags: <defaults>
</compile_context>

<pallas_src>
import functools

import jax
import jax.numpy as jnp
from jax import lax
from jax.experimental import pallas as pl
from jax.experimental.pallas import tpu as pltpu


def _default_gate_dtype():
    """bf16 gate math on generations with bf16 VPU/EUP (v6e, v7x); f32 otherwise."""
    try:
        kind = jax.devices()[0].device_kind.lower()
    except Exception:
        return jnp.float32
    if "v6" in kind or "v7" in kind:
        return jnp.bfloat16
    return jnp.float32


def lstm_classifier_kernel(x_ref, wih_ref, whh_ref, b_ref, wfc_ref, bfc_ref,
                           out_ref, gx_scratch, h_scratch, c_scratch,
                           *, seq_len, t_chunk, batch_pad, hidden, gate_dtype):
    chunk = pl.program_id(0)
    n_chunks = pl.num_programs(0)
    H = hidden
    B = batch_pad

    @pl.when(chunk == 0)
    def _():
        h_scratch[...] = jnp.zeros_like(h_scratch)
        c_scratch[...] = jnp.zeros_like(c_scratch)

    # Hoisted input projection + bias for the whole chunk: one batched MXU matmul
    # (t_chunk*B, E) @ (E, 4H), off the h-dependent critical path.
    gx_scratch[...] = (
        jnp.dot(x_ref[...], wih_ref[...], preferred_element_type=jnp.float32)
        + b_ref[...])

    whh = whh_ref[...]  # (H, 4H) bf16; resident across all steps of the chunk.

    def step(t, carry):
        h, c = carry                       # h: gate_dtype, c: float32
        row = pl.multiple_of(t * B, B)
        gates = gx_scratch[pl.ds(row, B), :] + jnp.dot(
            h.astype(whh.dtype), whh, preferred_element_type=jnp.float32)
        g = gates.astype(gate_dtype)
        # PyTorch gate order [i, f, g, o]; i/f sigmoids fused (one contiguous 2H slab).
        if_g = jax.nn.sigmoid(g[:, 0 * H:2 * H])
        i_g = if_g[:, 0 * H:1 * H]
        f_g = if_g[:, 1 * H:2 * H]
        g_g = jnp.tanh(g[:, 2 * H:3 * H])
        o_g = jax.nn.sigmoid(g[:, 3 * H:4 * H])
        c = f_g.astype(jnp.float32) * c + (i_g * g_g).astype(jnp.float32)
        h = o_g * jnp.tanh(c.astype(gate_dtype))
        return h, c

    h0 = h_scratch[...].astype(gate_dtype)
    c0 = c_scratch[...]
    if seq_len % t_chunk == 0:
        # Static trip count: partial unroll lets the scheduler overlap step t's EUP
        # tail with step t+1's gx slice load / LHS cast / MXU push.
        h, c = lax.fori_loop(0, t_chunk, step, (h0, c0), unroll=min(8, t_chunk))
    else:
        steps = jnp.minimum(seq_len - chunk * t_chunk, t_chunk)
        h, c = lax.fori_loop(0, steps, step, (h0, c0))
    h_scratch[...] = h.astype(jnp.float32)
    c_scratch[...] = c

    @pl.when(chunk == n_chunks - 1)
    def _():
        # fc has a single output column: VPU multiply + lane reduce instead of a
        # degenerate (H, 1) MXU matmul.
        hf = h.astype(jnp.float32)
        logits = jnp.sum(hf * wfc_ref[...], axis=-1, keepdims=True) + bfc_ref[...]
        out_ref[...] = jax.nn.sigmoid(logits)


def lstm_classifier_forward(x_tokens, params, *, t_chunk=128, gate_dtype=None,
                            vmem_budget_bytes=40 * 1024 * 1024):
    """x_tokens: (B, T) int32 token ids. Returns (B, 1) float32 probabilities."""
    emb = params["embedding"]          # (V, E)  f32
    w_ih = params["w_ih_t"]            # (E, 4H) bf16
    w_hh = params["w_hh_t"]            # (H, 4H) bf16
    b_g = params["b_gates"]            # (1, 4H) f32  (= b_ih + b_hh)
    w_fc = params["w_fc"]              # (1, H)  f32
    b_fc = params["b_fc"]              # (1, 1)  f32

    B, T = x_tokens.shape
    E = emb.shape[1]
    H = w_hh.shape[0]

    if gate_dtype is None:
        gate_dtype = _default_gate_dtype()

    # Pad batch to a multiple of 16: the recurrent LHS is bf16 and 16 sublanes keep
    # the packed vregs full (8 leaves them half-packed).
    B_pad = max(16, ((B + 15) // 16) * 16)

    # Derive t_chunk from an explicit VMEM budget (gx_scratch dominates); this keeps
    # the same code within v7x's 64 MiB physical VMEM and below v5e's raised limit.
    def vmem_usage(tc):
        gx = tc * B_pad * 4 * H * 4                      # f32 hoisted gates
        x_blk = 2 * tc * B_pad * E * 2                   # double-buffered bf16 input
        w = 2 * ((E * 4 * H + H * 4 * H) * 2 + (4 * H + H + 1) * 4)
        state = 2 * B_pad * H * 4
        return gx + x_blk + w + state + 2 * B_pad * 4

    t_chunk = max(8, min(t_chunk, T))
    while t_chunk > 8 and vmem_usage(t_chunk) > vmem_budget_bytes:
        t_chunk = max(8, t_chunk // 2)

    n_chunks = pl.cdiv(T, t_chunk)
    T_pad = n_chunks * t_chunk
    vmem_limit = int(min(max(vmem_usage(t_chunk) * 3 // 2, 32 * 1024 * 1024),
                         56 * 1024 * 1024))

    # Embedding gather directly in time-major order and in bf16 (the kernel consumes
    # bf16 anyway), then pad batch/time and flatten to rows.
    x_tbe = jnp.take(emb.astype(jnp.bfloat16), x_tokens.T, axis=0)   # (T, B, E) bf16
    x_tbe = jnp.pad(x_tbe, ((0, T_pad - T), (0, B_pad - B), (0, 0)))
    x_rows = x_tbe.reshape(T_pad * B_pad, E)                         # (T_pad*B_pad, E)

    kernel = functools.partial(lstm_classifier_kernel, seq_len=T,
                               t_chunk=t_chunk, batch_pad=B_pad, hidden=H,
                               gate_dtype=gate_dtype)

    out = pl.pallas_call(
        kernel,
        out_shape=jax.ShapeDtypeStruct((B_pad, 1), jnp.float32),
        grid_spec=pltpu.PrefetchScalarGridSpec(
            num_scalar_prefetch=0,
            grid=(n_chunks,),
            in_specs=[
                pl.BlockSpec((t_chunk * B_pad, E), lambda c: (c, 0)),   # x chunk
                pl.BlockSpec((E, 4 * H), lambda c: (0, 0)),             # W_ih^T (grid-invariant)
                pl.BlockSpec((H, 4 * H), lambda c: (0, 0)),             # W_hh^T (grid-invariant)
                pl.BlockSpec((1, 4 * H), lambda c: (0, 0)),             # b_ih + b_hh
                pl.BlockSpec((1, H), lambda c: (0, 0)),                 # W_fc row
                pl.BlockSpec((1, 1), lambda c: (0, 0)),                 # b_fc
            ],
            out_specs=pl.BlockSpec((B_pad, 1), lambda c: (0, 0)),
            scratch_shapes=[
                pltpu.VMEM((t_chunk * B_pad, 4 * H), jnp.float32),  # hoisted gates_x
                pltpu.VMEM((B_pad, H), jnp.float32),                # h state
                pltpu.VMEM((B_pad, H), jnp.float32),                # c state
            ],
        ),
        compiler_params=pltpu.CompilerParams(
            dimension_semantics=("arbitrary",),     # serial recurrence over time chunks
            vmem_limit_bytes=vmem_limit,
        ),
    )(x_rows, w_ih, w_hh, b_g, w_fc, b_fc)
    return out[:B]


def init_params(key, vocab_size, embed_dim, hidden_dim):
    ks = jax.random.split(key, 7)
    k = 1.0 / jnp.sqrt(hidden_dim)
    embedding = jax.random.normal(ks[0], (vocab_size, embed_dim), jnp.float32)
    w_ih = jax.random.uniform(ks[1], (4 * hidden_dim, embed_dim), jnp.float32, -k, k)
    w_hh = jax.random.uniform(ks[2], (4 * hidden_dim, hidden_dim), jnp.float32, -k, k)
    b_ih = jax.random.uniform(ks[3], (4 * hidden_dim,), jnp.float32, -k, k)
    b_hh = jax.random.uniform(ks[4], (4 * hidden_dim,), jnp.float32, -k, k)
    w_fc = jax.random.uniform(ks[5], (1, hidden_dim), jnp.float32, -k, k)
    b_fc = jax.random.uniform(ks[6], (1,), jnp.float32, -k, k)
    return {
        "embedding": embedding,
        # bf16 MXU weights, f32 accumulation in the kernel.
        "w_ih_t": w_ih.T.astype(jnp.bfloat16),     # (E, 4H)
        "w_hh_t": w_hh.T.astype(jnp.bfloat16),     # (H, 4H)
        "b_gates": (b_ih + b_hh)[None, :],          # (1, 4H) f32
        "w_fc": w_fc,                               # (1, H)  f32
        "b_fc": b_fc[None, :],                      # (1, 1)  f32
    }


def reference_forward(x_tokens, params):
    """Pure-JAX reference: bf16 matmul inputs, f32 accumulation and f32 gate math."""
    emb = params["embedding"]
    x = jnp.take(emb, x_tokens, axis=0)              # (B, T, E)
    wih = params["w_ih_t"]
    whh = params["w_hh_t"]
    b = params["b_gates"]
    B, T, _ = x.shape
    H = whh.shape[0]
    h = jnp.zeros((B, H), jnp.float32)
    c = jnp.zeros((B, H), jnp.float32)
    for t in range(T):
        gates = (jnp.dot(x[:, t, :].astype(wih.dtype), wih,
                         preferred_element_type=jnp.float32)
                 + jnp.dot(h.astype(whh.dtype), whh,
                           preferred_element_type=jnp.float32)
                 + b)
        i_g = jax.nn.sigmoid(gates[:, 0 * H:1 * H])
        f_g = jax.nn.sigmoid(gates[:, 1 * H:2 * H])
        g_g = jnp.tanh(gates[:, 2 * H:3 * H])
        o_g = jax.nn.sigmoid(gates[:, 3 * H:4 * H])
        c = f_g * c + i_g * g_g
        h = o_g * jnp.tanh(c)
    logits = jnp.sum(h * params["w_fc"], axis=-1, keepdims=True) + params["b_fc"]
    return jax.nn.sigmoid(logits)


if __name__ == "__main__":
    # Small shapes consistent with the module defaults: embed_dim=128, hidden_dim=256.
    VOCAB, EMBED, HIDDEN = 64, 128, 256
    B, T = 2, 8

    key = jax.random.PRNGKey(0)
    k_params, k_tokens = jax.random.split(key)
    params = init_params(k_params, VOCAB, EMBED, HIDDEN)
    x_tokens = jax.random.randint(k_tokens, (B, T), 0, VOCAB, dtype=jnp.int32)

    gate_dtype = _default_gate_dtype()
    out = jax.block_until_ready(
        lstm_classifier_forward(x_tokens, params, gate_dtype=gate_dtype))
    ref = jax.block_until_ready(reference_forward(x_tokens, params))

    assert out.shape == (B, 1)
    # f32 gate math matches the reference tightly; bf16 gate math (v6e/v7x) gets a
    # bf16-appropriate tolerance on the (0, 1) probability output.
    tol = 1e-4 if gate_dtype == jnp.float32 else 2e-2
    assert jnp.allclose(out, ref, atol=tol, rtol=tol), (out, ref)

    print("KERNEL_OK")
</pallas_src>

<mosaic_0001>
module attributes {stable_mosaic.version = 11 : i64} {
  func.func @lstm_classifier_kernel(%arg0: i32, %arg1: memref<128x128xbf16, #tpu.memory_space<vmem>>, %arg2: memref<128x1024xbf16, #tpu.memory_space<vmem>>, %arg3: memref<256x1024xbf16, #tpu.memory_space<vmem>>, %arg4: memref<1x1024xf32, #tpu.memory_space<vmem>>, %arg5: memref<1x256xf32, #tpu.memory_space<vmem>>, %arg6: memref<1x1xf32, #tpu.memory_space<vmem>>, %arg7: memref<16x1xf32, #tpu.memory_space<vmem>>, %arg8: memref<128x1024xf32, #tpu.memory_space<vmem>>, %arg9: memref<16x256xf32, #tpu.memory_space<vmem>>, %arg10: memref<16x256xf32, #tpu.memory_space<vmem>>) attributes {dimension_semantics = [#tpu.dimension_semantics<arbitrary>], iteration_bounds = array<i64: 1>, scalar_prefetch = 0 : i64, scratch_operands = 3 : i64, tpu.core_type = #tpu.core_type<tc>, window_params = [{transform_indices = @transform_0, window_bounds = array<i64: 128, 128>}, {pipeline_mode = #tpu.pipeline_mode<synchronous>, transform_indices = @transform_1, window_bounds = array<i64: 128, 1024>}, {pipeline_mode = #tpu.pipeline_mode<synchronous>, transform_indices = @transform_2, window_bounds = array<i64: 256, 1024>}, {pipeline_mode = #tpu.pipeline_mode<synchronous>, transform_indices = @transform_3, window_bounds = array<i64: 1, 1024>}, {pipeline_mode = #tpu.pipeline_mode<synchronous>, transform_indices = @transform_4, window_bounds = array<i64: 1, 256>}, {pipeline_mode = #tpu.pipeline_mode<synchronous>, transform_indices = @transform_5, window_bounds = array<i64: 1, 1>}, {pipeline_mode = #tpu.pipeline_mode<synchronous>, transform_indices = @transform_6, window_bounds = array<i64: 16, 1>}]} {
    %c0_i32 = arith.constant 0 : i32
    %0 = arith.cmpi eq, %arg0, %c0_i32 : i32
    %1 = arith.extui %0 : i1 to i32
    %c0_i32_0 = arith.constant 0 : i32
    %2 = arith.cmpi ne, %1, %c0_i32_0 : i32
    scf.if %2 {
      %cst_60 = arith.constant 0.000000e+00 : f32
      %242 = vector.broadcast %cst_60 : f32 to vector<16x256xf32>
      %c0_61 = arith.constant 0 : index
      %c0_62 = arith.constant 0 : index
      %243 = vector.load %arg9[%c0_61, %c0_62] : memref<16x256xf32, #tpu.memory_space<vmem>>, vector<16x256xf32>
      tpu.vector_store %arg9[%c0_61, %c0_62], %242 {strides = array<i32>} : memref<16x256xf32, #tpu.memory_space<vmem>>, vector<16x256xf32>,
      %cst_63 = arith.constant 0.000000e+00 : f32
      %244 = vector.broadcast %cst_63 : f32 to vector<16x256xf32>
      %c0_64 = arith.constant 0 : index
      %c0_65 = arith.constant 0 : index
      %245 = vector.load %arg10[%c0_64, %c0_65] : memref<16x256xf32, #tpu.memory_space<vmem>>, vector<16x256xf32>
      tpu.vector_store %arg10[%c0_64, %c0_65], %244 {strides = array<i32>} : memref<16x256xf32, #tpu.memory_space<vmem>>, vector<16x256xf32>,
    } else {
    }
    %c0 = arith.constant 0 : index
    %c0_1 = arith.constant 0 : index
    %3 = vector.load %arg1[%c0, %c0_1] : memref<128x128xbf16, #tpu.memory_space<vmem>>, vector<128x128xbf16>
    %c0_2 = arith.constant 0 : index
    %c0_3 = arith.constant 0 : index
    %4 = vector.load %arg2[%c0_2, %c0_3] : memref<128x1024xbf16, #tpu.memory_space<vmem>>, vector<128x1024xbf16>
    %cst = arith.constant dense<0.000000e+00> : vector<128x1024xf32>
    %5 = tpu.matmul %3, %4, %cst {dimension_numbers = #tpu.dot_dimension_numbers<[1], [0], [0], [1], [0, 0, 1, 1], [], []>} : vector<128x128xbf16>, vector<128x1024xbf16>, vector<128x1024xf32> -> vector<128x1024xf32>
    %c0_4 = arith.constant 0 : index
    %c0_5 = arith.constant 0 : index
    %6 = vector.load %arg4[%c0_4, %c0_5] : memref<1x1024xf32, #tpu.memory_space<vmem>>, vector<1x1024xf32>
    %7 = vector.broadcast %6 : vector<1x1024xf32> to vector<128x1024xf32>
    %8 = arith.addf %5, %7 : vector<128x1024xf32>
    %c0_6 = arith.constant 0 : index
    %c0_7 = arith.constant 0 : index
    %9 = vector.load %arg8[%c0_6, %c0_7] : memref<128x1024xf32, #tpu.memory_space<vmem>>, vector<128x1024xf32>
    tpu.vector_store %arg8[%c0_6, %c0_7], %8 {strides = array<i32>} : memref<128x1024xf32, #tpu.memory_space<vmem>>, vector<128x1024xf32>,
    %c0_8 = arith.constant 0 : index
    %c0_9 = arith.constant 0 : index
    %10 = vector.load %arg3[%c0_8, %c0_9] : memref<256x1024xbf16, #tpu.memory_space<vmem>>, vector<256x1024xbf16>
    %c0_10 = arith.constant 0 : index
    %c0_11 = arith.constant 0 : index
    %11 = vector.load %arg9[%c0_10, %c0_11] : memref<16x256xf32, #tpu.memory_space<vmem>>, vector<16x256xf32>
    %c0_12 = arith.constant 0 : index
    %c0_13 = arith.constant 0 : index
    %12 = vector.load %arg10[%c0_12, %c0_13] : memref<16x256xf32, #tpu.memory_space<vmem>>, vector<16x256xf32>
    %c0_i32_14 = arith.constant 0 : i32
    %c16_i32 = arith.constant 16 : i32
    %13 = arith.muli %c0_i32_14, %c16_i32 : i32
    %14 = tpu.assume_multiple %13, 16 : i32
    %15 = arith.index_cast %14 : i32 to index
    %c0_15 = arith.constant 0 : index
    %16 = vector.load %arg8[%15, %c0_15] : memref<128x1024xf32, #tpu.memory_space<vmem>>, vector<16x1024xf32>
    %17 = arith.truncf %11 : vector<16x256xf32> to vector<16x256xbf16>
    %cst_16 = arith.constant dense<0.000000e+00> : vector<16x1024xf32>
    %18 = tpu.matmul %17, %10, %cst_16 {dimension_numbers = #tpu.dot_dimension_numbers<[1], [0], [0], [1], [0, 0, 1, 1], [], []>} : vector<16x256xbf16>, vector<256x1024xbf16>, vector<16x1024xf32> -> vector<16x1024xf32>
    %19 = arith.addf %16, %18 : vector<16x1024xf32>
    %20 = vector.extract_strided_slice %19 {offsets = [0, 0], sizes = [16, 512], strides = [1, 1]} : vector<16x1024xf32> to vector<16x512xf32>
    %21 = arith.negf %20 : vector<16x512xf32>
    %22 = math.exp %21 : vector<16x512xf32>
    %cst_17 = arith.constant 1.000000e+00 : f32
    %23 = vector.broadcast %cst_17 : f32 to vector<16x512xf32>
    %24 = arith.addf %23, %22 : vector<16x512xf32>
    %25 = arith.divf %23, %24 : vector<16x512xf32>
    %26 = vector.extract_strided_slice %25 {offsets = [0, 0], sizes = [16, 256], strides = [1, 1]} : vector<16x512xf32> to vector<16x256xf32>
    %27 = vector.extract_strided_slice %25 {offsets = [0, 256], sizes = [16, 256], strides = [1, 1]} : vector<16x512xf32> to vector<16x256xf32>
    %28 = vector.extract_strided_slice %19 {offsets = [0, 512], sizes = [16, 256], strides = [1, 1]} : vector<16x1024xf32> to vector<16x256xf32>
    %29 = math.tanh %28 : vector<16x256xf32>
    %30 = vector.extract_strided_slice %19 {offsets = [0, 768], sizes = [16, 256], strides = [1, 1]} : vector<16x1024xf32> to vector<16x256xf32>
    %31 = arith.negf %30 : vector<16x256xf32>
    %32 = math.exp %31 : vector<16x256xf32>
    %cst_18 = arith.constant 1.000000e+00 : f32
    %33 = vector.broadcast %cst_18 : f32 to vector<16x256xf32>
    %34 = arith.addf %33, %32 : vector<16x256xf32>
    %35 = arith.divf %33, %34 : vector<16x256xf32>
    %36 = arith.mulf %27, %12 : vector<16x256xf32>
    %37 = arith.mulf %26, %29 : vector<16x256xf32>
    %38 = arith.addf %36, %37 : vector<16x256xf32>
    %39 = math.tanh %38 : vector<16x256xf32>
    %40 = arith.mulf %35, %39 : vector<16x256xf32>
    %c1_i32 = arith.constant 1 : i32
    %c16_i32_19 = arith.constant 16 : i32
    %41 = arith.muli %c1_i32, %c16_i32_19 : i32
    %42 = tpu.assume_multiple %41, 16 : i32
    %43 = arith.index_cast %42 : i32 to index
    %c0_20 = arith.constant 0 : index
    %44 = vector.load %arg8[%43, %c0_20] : memref<128x1024xf32, #tpu.memory_space<vmem>>, vector<16x1024xf32>
    %45 = arith.truncf %40 : vector<16x256xf32> to vector<16x256xbf16>
    %cst_21 = arith.constant dense<0.000000e+00> : vector<16x1024xf32>
    %46 = tpu.matmul %45, %10, %cst_21 {dimension_numbers = #tpu.dot_dimension_numbers<[1], [0], [0], [1], [0, 0, 1, 1], [], []>} : vector<16x256xbf16>, vector<256x1024xbf16>, vector<16x1024xf32> -> vector<16x1024xf32>
    %47 = arith.addf %44, %46 : vector<16x1024xf32>
    %48 = vector.extract_strided_slice %47 {offsets = [0, 0], sizes = [16, 512], strides = [1, 1]} : vector<16x1024xf32> to vector<16x512xf32>
    %49 = arith.negf %48 : vector<16x512xf32>
    %50 = math.exp %49 : vector<16x512xf32>
    %cst_22 = arith.constant 1.000000e+00 : f32
    %51 = vector.broadcast %cst_22 : f32 to vector<16x512xf32>
    %52 = arith.addf %51, %50 : vector<16x512xf32>
    %53 = arith.divf %51, %52 : vector<16x512xf32>
    %54 = vector.extract_strided_slice %53 {offsets = [0, 0], sizes = [16, 256], strides = [1, 1]} : vector<16x512xf32> to vector<16x256xf32>
    %55 = vector.extract_strided_slice %53 {offsets = [0, 256], sizes = [16, 256], strides = [1, 1]} : vector<16x512xf32> to vector<16x256xf32>
    %56 = vector.extract_strided_slice %47 {offsets = [0, 512], sizes = [16, 256], strides = [1, 1]} : vector<16x1024xf32> to vector<16x256xf32>
    %57 = math.tanh %56 : vector<16x256xf32>
    %58 = vector.extract_strided_slice %47 {offsets = [0, 768], sizes = [16, 256], strides = [1, 1]} : vector<16x1024xf32> to vector<16x256xf32>
    %59 = arith.negf %58 : vector<16x256xf32>
    %60 = math.exp %59 : vector<16x256xf32>
    %cst_23 = arith.constant 1.000000e+00 : f32
    %61 = vector.broadcast %cst_23 : f32 to vector<16x256xf32>
    %62 = arith.addf %61, %60 : vector<16x256xf32>
    %63 = arith.divf %61, %62 : vector<16x256xf32>
    %64 = arith.mulf %55, %38 : vector<16x256xf32>
    %65 = arith.mulf %54, %57 : vector<16x256xf32>
    %66 = arith.addf %64, %65 : vector<16x256xf32>
    %67 = math.tanh %66 : vector<16x256xf32>
    %68 = arith.mulf %63, %67 : vector<16x256xf32>
    %c2_i32 = arith.constant 2 : i32
    %c16_i32_24 = arith.constant 16 : i32
    %69 = arith.muli %c2_i32, %c16_i32_24 : i32
    %70 = tpu.assume_multiple %69, 16 : i32
    %71 = arith.index_cast %70 : i32 to index
    %c0_25 = arith.constant 0 : index
    %72 = vector.load %arg8[%71, %c0_25] : memref<128x1024xf32, #tpu.memory_space<vmem>>, vector<16x1024xf32>
    %73 = arith.truncf %68 : vector<16x256xf32> to vector<16x256xbf16>
    %cst_26 = arith.constant dense<0.000000e+00> : vector<16x1024xf32>
    %74 = tpu.matmul %73, %10, %cst_26 {dimension_numbers = #tpu.dot_dimension_numbers<[1], [0], [0], [1], [0, 0, 1, 1], [], []>} : vector<16x256xbf16>, vector<256x1024xbf16>, vector<16x1024xf32> -> vector<16x1024xf32>
    %75 = arith.addf %72, %74 : vector<16x1024xf32>
    %76 = vector.extract_strided_slice %75 {offsets = [0, 0], sizes = [16, 512], strides = [1, 1]} : vector<16x1024xf32> to vector<16x512xf32>
    %77 = arith.negf %76 : vector<16x512xf32>
    %78 = math.exp %77 : vector<16x512xf32>
    %cst_27 = arith.constant 1.000000e+00 : f32
    %79 = vector.broadcast %cst_27 : f32 to vector<16x512xf32>
    %80 = arith.addf %79, %78 : vector<16x512xf32>
    %81 = arith.divf %79, %80 : vector<16x512xf32>
    %82 = vector.extract_strided_slice %81 {offsets = [0, 0], sizes = [16, 256], strides = [1, 1]} : vector<16x512xf32> to vector<16x256xf32>
    %83 = vector.extract_strided_slice %81 {offsets = [0, 256], sizes = [16, 256], strides = [1, 1]} : vector<16x512xf32> to vector<16x256xf32>
    %84 = vector.extract_strided_slice %75 {offsets = [0, 512], sizes = [16, 256], strides = [1, 1]} : vector<16x1024xf32> to vector<16x256xf32>
    %85 = math.tanh %84 : vector<16x256xf32>
    %86 = vector.extract_strided_slice %75 {offsets = [0, 768], sizes = [16, 256], strides = [1, 1]} : vector<16x1024xf32> to vector<16x256xf32>
    %87 = arith.negf %86 : vector<16x256xf32>
    %88 = math.exp %87 : vector<16x256xf32>
    %cst_28 = arith.constant 1.000000e+00 : f32
    %89 = vector.broadcast %cst_28 : f32 to vector<16x256xf32>
    %90 = arith.addf %89, %88 : vector<16x256xf32>
    %91 = arith.divf %89, %90 : vector<16x256xf32>
    %92 = arith.mulf %83, %66 : vector<16x256xf32>
    %93 = arith.mulf %82, %85 : vector<16x256xf32>
    %94 = arith.addf %92, %93 : vector<16x256xf32>
    %95 = math.tanh %94 : vector<16x256xf32>
    %96 = arith.mulf %91, %95 : vector<16x256xf32>
    %c3_i32 = arith.constant 3 : i32
    %c16_i32_29 = arith.constant 16 : i32
    %97 = arith.muli %c3_i32, %c16_i32_29 : i32
    %98 = tpu.assume_multiple %97, 16 : i32
    %99 = arith.index_cast %98 : i32 to index
    %c0_30 = arith.constant 0 : index
    %100 = vector.load %arg8[%99, %c0_30] : memref<128x1024xf32, #tpu.memory_space<vmem>>, vector<16x1024xf32>
    %101 = arith.truncf %96 : vector<16x256xf32> to vector<16x256xbf16>
    %cst_31 = arith.constant dense<0.000000e+00> : vector<16x1024xf32>
    %102 = tpu.matmul %101, %10, %cst_31 {dimension_numbers = #tpu.dot_dimension_numbers<[1], [0], [0], [1], [0, 0, 1, 1], [], []>} : vector<16x256xbf16>, vector<256x1024xbf16>, vector<16x1024xf32> -> vector<16x1024xf32>
    %103 = arith.addf %100, %102 : vector<16x1024xf32>
    %104 = vector.extract_strided_slice %103 {offsets = [0, 0], sizes = [16, 512], strides = [1, 1]} : vector<16x1024xf32> to vector<16x512xf32>
    %105 = arith.negf %104 : vector<16x512xf32>
    %106 = math.exp %105 : vector<16x512xf32>
    %cst_32 = arith.constant 1.000000e+00 : f32
    %107 = vector.broadcast %cst_32 : f32 to vector<16x512xf32>
    %108 = arith.addf %107, %106 : vector<16x512xf32>
    %109 = arith.divf %107, %108 : vector<16x512xf32>
    %110 = vector.extract_strided_slice %109 {offsets = [0, 0], sizes = [16, 256], strides = [1, 1]} : vector<16x512xf32> to vector<16x256xf32>
    %111 = vector.extract_strided_slice %109 {offsets = [0, 256], sizes = [16, 256], strides = [1, 1]} : vector<16x512xf32> to vector<16x256xf32>
    %112 = vector.extract_strided_slice %103 {offsets = [0, 512], sizes = [16, 256], strides = [1, 1]} : vector<16x1024xf32> to vector<16x256xf32>
    %113 = math.tanh %112 : vector<16x256xf32>
    %114 = vector.extract_strided_slice %103 {offsets = [0, 768], sizes = [16, 256], strides = [1, 1]} : vector<16x1024xf32> to vector<16x256xf32>
    %115 = arith.negf %114 : vector<16x256xf32>
    %116 = math.exp %115 : vector<16x256xf32>
    %cst_33 = arith.constant 1.000000e+00 : f32
    %117 = vector.broadcast %cst_33 : f32 to vector<16x256xf32>
    %118 = arith.addf %117, %116 : vector<16x256xf32>
    %119 = arith.divf %117, %118 : vector<16x256xf32>
    %120 = arith.mulf %111, %94 : vector<16x256xf32>
    %121 = arith.mulf %110, %113 : vector<16x256xf32>
    %122 = arith.addf %120, %121 : vector<16x256xf32>
    %123 = math.tanh %122 : vector<16x256xf32>
    %124 = arith.mulf %119, %123 : vector<16x256xf32>
    %c4_i32 = arith.constant 4 : i32
    %c16_i32_34 = arith.constant 16 : i32
    %125 = arith.muli %c4_i32, %c16_i32_34 : i32
    %126 = tpu.assume_multiple %125, 16 : i32
    %127 = arith.index_cast %126 : i32 to index
    %c0_35 = arith.constant 0 : index
    %128 = vector.load %arg8[%127, %c0_35] : memref<128x1024xf32, #tpu.memory_space<vmem>>, vector<16x1024xf32>
    %129 = arith.truncf %124 : vector<16x256xf32> to vector<16x256xbf16>
    %cst_36 = arith.constant dense<0.000000e+00> : vector<16x1024xf32>
    %130 = tpu.matmul %129, %10, %cst_36 {dimension_numbers = #tpu.dot_dimension_numbers<[1], [0], [0], [1], [0, 0, 1, 1], [], []>} : vector<16x256xbf16>, vector<256x1024xbf16>, vector<16x1024xf32> -> vector<16x1024xf32>
    %131 = arith.addf %128, %130 : vector<16x1024xf32>
    %132 = vector.extract_strided_slice %131 {offsets = [0, 0], sizes = [16, 512], strides = [1, 1]} : vector<16x1024xf32> to vector<16x512xf32>
    %133 = arith.negf %132 : vector<16x512xf32>
    %134 = math.exp %133 : vector<16x512xf32>
    %cst_37 = arith.constant 1.000000e+00 : f32
    %135 = vector.broadcast %cst_37 : f32 to vector<16x512xf32>
    %136 = arith.addf %135, %134 : vector<16x512xf32>
    %137 = arith.divf %135, %136 : vector<16x512xf32>
    %138 = vector.extract_strided_slice %137 {offsets = [0, 0], sizes = [16, 256], strides = [1, 1]} : vector<16x512xf32> to vector<16x256xf32>
    %139 = vector.extract_strided_slice %137 {offsets = [0, 256], sizes = [16, 256], strides = [1, 1]} : vector<16x512xf32> to vector<16x256xf32>
    %140 = vector.extract_strided_slice %131 {offsets = [0, 512], sizes = [16, 256], strides = [1, 1]} : vector<16x1024xf32> to vector<16x256xf32>
    %141 = math.tanh %140 : vector<16x256xf32>
    %142 = vector.extract_strided_slice %131 {offsets = [0, 768], sizes = [16, 256], strides = [1, 1]} : vector<16x1024xf32> to vector<16x256xf32>
    %143 = arith.negf %142 : vector<16x256xf32>
    %144 = math.exp %143 : vector<16x256xf32>
    %cst_38 = arith.constant 1.000000e+00 : f32
    %145 = vector.broadcast %cst_38 : f32 to vector<16x256xf32>
    %146 = arith.addf %145, %144 : vector<16x256xf32>
    %147 = arith.divf %145, %146 : vector<16x256xf32>
    %148 = arith.mulf %139, %122 : vector<16x256xf32>
    %149 = arith.mulf %138, %141 : vector<16x256xf32>
    %150 = arith.addf %148, %149 : vector<16x256xf32>
    %151 = math.tanh %150 : vector<16x256xf32>
    %152 = arith.mulf %147, %151 : vector<16x256xf32>
    %c5_i32 = arith.constant 5 : i32
    %c16_i32_39 = arith.constant 16 : i32
    %153 = arith.muli %c5_i32, %c16_i32_39 : i32
    %154 = tpu.assume_multiple %153, 16 : i32
    %155 = arith.index_cast %154 : i32 to index
    %c0_40 = arith.constant 0 : index
    %156 = vector.load %arg8[%155, %c0_40] : memref<128x1024xf32, #tpu.memory_space<vmem>>, vector<16x1024xf32>
    %157 = arith.truncf %152 : vector<16x256xf32> to vector<16x256xbf16>
    %cst_41 = arith.constant dense<0.000000e+00> : vector<16x1024xf32>
    %158 = tpu.matmul %157, %10, %cst_41 {dimension_numbers = #tpu.dot_dimension_numbers<[1], [0], [0], [1], [0, 0, 1, 1], [], []>} : vector<16x256xbf16>, vector<256x1024xbf16>, vector<16x1024xf32> -> vector<16x1024xf32>
    %159 = arith.addf %156, %158 : vector<16x1024xf32>
    %160 = vector.extract_strided_slice %159 {offsets = [0, 0], sizes = [16, 512], strides = [1, 1]} : vector<16x1024xf32> to vector<16x512xf32>
    %161 = arith.negf %160 : vector<16x512xf32>
    %162 = math.exp %161 : vector<16x512xf32>
    %cst_42 = arith.constant 1.000000e+00 : f32
    %163 = vector.broadcast %cst_42 : f32 to vector<16x512xf32>
    %164 = arith.addf %163, %162 : vector<16x512xf32>
    %165 = arith.divf %163, %164 : vector<16x512xf32>
    %166 = vector.extract_strided_slice %165 {offsets = [0, 0], sizes = [16, 256], strides = [1, 1]} : vector<16x512xf32> to vector<16x256xf32>
    %167 = vector.extract_strided_slice %165 {offsets = [0, 256], sizes = [16, 256], strides = [1, 1]} : vector<16x512xf32> to vector<16x256xf32>
    %168 = vector.extract_strided_slice %159 {offsets = [0, 512], sizes = [16, 256], strides = [1, 1]} : vector<16x1024xf32> to vector<16x256xf32>
    %169 = math.tanh %168 : vector<16x256xf32>
    %170 = vector.extract_strided_slice %159 {offsets = [0, 768], sizes = [16, 256], strides = [1, 1]} : vector<16x1024xf32> to vector<16x256xf32>
    %171 = arith.negf %170 : vector<16x256xf32>
    %172 = math.exp %171 : vector<16x256xf32>
    %cst_43 = arith.constant 1.000000e+00 : f32
    %173 = vector.broadcast %cst_43 : f32 to vector<16x256xf32>
    %174 = arith.addf %173, %172 : vector<16x256xf32>
    %175 = arith.divf %173, %174 : vector<16x256xf32>
    %176 = arith.mulf %167, %150 : vector<16x256xf32>
    %177 = arith.mulf %166, %169 : vector<16x256xf32>
    %178 = arith.addf %176, %177 : vector<16x256xf32>
    %179 = math.tanh %178 : vector<16x256xf32>
    %180 = arith.mulf %175, %179 : vector<16x256xf32>
    %c6_i32 = arith.constant 6 : i32
    %c16_i32_44 = arith.constant 16 : i32
    %181 = arith.muli %c6_i32, %c16_i32_44 : i32
    %182 = tpu.assume_multiple %181, 16 : i32
    %183 = arith.index_cast %182 : i32 to index
    %c0_45 = arith.constant 0 : index
    %184 = vector.load %arg8[%183, %c0_45] : memref<128x1024xf32, #tpu.memory_space<vmem>>, vector<16x1024xf32>
    %185 = arith.truncf %180 : vector<16x256xf32> to vector<16x256xbf16>
    %cst_46 = arith.constant dense<0.000000e+00> : vector<16x1024xf32>
    %186 = tpu.matmul %185, %10, %cst_46 {dimension_numbers = #tpu.dot_dimension_numbers<[1], [0], [0], [1], [0, 0, 1, 1], [], []>} : vector<16x256xbf16>, vector<256x1024xbf16>, vector<16x1024xf32> -> vector<16x1024xf32>
    %187 = arith.addf %184, %186 : vector<16x1024xf32>
    %188 = vector.extract_strided_slice %187 {offsets = [0, 0], sizes = [16, 512], strides = [1, 1]} : vector<16x1024xf32> to vector<16x512xf32>
    %189 = arith.negf %188 : vector<16x512xf32>
    %190 = math.exp %189 : vector<16x512xf32>
    %cst_47 = arith.constant 1.000000e+00 : f32
    %191 = vector.broadcast %cst_47 : f32 to vector<16x512xf32>
    %192 = arith.addf %191, %190 : vector<16x512xf32>
    %193 = arith.divf %191, %192 : vector<16x512xf32>
    %194 = vector.extract_strided_slice %193 {offsets = [0, 0], sizes = [16, 256], strides = [1, 1]} : vector<16x512xf32> to vector<16x256xf32>
    %195 = vector.extract_strided_slice %193 {offsets = [0, 256], sizes = [16, 256], strides = [1, 1]} : vector<16x512xf32> to vector<16x256xf32>
    %196 = vector.extract_strided_slice %187 {offsets = [0, 512], sizes = [16, 256], strides = [1, 1]} : vector<16x1024xf32> to vector<16x256xf32>
    %197 = math.tanh %196 : vector<16x256xf32>
    %198 = vector.extract_strided_slice %187 {offsets = [0, 768], sizes = [16, 256], strides = [1, 1]} : vector<16x1024xf32> to vector<16x256xf32>
    %199 = arith.negf %198 : vector<16x256xf32>
    %200 = math.exp %199 : vector<16x256xf32>
    %cst_48 = arith.constant 1.000000e+00 : f32
    %201 = vector.broadcast %cst_48 : f32 to vector<16x256xf32>
    %202 = arith.addf %201, %200 : vector<16x256xf32>
    %203 = arith.divf %201, %202 : vector<16x256xf32>
    %204 = arith.mulf %195, %178 : vector<16x256xf32>
    %205 = arith.mulf %194, %197 : vector<16x256xf32>
    %206 = arith.addf %204, %205 : vector<16x256xf32>
    %207 = math.tanh %206 : vector<16x256xf32>
    %208 = arith.mulf %203, %207 : vector<16x256xf32>
    %c7_i32 = arith.constant 7 : i32
    %c16_i32_49 = arith.constant 16 : i32
    %209 = arith.muli %c7_i32, %c16_i32_49 : i32
    %210 = tpu.assume_multiple %209, 16 : i32
    %211 = arith.index_cast %210 : i32 to index
    %c0_50 = arith.constant 0 : index
    %212 = vector.load %arg8[%211, %c0_50] : memref<128x1024xf32, #tpu.memory_space<vmem>>, vector<16x1024xf32>
    %213 = arith.truncf %208 : vector<16x256xf32> to vector<16x256xbf16>
    %cst_51 = arith.constant dense<0.000000e+00> : vector<16x1024xf32>
    %214 = tpu.matmul %213, %10, %cst_51 {dimension_numbers = #tpu.dot_dimension_numbers<[1], [0], [0], [1], [0, 0, 1, 1], [], []>} : vector<16x256xbf16>, vector<256x1024xbf16>, vector<16x1024xf32> -> vector<16x1024xf32>
    %215 = arith.addf %212, %214 : vector<16x1024xf32>
    %216 = vector.extract_strided_slice %215 {offsets = [0, 0], sizes = [16, 512], strides = [1, 1]} : vector<16x1024xf32> to vector<16x512xf32>
    %217 = arith.negf %216 : vector<16x512xf32>
    %218 = math.exp %217 : vector<16x512xf32>
    %cst_52 = arith.constant 1.000000e+00 : f32
    %219 = vector.broadcast %cst_52 : f32 to vector<16x512xf32>
    %220 = arith.addf %219, %218 : vector<16x512xf32>
    %221 = arith.divf %219, %220 : vector<16x512xf32>
    %222 = vector.extract_strided_slice %221 {offsets = [0, 0], sizes = [16, 256], strides = [1, 1]} : vector<16x512xf32> to vector<16x256xf32>
    %223 = vector.extract_strided_slice %221 {offsets = [0, 256], sizes = [16, 256], strides = [1, 1]} : vector<16x512xf32> to vector<16x256xf32>
    %224 = vector.extract_strided_slice %215 {offsets = [0, 512], sizes = [16, 256], strides = [1, 1]} : vector<16x1024xf32> to vector<16x256xf32>
    %225 = math.tanh %224 : vector<16x256xf32>
    %226 = vector.extract_strided_slice %215 {offsets = [0, 768], sizes = [16, 256], strides = [1, 1]} : vector<16x1024xf32> to vector<16x256xf32>
    %227 = arith.negf %226 : vector<16x256xf32>
    %228 = math.exp %227 : vector<16x256xf32>
    %cst_53 = arith.constant 1.000000e+00 : f32
    %229 = vector.broadcast %cst_53 : f32 to vector<16x256xf32>
    %230 = arith.addf %229, %228 : vector<16x256xf32>
    %231 = arith.divf %229, %230 : vector<16x256xf32>
    %232 = arith.mulf %223, %206 : vector<16x256xf32>
    %233 = arith.mulf %222, %225 : vector<16x256xf32>
    %234 = arith.addf %232, %233 : vector<16x256xf32>
    %235 = math.tanh %234 : vector<16x256xf32>
    %236 = arith.mulf %231, %235 : vector<16x256xf32>
    %c8_i32 = arith.constant 8 : i32
    %c0_54 = arith.constant 0 : index
    %c0_55 = arith.constant 0 : index
    %237 = vector.load %arg9[%c0_54, %c0_55] : memref<16x256xf32, #tpu.memory_space<vmem>>, vector<16x256xf32>
    tpu.vector_store %arg9[%c0_54, %c0_55], %236 {strides = array<i32>} : memref<16x256xf32, #tpu.memory_space<vmem>>, vector<16x256xf32>,
    %c0_56 = arith.constant 0 : index
    %c0_57 = arith.constant 0 : index
    %238 = vector.load %arg10[%c0_56, %c0_57] : memref<16x256xf32, #tpu.memory_space<vmem>>, vector<16x256xf32>
    tpu.vector_store %arg10[%c0_56, %c0_57], %234 {strides = array<i32>} : memref<16x256xf32, #tpu.memory_space<vmem>>, vector<16x256xf32>,
    %c0_i32_58 = arith.constant 0 : i32
    %239 = arith.cmpi eq, %arg0, %c0_i32_58 : i32
    %240 = arith.extui %239 : i1 to i32
    %c0_i32_59 = arith.constant 0 : i32
    %241 = arith.cmpi ne, %240, %c0_i32_59 : i32
    scf.if %241 {
      %c0_60 = arith.constant 0 : index
      %c0_61 = arith.constant 0 : index
      %242 = vector.load %arg5[%c0_60, %c0_61] : memref<1x256xf32, #tpu.memory_space<vmem>>, vector<1x256xf32>
      %243 = vector.broadcast %242 : vector<1x256xf32> to vector<16x256xf32>
      %244 = arith.mulf %236, %243 : vector<16x256xf32>
      %cst_62 = arith.constant dense<0.000000e+00> : vector<16xf32>
      %245 = vector.multi_reduction <add>, %244, %cst_62 [1] : vector<16x256xf32> to vector<16xf32>
      %246 = vector.shape_cast %245 : vector<16xf32> to vector<16x1xf32>
      %c0_63 = arith.constant 0 : index
      %c0_64 = arith.constant 0 : index
      %247 = vector.load %arg6[%c0_63, %c0_64] : memref<1x1xf32, #tpu.memory_space<vmem>>, vector<1x1xf32>
      %248 = vector.broadcast %247 : vector<1x1xf32> to vector<16x1xf32>
      %249 = arith.addf %246, %248 : vector<16x1xf32>
      %250 = arith.negf %249 : vector<16x1xf32>
      %251 = math.exp %250 : vector<16x1xf32>
      %cst_65 = arith.constant 1.000000e+00 : f32
      %252 = vector.broadcast %cst_65 : f32 to vector<16x1xf32>
      %253 = arith.addf %252, %251 : vector<16x1xf32>
      %254 = arith.divf %252, %253 : vector<16x1xf32>
      %c0_66 = arith.constant 0 : index
      %c0_67 = arith.constant 0 : index
      %255 = vector.load %arg7[%c0_66, %c0_67] : memref<16x1xf32, #tpu.memory_space<vmem>>, vector<16x1xf32>
      tpu.vector_store %arg7[%c0_66, %c0_67], %254 {strides = array<i32>} : memref<16x1xf32, #tpu.memory_space<vmem>>, vector<16x1xf32>,
    } else {
    }
    return
  }
  func.func @transform_0(%arg0: i32) -> (i32, i32) {
    %c0_i32 = arith.constant 0 : i32
    %c0_i32_0 = arith.constant 0 : i32
    return %arg0, %c0_i32 : i32, i32
  }
  func.func @transform_1(%arg0: i32) -> (i32, i32) {
    %c0_i32 = arith.constant 0 : i32
    %c0_i32_0 = arith.constant 0 : i32
    %c0_i32_1 = arith.constant 0 : i32
    return %c0_i32, %c0_i32_0 : i32, i32
  }
  func.func @transform_2(%arg0: i32) -> (i32, i32) {
    %c0_i32 = arith.constant 0 : i32
    %c0_i32_0 = arith.constant 0 : i32
    %c0_i32_1 = arith.constant 0 : i32
    return %c0_i32, %c0_i32_0 : i32, i32
  }
  func.func @transform_3(%arg0: i32) -> (i32, i32) {
    %c0_i32 = arith.constant 0 : i32
    %c0_i32_0 = arith.constant 0 : i32
    %c0_i32_1 = arith.constant 0 : i32
    return %c0_i32, %c0_i32_0 : i32, i32
  }
  func.func @transform_4(%arg0: i32) -> (i32, i32) {
    %c0_i32 = arith.constant 0 : i32
    %c0_i32_0 = arith.constant 0 : i32
    %c0_i32_1 = arith.constant 0 : i32
    return %c0_i32, %c0_i32_0 : i32, i32
  }
  func.func @transform_5(%arg0: i32) -> (i32, i32) {
    %c0_i32 = arith.constant 0 : i32
    %c0_i32_0 = arith.constant 0 : i32
    %c0_i32_1 = arith.constant 0 : i32
    return %c0_i32, %c0_i32_0 : i32, i32
  }
  func.func @transform_6(%arg0: i32) -> (i32, i32) {
    %c0_i32 = arith.constant 0 : i32
    %c0_i32_0 = arith.constant 0 : i32
    %c0_i32_1 = arith.constant 0 : i32
    return %c0_i32, %c0_i32_0 : i32, i32
  }
}

</mosaic_0001>

<llo_original>
// kernel: tpu_custom_call.1
$region0: #{tpu_custom_call.1}
  #allocation0 [shape = 'u32[]', space=smem, size = 0x4, offset = 0x4, fixed_abs, tag = 'smem constant byte address 0x4 - core index']
  #allocation1 [shape = 'u32[144,128]{1,0:T(1,128)}', space=vmem, size = 0x12000, scoped, tag = 'internal scratch']
  #allocation2 [shape = 'f32[128,1024]{1,0:T(8,128)}', space=vmem, size = 0x80000, scoped, tag = 'scratch operand']
  #allocation3 [shape = 'f32[16,256]{1,0:T(8,128)}', space=vmem, size = 0x4000, scoped, tag = 'scratch operand']
  #allocation4 [shape = 'f32[16,256]{1,0:T(8,128)}', space=vmem, size = 0x4000, scoped, tag = 'scratch operand']
  #allocation5 [shape = 'f32[1,1]{1,0:T(1,128)S(1)}', space=vmem, size = 0x200, scoped, tag = 'scoped memory for tpu_custom_call.1']
  %s0 = inlined_call_operand.hbm [shape: bf16[128,128], index: 0, kind: input, shape index: {}]
  %s1 = inlined_call_operand.hbm [shape: bf16[128,1024], index: 1, kind: input, shape index: {}]
  %s2 = inlined_call_operand.hbm [shape: bf16[256,1024], index: 2, kind: input, shape index: {}]
  %s3 = inlined_call_operand.hbm [shape: f32[1,1024], index: 3, kind: input, shape index: {}]
  %s4 = inlined_call_operand.vmem [shape: f32[1,256], index: 4, kind: input, shape index: {}]
  %s5 = inlined_call_operand.<no memory space> [shape: f32[1,1], index: 5, kind: input, shape index: {}]
  %s6 = inlined_call_operand.vmem [shape: f32[16,1], index: 6, kind: output, shape index: {}]
  %s7 = sld [smem:[#allocation0]]
  $region58: #{tpu_custom_call.1} parent=0
    _
  %s9 = ssub.s32 1, %s7
  %s10 = scalar_select 0, %s9, %s7
  %v11 = vstv %s5
  %12 = vst [vmem:[#allocation5] sm:$0x1] %v11
  $region1: #{tpu_custom_call.1} parent=0
    #allocation6 [shape = 'u8[32768]{0}', space=vmem, size = 0x8000, scoped, tag = 'input window, operand 0, single buffered']
    #allocation7 [shape = 's32[1]{0}', space=sflag, size = 0x4, scoped, tag = 'scoped memory for tpu_custom_call.1']
    #allocation8 [shape = 'u8[262144]{0}', space=vmem, size = 0x40000, scoped, tag = 'input window, operand 1, single buffered']
    #allocation9 [shape = 's32[1]{0}', space=sflag, size = 0x4, scoped, tag = 'scoped memory for tpu_custom_call.1']
    #allocation10 [shape = 'u8[524288]{0}', space=vmem, size = 0x80000, scoped, tag = 'input window, operand 2, single buffered']
    #allocation11 [shape = 'u8[4096]{0}', space=vmem, size = 0x1000, scoped, tag = 'input window, operand 3, single buffered']
    #allocation12 [shape = 's32[1]{0}', space=sflag, size = 0x4, scoped, tag = 'scoped memory for tpu_custom_call.1']
    %13 = vsyncpa [#allocation7], 0
    %14 = vsyncpa [#allocation9], 0
    %15 = vsyncpa [#allocation12], 0
    // Predicated region
    $region2: #{tpu_custom_call.1} parent=1 // pred_check
      _
    $region3: #{tpu_custom_call.1} parent=1 // pred_check_branch
      %17 = sbr.rel (0) target = $region5
    $region4: #{tpu_custom_call.1} parent=1 // pred_region
      %s19 = ssub.s32 1024, 1024
      %20 = vsyncadd [#allocation7], %s19
      %s21 = sshll.u32 [#allocation6], 4
      %s22 = int_to_ptr.vmem [resolvable:$true] %s21
      %27 = dma.hbm_to_vmem [thread:$0]  %s0, 1024, %s22, [#allocation7], 64, 64, 4
    $region5: #{tpu_custom_call.1} parent=1 // pred_fallthru
      _
    // Predicated region
    $region6: #{tpu_custom_call.1} parent=1 // pred_check
      _
    $region7: #{tpu_custom_call.1} parent=1 // pred_check_branch
      %29 = sbr.rel (0) target = $region9
    $region8: #{tpu_custom_call.1} parent=1 // pred_region
      %s31 = ssub.s32 8192, 8192
      %32 = vsyncadd [#allocation9], %s31
      %s33 = sshll.u32 [#allocation8], 4
      %s34 = int_to_ptr.vmem [resolvable:$true] %s33
      %39 = dma.hbm_to_vmem [thread:$0]  %s1, 8192, %s34, [#allocation9], 512, 512, 32
    $region9: #{tpu_custom_call.1} parent=1 // pred_fallthru
      _
    // Predicated region
    $region10: #{tpu_custom_call.1} parent=1 // pred_check
      _
    $region11: #{tpu_custom_call.1} parent=1 // pred_check_branch
      %41 = sbr.rel (0) target = $region13
    $region12: #{tpu_custom_call.1} parent=1 // pred_region
      %s43 = ssub.s32 16384, 16384
      %44 = vsyncadd [#allocation9], %s43
      %s45 = sshll.u32 [#allocation10], 4
      %s46 = int_to_ptr.vmem [resolvable:$true] %s45
      %51 = dma.hbm_to_vmem [thread:$0]  %s2, 16384, %s46, [#allocation9], 512, 512, 32
    $region13: #{tpu_custom_call.1} parent=1 // pred_fallthru
      _
    // Predicated region
    $region14: #{tpu_custom_call.1} parent=1 // pred_check
      _
    $region15: #{tpu_custom_call.1} parent=1 // pred_check_branch
      %53 = sbr.rel (0) target = $region17
    $region16: #{tpu_custom_call.1} parent=1 // pred_region
      %s55 = ssub.s32 128, 128
      %56 = vsyncadd [#allocation12], %s55
      %s58 = sshll.u32 [#allocation11], 4
      %s59 = int_to_ptr.vmem [resolvable:$true] %s58
      %61 = dma.hbm_to_vmem [thread:$0]  %s3, 128, %s59, [#allocation12]
    $region17: #{tpu_custom_call.1} parent=1 // pred_fallthru
      _
    // Predicated region
    $region18: #{tpu_custom_call.1} parent=1 // pred_check
      _
    $region19: #{tpu_custom_call.1} parent=1 // pred_check_branch
      %63 = sbr.rel (0) target = $region21
    $region20: #{tpu_custom_call.1} parent=1 // pred_region
      _
    $region21: #{tpu_custom_call.1} parent=1 // pred_fallthru
      _
    // Predicated region
    $region22: #{tpu_custom_call.1} parent=1 // pred_check
      _
    $region23: #{tpu_custom_call.1} parent=1 // pred_check_branch
      %65 = sbr.rel (0) target = $region25
    $region24: #{tpu_custom_call.1} parent=1 // pred_region
      _
    $region25: #{tpu_custom_call.1} parent=1 // pred_fallthru
      _
    // Predicated region
    $region26: #{tpu_custom_call.1} parent=1 // pred_check
      _
    $region27: #{tpu_custom_call.1} parent=1 // pred_check_branch
      %67 = sbr.rel (0) target = $region29
    $region28: #{tpu_custom_call.1} parent=1 // pred_region
      %68 = dma.done [#allocation7], 1024
    $region29: #{tpu_custom_call.1} parent=1 // pred_fallthru
      _
    // Predicated region
    $region30: #{tpu_custom_call.1} parent=1 // pred_check
      _
    $region31: #{tpu_custom_call.1} parent=1 // pred_check_branch
      %70 = sbr.rel (0) target = $region33
    $region32: #{tpu_custom_call.1} parent=1 // pred_region
      %71 = dma.done [#allocation9], 8192
    $region33: #{tpu_custom_call.1} parent=1 // pred_fallthru
      _
    // Predicated region
    $region34: #{tpu_custom_call.1} parent=1 // pred_check
      _
    $region35: #{tpu_custom_call.1} parent=1 // pred_check_branch
      %73 = sbr.rel (0) target = $region37
    $region36: #{tpu_custom_call.1} parent=1 // pred_region
      %74 = dma.done [#allocation9], 16384
    $region37: #{tpu_custom_call.1} parent=1 // pred_fallthru
      _
    // Predicated region
    $region38: #{tpu_custom_call.1} parent=1 // pred_check
      _
    $region39: #{tpu_custom_call.1} parent=1 // pred_check_branch
      %76 = sbr.rel (0) target = $region41
    $region40: #{tpu_custom_call.1} parent=1 // pred_region
      %77 = dma.done [#allocation12], 128
    $region41: #{tpu_custom_call.1} parent=1 // pred_fallthru
      _
    %p79 = scmp.eq.s32.totalorder 0, 0
    // Predicated region
    $region42: #{tpu_custom_call.1} parent=1 // pred_check
      %p80 = pneg %p79
    $region43: #{tpu_custom_call.1} parent=1 // pred_check_branch
      %82 = sbr.rel (%p80) target = $region45
    $region44: #{tpu_custom_call.1} parent=1 // pred_region
      %83 = vst [vmem:[#allocation3] sm:$0xff] 0.0
      %84 = vst [vmem:[#allocation3 + $0x8] sm:$0xff] 0.0
      %85 = vst [vmem:[#allocation3 + $0x10] sm:$0xff] 0.0
      %86 = vst [vmem:[#allocation3 + $0x18] sm:$0xff] 0.0
      %87 = vst [vmem:[#allocation4] sm:$0xff] 0.0
      %88 = vst [vmem:[#allocation4 + $0x8] sm:$0xff] 0.0
      %89 = vst [vmem:[#allocation4 + $0x10] sm:$0xff] 0.0
      %90 = vst [vmem:[#allocation4 + $0x18] sm:$0xff] 0.0
    $region45: #{tpu_custom_call.1} parent=1 // pred_fallthru
      _
    %v91 = vld [vmem:[#allocation6] sm:$0xf]
    %v92 = vld [vmem:[#allocation6 + $0x4] sm:$0xf]
    %v93 = vld [vmem:[#allocation6 + $0x8] sm:$0xf]
    %v94 = vld [vmem:[#allocation6 + $0xc] sm:$0xf]
    %v95 = vld [vmem:[#allocation6 + $0x10] sm:$0xf]
    %v96 = vld [vmem:[#allocation6 + $0x14] sm:$0xf]
    %v97 = vld [vmem:[#allocation6 + $0x18] sm:$0xf]
    %v98 = vld [vmem:[#allocation6 + $0x1c] sm:$0xf]
    %v99 = vld [vmem:[#allocation6 + $0x20] sm:$0xf]
    %v100 = vld [vmem:[#allocation6 + $0x24] sm:$0xf]
    %v101 = vld [vmem:[#allocation6 + $0x28] sm:$0xf]
    %v102 = vld [vmem:[#allocation6 + $0x2c] sm:$0xf]
    %v103 = vld [vmem:[#allocation6 + $0x30] sm:$0xf]
    %v104 = vld [vmem:[#allocation6 + $0x34] sm:$0xf]
    %v105 = vld [vmem:[#allocation6 + $0x38] sm:$0xf]
    %v106 = vld [vmem:[#allocation6 + $0x3c] sm:$0xf]
    %v107 = vld [vmem:[#allocation8] sm:$0xff]
    %v108 = vld [vmem:[#allocation8 + $0x8] sm:$0xff]
    %v109 = vld [vmem:[#allocation8 + $0x10] sm:$0xff]
    %v110 = vld [vmem:[#allocation8 + $0x18] sm:$0xff]
    %v111 = vld [vmem:[#allocation8 + $0x20] sm:$0xff]
    %v112 = vld [vmem:[#allocation8 + $0x28] sm:$0xff]
    %v113 = vld [vmem:[#allocation8 + $0x30] sm:$0xff]
    %v114 = vld [vmem:[#allocation8 + $0x38] sm:$0xff]
    %v115 = vld [vmem:[#allocation8 + $0x40] sm:$0xff]
    %v116 = vld [vmem:[#allocation8 + $0x48] sm:$0xff]
    %v117 = vld [vmem:[#allocation8 + $0x50] sm:$0xff]
    %v118 = vld [vmem:[#allocation8 + $0x58] sm:$0xff]
    %v119 = vld [vmem:[#allocation8 + $0x60] sm:$0xff]
    %v120 = vld [vmem:[#allocation8 + $0x68] sm:$0xff]
    %v121 = vld [vmem:[#allocation8 + $0x70] sm:$0xff]
    %v122 = vld [vmem:[#allocation8 + $0x78] sm:$0xff]
    %v123 = vld [vmem:[#allocation8 + $0x80] sm:$0xff]
    %v124 = vld [vmem:[#allocation8 + $0x88] sm:$0xff]
    %v125 = vld [vmem:[#allocation8 + $0x90] sm:$0xff]
    %v126 = vld [vmem:[#allocation8 + $0x98] sm:$0xff]
    %v127 = vld [vmem:[#allocation8 + $0xa0] sm:$0xff]
    %v128 = vld [vmem:[#allocation8 + $0xa8] sm:$0xff]
    %v129 = vld [vmem:[#allocation8 + $0xb0] sm:$0xff]
    %v130 = vld [vmem:[#allocation8 + $0xb8] sm:$0xff]
    %v131 = vld [vmem:[#allocation8 + $0xc0] sm:$0xff]
    %v132 = vld [vmem:[#allocation8 + $0xc8] sm:$0xff]
    %v133 = vld [vmem:[#allocation8 + $0xd0] sm:$0xff]
    %v134 = vld [vmem:[#allocation8 + $0xd8] sm:$0xff]
    %v135 = vld [vmem:[#allocation8 + $0xe0] sm:$0xff]
    %v136 = vld [vmem:[#allocation8 + $0xe8] sm:$0xff]
    %v137 = vld [vmem:[#allocation8 + $0xf0] sm:$0xff]
    %v138 = vld [vmem:[#allocation8 + $0xf8] sm:$0xff]
    %v139 = vld [vmem:[#allocation8 + $0x100] sm:$0xff]
    %v140 = vld [vmem:[#allocation8 + $0x108] sm:$0xff]
    %v141 = vld [vmem:[#allocation8 + $0x110] sm:$0xff]
    %v142 = vld [vmem:[#allocation8 + $0x118] sm:$0xff]
    %v143 = vld [vmem:[#allocation8 + $0x120] sm:$0xff]
    %v144 = vld [vmem:[#allocation8 + $0x128] sm:$0xff]
    %v145 = vld [vmem:[#allocation8 + $0x130] sm:$0xff]
    %v146 = vld [vmem:[#allocation8 + $0x138] sm:$0xff]
    %v147 = vld [vmem:[#allocation8 + $0x140] sm:$0xff]
    %v148 = vld [vmem:[#allocation8 + $0x148] sm:$0xff]
    %v149 = vld [vmem:[#allocation8 + $0x150] sm:$0xff]
    %v150 = vld [vmem:[#allocation8 + $0x158] sm:$0xff]
    %v151 = vld [vmem:[#allocation8 + $0x160] sm:$0xff]
    %v152 = vld [vmem:[#allocation8 + $0x168] sm:$0xff]
    %v153 = vld [vmem:[#allocation8 + $0x170] sm:$0xff]
    %v154 = vld [vmem:[#allocation8 + $0x178] sm:$0xff]
    %v155 = vld [vmem:[#allocation8 + $0x180] sm:$0xff]
    %v156 = vld [vmem:[#allocation8 + $0x188] sm:$0xff]
    %v157 = vld [vmem:[#allocation8 + $0x190] sm:$0xff]
    %v158 = vld [vmem:[#allocation8 + $0x198] sm:$0xff]
    %v159 = vld [vmem:[#allocation8 + $0x1a0] sm:$0xff]
    %v160 = vld [vmem:[#allocation8 + $0x1a8] sm:$0xff]
    %v161 = vld [vmem:[#allocation8 + $0x1b0] sm:$0xff]
    %v162 = vld [vmem:[#allocation8 + $0x1b8] sm:$0xff]
    %v163 = vld [vmem:[#allocation8 + $0x1c0] sm:$0xff]
    %v164 = vld [vmem:[#allocation8 + $0x1c8] sm:$0xff]
    %v165 = vld [vmem:[#allocation8 + $0x1d0] sm:$0xff]
    %v166 = vld [vmem:[#allocation8 + $0x1d8] sm:$0xff]
    %v167 = vld [vmem:[#allocation8 + $0x1e0] sm:$0xff]
    %v168 = vld [vmem:[#allocation8 + $0x1e8] sm:$0xff]
    %v169 = vld [vmem:[#allocation8 + $0x1f0] sm:$0xff]
    %v170 = vld [vmem:[#allocation8 + $0x1f8] sm:$0xff]
    %v171 = vld [vmem:[#allocation11] sm:$0xff]
    %v173 = vlaneseq
    %v174 = vshrl.u32 %v173, 7
    %v175 = vsub.s32 0, %v174
    %v176 = vrot.slane %v171, %v175
    %v177 = vlaneseq
    %v178 = vshrl.u32 %v177, 7
    %v179 = vsub.s32 1, %v178
    %v180 = vrot.slane %v171, %v179
    %v181 = vlaneseq
    %v182 = vshrl.u32 %v181, 7
    %v183 = vsub.s32 2, %v182
    %v184 = vrot.slane %v171, %v183
    %v185 = vlaneseq
    %v186 = vshrl.u32 %v185, 7
    %v187 = vsub.s32 3, %v186
    %v188 = vrot.slane %v171, %v187
    %v189 = vlaneseq
    %v190 = vshrl.u32 %v189, 7
    %v191 = vsub.s32 4, %v190
    %v192 = vrot.slane %v171, %v191
    %v193 = vlaneseq
    %v194 = vshrl.u32 %v193, 7
    %v195 = vsub.s32 5, %v194
    %v196 = vrot.slane %v171, %v195
    %v197 = vlaneseq
    %v198 = vshrl.u32 %v197, 7
    %v199 = vsub.s32 6, %v198
    %v200 = vrot.slane %v171, %v199
    %v201 = vlaneseq
    %v202 = vshrl.u32 %v201, 7
    %v203 = vsub.s32 7, %v202
    %v204 = vrot.slane %v171, %v203
    %v229 = vunpack.c.l.b16 %v91
    %v230 = vunpack.c.l.b16 %v92
    %v231 = vunpack.c.l.b16 %v93
    %v232 = vunpack.c.l.b16 %v94
    %v233 = vunpack.c.l.b16 %v95
    %v234 = vunpack.c.l.b16 %v96
    %v235 = vunpack.c.l.b16 %v97
    %v236 = vunpack.c.l.b16 %v98
    %v237 = vunpack.c.l.b16 %v99
    %v238 = vunpack.c.l.b16 %v100
    %v239 = vunpack.c.l.b16 %v101
    %v240 = vunpack.c.l.b16 %v102
    %v241 = vunpack.c.l.b16 %v103
    %v242 = vunpack.c.l.b16 %v104
    %v243 = vunpack.c.l.b16 %v105
    %v244 = vunpack.c.l.b16 %v106
    %v245 = vpack.c.b16 %v230, %v229
    %v246 = vpack.c.b16 %v232, %v231
    %v247 = vpack.c.b16 %v234, %v233
    %v248 = vpack.c.b16 %v236, %v235
    %v249 = vpack.c.b16 %v238, %v237
    %v250 = vpack.c.b16 %v240, %v239
    %v251 = vpack.c.b16 %v242, %v241
    %v252 = vpack.c.b16 %v244, %v243
    %v325 = vunpack.c.l.b16 %v107
    %v326 = vunpack.c.h.b16 %v107
    %v327 = vunpack.c.l.b16 %v108
    %v328 = vunpack.c.h.b16 %v108
    %v329 = vunpack.c.l.b16 %v109
    %v330 = vunpack.c.h.b16 %v109
    %v331 = vunpack.c.l.b16 %v110
    %v332 = vunpack.c.h.b16 %v110
    %v333 = vunpack.c.l.b16 %v111
    %v334 = vunpack.c.h.b16 %v111
    %v335 = vunpack.c.l.b16 %v112
    %v336 = vunpack.c.h.b16 %v112
    %v337 = vunpack.c.l.b16 %v113
    %v338 = vunpack.c.h.b16 %v113
    %v339 = vunpack.c.l.b16 %v114
    %v340 = vunpack.c.h.b16 %v114
    %v341 = vunpack.c.l.b16 %v115
    %v342 = vunpack.c.h.b16 %v115
    %v343 = vunpack.c.l.b16 %v116
    %v344 = vunpack.c.h.b16 %v116
    %v345 = vunpack.c.l.b16 %v117
    %v346 = vunpack.c.h.b16 %v117
    %v347 = vunpack.c.l.b16 %v118
    %v348 = vunpack.c.h.b16 %v118
    %v349 = vunpack.c.l.b16 %v119
    %v350 = vunpack.c.h.b16 %v119
    %v351 = vunpack.c.l.b16 %v120
    %v352 = vunpack.c.h.b16 %v120
    %v353 = vunpack.c.l.b16 %v121
    %v354 = vunpack.c.h.b16 %v121
    %v355 = vunpack.c.l.b16 %v122
    %v356 = vunpack.c.h.b16 %v122
    %v357 = vunpack.c.l.b16 %v123
    %v358 = vunpack.c.h.b16 %v123
    %v359 = vunpack.c.l.b16 %v124
    %v360 = vunpack.c.h.b16 %v124
    %v361 = vunpack.c.l.b16 %v125
    %v362 = vunpack.c.h.b16 %v125
    %v363 = vunpack.c.l.b16 %v126
    %v364 = vunpack.c.h.b16 %v126
    %v365 = vunpack.c.l.b16 %v127
    %v366 = vunpack.c.h.b16 %v127
    %v367 = vunpack.c.l.b16 %v128
    %v368 = vunpack.c.h.b16 %v128
    %v369 = vunpack.c.l.b16 %v129
    %v370 = vunpack.c.h.b16 %v129
    %v371 = vunpack.c.l.b16 %v130
    %v372 = vunpack.c.h.b16 %v130
    %v373 = vunpack.c.l.b16 %v131
    %v374 = vunpack.c.h.b16 %v131
    %v375 = vunpack.c.l.b16 %v132
    %v376 = vunpack.c.h.b16 %v132
    %v377 = vunpack.c.l.b16 %v133
    %v378 = vunpack.c.h.b16 %v133
    %v379 = vunpack.c.l.b16 %v134
    %v380 = vunpack.c.h.b16 %v134
    %v381 = vunpack.c.l.b16 %v135
    %v382 = vunpack.c.h.b16 %v135
    %v383 = vunpack.c.l.b16 %v136
    %v384 = vunpack.c.h.b16 %v136
    %v385 = vunpack.c.l.b16 %v137
    %v386 = vunpack.c.h.b16 %v137
    %v387 = vunpack.c.l.b16 %v138
    %v388 = vunpack.c.h.b16 %v138
    %v389 = vunpack.c.l.b16 %v139
    %v390 = vunpack.c.h.b16 %v139
    %v391 = vunpack.c.l.b16 %v140
    %v392 = vunpack.c.h.b16 %v140
    %v393 = vunpack.c.l.b16 %v141
    %v394 = vunpack.c.h.b16 %v141
    %v395 = vunpack.c.l.b16 %v142
    %v396 = vunpack.c.h.b16 %v142
    %v397 = vunpack.c.l.b16 %v143
    %v398 = vunpack.c.h.b16 %v143
    %v399 = vunpack.c.l.b16 %v144
    %v400 = vunpack.c.h.b16 %v144
    %v401 = vunpack.c.l.b16 %v145
    %v402 = vunpack.c.h.b16 %v145
    %v403 = vunpack.c.l.b16 %v146
    %v404 = vunpack.c.h.b16 %v146
    %v405 = vunpack.c.l.b16 %v147
    %v406 = vunpack.c.h.b16 %v147
    %v407 = vunpack.c.l.b16 %v148
    %v408 = vunpack.c.h.b16 %v148
    %v409 = vunpack.c.l.b16 %v149
    %v410 = vunpack.c.h.b16 %v149
    %v411 = vunpack.c.l.b16 %v150
    %v412 = vunpack.c.h.b16 %v150
    %v413 = vunpack.c.l.b16 %v151
    %v414 = vunpack.c.h.b16 %v151
    %v415 = vunpack.c.l.b16 %v152
    %v416 = vunpack.c.h.b16 %v152
    %v417 = vunpack.c.l.b16 %v153
    %v418 = vunpack.c.h.b16 %v153
    %v419 = vunpack.c.l.b16 %v154
    %v420 = vunpack.c.h.b16 %v154
    %v421 = vunpack.c.l.b16 %v155
    %v422 = vunpack.c.h.b16 %v155
    %v423 = vunpack.c.l.b16 %v156
    %v424 = vunpack.c.h.b16 %v156
    %v425 = vunpack.c.l.b16 %v157
    %v426 = vunpack.c.h.b16 %v157
    %v427 = vunpack.c.l.b16 %v158
    %v428 = vunpack.c.h.b16 %v158
    %v429 = vunpack.c.l.b16 %v159
    %v430 = vunpack.c.h.b16 %v159
    %v431 = vunpack.c.l.b16 %v160
    %v432 = vunpack.c.h.b16 %v160
    %v433 = vunpack.c.l.b16 %v161
    %v434 = vunpack.c.h.b16 %v161
    %v435 = vunpack.c.l.b16 %v162
    %v436 = vunpack.c.h.b16 %v162
    %v437 = vunpack.c.l.b16 %v163
    %v438 = vunpack.c.h.b16 %v163
    %v439 = vunpack.c.l.b16 %v164
    %v440 = vunpack.c.h.b16 %v164
    %v441 = vunpack.c.l.b16 %v165
    %v442 = vunpack.c.h.b16 %v165
    %v443 = vunpack.c.l.b16 %v166
    %v444 = vunpack.c.h.b16 %v166
    %v445 = vunpack.c.l.b16 %v167
    %v446 = vunpack.c.h.b16 %v167
    %v447 = vunpack.c.l.b16 %v168
    %v448 = vunpack.c.h.b16 %v168
    %v449 = vunpack.c.l.b16 %v169
    %v450 = vunpack.c.h.b16 %v169
    %v451 = vunpack.c.l.b16 %v170
    %v452 = vunpack.c.h.b16 %v170
    %v453 = vpack.c.b16 %v333, %v325
    %v454 = vpack.c.b16 %v334, %v326
    %v455 = vpack.c.b16 %v335, %v327
    %v456 = vpack.c.b16 %v336, %v328
    %v457 = vpack.c.b16 %v337, %v329
    %v458 = vpack.c.b16 %v338, %v330
    %v459 = vpack.c.b16 %v339, %v331
    %v460 = vpack.c.b16 %v340, %v332
    %v461 = vpack.c.b16 %v349, %v341
    %v462 = vpack.c.b16 %v350, %v342
    %v463 = vpack.c.b16 %v351, %v343
    %v464 = vpack.c.b16 %v352, %v344
    %v465 = vpack.c.b16 %v353, %v345
    %v466 = vpack.c.b16 %v354, %v346
    %v467 = vpack.c.b16 %v355, %v347
    %v468 = vpack.c.b16 %v356, %v348
    %v469 = vpack.c.b16 %v365, %v357
    %v470 = vpack.c.b16 %v366, %v358
    %v471 = vpack.c.b16 %v367, %v359
    %v472 = vpack.c.b16 %v368, %v360
    %v473 = vpack.c.b16 %v369, %v361
    %v474 = vpack.c.b16 %v370, %v362
    %v475 = vpack.c.b16 %v371, %v363
    %v476 = vpack.c.b16 %v372, %v364
    %v477 = vpack.c.b16 %v381, %v373
    %v478 = vpack.c.b16 %v382, %v374
    %v479 = vpack.c.b16 %v383, %v375
    %v480 = vpack.c.b16 %v384, %v376
    %v481 = vpack.c.b16 %v385, %v377
    %v482 = vpack.c.b16 %v386, %v378
    %v483 = vpack.c.b16 %v387, %v379
    %v484 = vpack.c.b16 %v388, %v380
    %v485 = vpack.c.b16 %v397, %v389
    %v486 = vpack.c.b16 %v398, %v390
    %v487 = vpack.c.b16 %v399, %v391
    %v488 = vpack.c.b16 %v400, %v392
    %v489 = vpack.c.b16 %v401, %v393
    %v490 = vpack.c.b16 %v402, %v394
    %v491 = vpack.c.b16 %v403, %v395
    %v492 = vpack.c.b16 %v404, %v396
    %v493 = vpack.c.b16 %v413, %v405
    %v494 = vpack.c.b16 %v414, %v406
    %v495 = vpack.c.b16 %v415, %v407
    %v496 = vpack.c.b16 %v416, %v408
    %v497 = vpack.c.b16 %v417, %v409
    %v498 = vpack.c.b16 %v418, %v410
    %v499 = vpack.c.b16 %v419, %v411
    %v500 = vpack.c.b16 %v420, %v412
    %v501 = vpack.c.b16 %v429, %v421
    %v502 = vpack.c.b16 %v430, %v422
    %v503 = vpack.c.b16 %v431, %v423
    %v504 = vpack.c.b16 %v432, %v424
    %v505 = vpack.c.b16 %v433, %v425
    %v506 = vpack.c.b16 %v434, %v426
    %v507 = vpack.c.b16 %v435, %v427
    %v508 = vpack.c.b16 %v436, %v428
    %v509 = vpack.c.b16 %v445, %v437
    %v510 = vpack.c.b16 %v446, %v438
    %v511 = vpack.c.b16 %v447, %v439
    %v512 = vpack.c.b16 %v448, %v440
    %v513 = vpack.c.b16 %v449, %v441
    %v514 = vpack.c.b16 %v450, %v442
    %v515 = vpack.c.b16 %v451, %v443
    %v516 = vpack.c.b16 %v452, %v444
    %581 = vmatprep.subr.bf16.mxu0 %v510
    %582 = vmatpush1.bf16.msra.mxu0 %v509
    %583 = vmatprep.subr.bf16.mxu0 %v502
    %584 = vmatpush1.bf16.msra.mxu0 %v501
    %585 = vmatprep.subr.bf16.mxu0 %v494
    %586 = vmatpush1.bf16.msra.mxu0 %v493
    %587 = vmatprep.subr.bf16.mxu0 %v486
    %588 = vmatpush1.bf16.msra.mxu0 %v485
    %589 = vmatprep.subr.bf16.mxu0 %v478
    %590 = vmatpush1.bf16.msra.mxu0 %v477
    %591 = vmatprep.subr.bf16.mxu0 %v470
    %592 = vmatpush1.bf16.msra.mxu0 %v469
    %593 = vmatprep.subr.bf16.mxu0 %v462
    %594 = vmatpush1.bf16.msra.mxu0 %v461
    %595 = vmatprep.subr.bf16.mxu0 %v454
    %596 = vmatpush1.bf16.msra.mxu0 %v453
    %597 = vmatprep.subr.bf16.mxu0 0
    %598 = vmatpush2.bf16.msra.mxu0 0
    %599 = vmatprep.subr.bf16.mxu0 0
    %600 = vmatpush2.bf16.msra.mxu0 0
    %601 = vmatprep.subr.bf16.mxu0 0
    %602 = vmatpush2.bf16.msra.mxu0 0
    %603 = vmatprep.subr.bf16.mxu0 0
    %604 = vmatpush2.bf16.msra.mxu0 0
    %605 = vmatprep.subr.bf16.mxu0 0
    %606 = vmatpush2.bf16.msra.mxu0 0
    %607 = vmatprep.subr.bf16.mxu0 0
    %608 = vmatpush2.bf16.msra.mxu0 0
    %609 = vmatprep.subr.bf16.mxu0 0
    %610 = vmatpush2.bf16.msra.mxu0 0
    %611 = vmatprep.subr.bf16.mxu0 0
    %612 = vmatpush2.bf16.msra.mxu0 0
    %613 = vmatprep.mubr.bf16.mxu0 0
    %614 = vmatmul.mubr.bf16.gmra.mxu0 %v245
    %v615 = vpop.f32.mrf.mxu0
    %v616 = vadd.f32 %v176, %v615
    %v617 = vpop.f32.mrf.mxu0
    %v618 = vadd.f32 %v180, %v617
    %v619 = vpop.f32.mrf.mxu0
    %v620 = vadd.f32 %v176, %v619
    %v621 = vpop.f32.mrf.mxu0
    %v622 = vadd.f32 %v180, %v621
    %623 = vmatprep.mubr.bf16.mxu0 0
    %624 = vmatmul.mubr.bf16.gmra.mxu0 %v246
    %v625 = vpop.f32.mrf.mxu0
    %v626 = vadd.f32 %v176, %v625
    %v627 = vpop.f32.mrf.mxu0
    %v628 = vadd.f32 %v180, %v627
    %v629 = vpop.f32.mrf.mxu0
    %v630 = vadd.f32 %v176, %v629
    %v631 = vpop.f32.mrf.mxu0
    %v632 = vadd.f32 %v180, %v631
    %633 = vmatprep.mubr.bf16.mxu0 0
    %634 = vmatmul.mubr.bf16.gmra.mxu0 %v247
    %v635 = vpop.f32.mrf.mxu0
    %v636 = vadd.f32 %v176, %v635
    %v637 = vpop.f32.mrf.mxu0
    %v638 = vadd.f32 %v180, %v637
    %v639 = vpop.f32.mrf.mxu0
    %v640 = vadd.f32 %v176, %v639
    %v641 = vpop.f32.mrf.mxu0
    %v642 = vadd.f32 %v180, %v641
    %643 = vmatprep.mubr.bf16.mxu0 0
    %644 = vmatmul.mubr.bf16.gmra.mxu0 %v248
    %v645 = vpop.f32.mrf.mxu0
    %v646 = vadd.f32 %v176, %v645
    %v647 = vpop.f32.mrf.mxu0
    %v648 = vadd.f32 %v180, %v647
    %v649 = vpop.f32.mrf.mxu0
    %v650 = vadd.f32 %v176, %v649
    %v651 = vpop.f32.mrf.mxu0
    %v652 = vadd.f32 %v180, %v651
    %653 = vmatprep.mubr.bf16.mxu0 0
    %654 = vmatmul.mubr.bf16.gmra.mxu0 %v249
    %v655 = vpop.f32.mrf.mxu0
    %v656 = vadd.f32 %v176, %v655
    %v657 = vpop.f32.mrf.mxu0
    %v658 = vadd.f32 %v180, %v657
    %v659 = vpop.f32.mrf.mxu0
    %v660 = vadd.f32 %v176, %v659
    %v661 = vpop.f32.mrf.mxu0
    %v662 = vadd.f32 %v180, %v661
    %663 = vmatprep.mubr.bf16.mxu0 0
    %664 = vmatmul.mubr.bf16.gmra.mxu0 %v250
    %v665 = vpop.f32.mrf.mxu0
    %v666 = vadd.f32 %v176, %v665
    %v667 = vpop.f32.mrf.mxu0
    %v668 = vadd.f32 %v180, %v667
    %v669 = vpop.f32.mrf.mxu0
    %v670 = vadd.f32 %v176, %v669
    %v671 = vpop.f32.mrf.mxu0
    %v672 = vadd.f32 %v180, %v671
    %673 = vmatprep.mubr.bf16.mxu0 0
    %674 = vmatmul.mubr.bf16.gmra.mxu0 %v251
    %v675 = vpop.f32.mrf.mxu0
    %v676 = vadd.f32 %v176, %v675
    %v677 = vpop.f32.mrf.mxu0
    %v678 = vadd.f32 %v180, %v677
    %v679 = vpop.f32.mrf.mxu0
    %v680 = vadd.f32 %v176, %v679
    %v681 = vpop.f32.mrf.mxu0
    %v682 = vadd.f32 %v180, %v681
    %683 = vmatprep.mubr.bf16.mxu0 0
    %684 = vmatmul.mubr.bf16.gmra.mxu0 %v252
    %v685 = vpop.f32.mrf.mxu0
    %v686 = vadd.f32 %v176, %v685
    %v687 = vpop.f32.mrf.mxu0
    %v688 = vadd.f32 %v180, %v687
    %v689 = vpop.f32.mrf.mxu0
    %v690 = vadd.f32 %v176, %v689
    %v691 = vpop.f32.mrf.mxu0
    %v692 = vadd.f32 %v180, %v691
    %693 = vdwg.mxu0
    %694 = vmatprep.subr.bf16.mxu0 %v512
    %695 = vmatpush1.bf16.msra.mxu0 %v511
    %696 = vmatprep.subr.bf16.mxu0 %v504
    %697 = vmatpush1.bf16.msra.mxu0 %v503
    %698 = vmatprep.subr.bf16.mxu0 %v496
    %699 = vmatpush1.bf16.msra.mxu0 %v495
    %700 = vmatprep.subr.bf16.mxu0 %v488
    %701 = vmatpush1.bf16.msra.mxu0 %v487
    %702 = vmatprep.subr.bf16.mxu0 %v480
    %703 = vmatpush1.bf16.msra.mxu0 %v479
    %704 = vmatprep.subr.bf16.mxu0 %v472
    %705 = vmatpush1.bf16.msra.mxu0 %v471
    %706 = vmatprep.subr.bf16.mxu0 %v464
    %707 = vmatpush1.bf16.msra.mxu0 %v463
    %708 = vmatprep.subr.bf16.mxu0 %v456
    %709 = vmatpush1.bf16.msra.mxu0 %v455
    %710 = vmatprep.subr.bf16.mxu0 0
    %711 = vmatpush2.bf16.msra.mxu0 0
    %712 = vmatprep.subr.bf16.mxu0 0
    %713 = vmatpush2.bf16.msra.mxu0 0
    %714 = vmatprep.subr.bf16.mxu0 0
    %715 = vmatpush2.bf16.msra.mxu0 0
    %716 = vmatprep.subr.bf16.mxu0 0
    %717 = vmatpush2.bf16.msra.mxu0 0
    %718 = vmatprep.subr.bf16.mxu0 0
    %719 = vmatpush2.bf16.msra.mxu0 0
    %720 = vmatprep.subr.bf16.mxu0 0
    %721 = vmatpush2.bf16.msra.mxu0 0
    %722 = vmatprep.subr.bf16.mxu0 0
    %723 = vmatpush2.bf16.msra.mxu0 0
    %724 = vmatprep.subr.bf16.mxu0 0
    %725 = vmatpush2.bf16.msra.mxu0 0
    %726 = vmatprep.mubr.bf16.mxu0 0
    %727 = vmatmul.mubr.bf16.gmra.mxu0 %v245
    %v728 = vpop.f32.mrf.mxu0
    %v729 = vadd.f32 %v184, %v728
    %v730 = vpop.f32.mrf.mxu0
    %v731 = vadd.f32 %v188, %v730
    %v732 = vpop.f32.mrf.mxu0
    %v733 = vadd.f32 %v184, %v732
    %v734 = vpop.f32.mrf.mxu0
    %v735 = vadd.f32 %v188, %v734
    %736 = vmatprep.mubr.bf16.mxu0 0
    %737 = vmatmul.mubr.bf16.gmra.mxu0 %v246
    %v738 = vpop.f32.mrf.mxu0
    %v739 = vadd.f32 %v184, %v738
    %v740 = vpop.f32.mrf.mxu0
    %v741 = vadd.f32 %v188, %v740
    %v742 = vpop.f32.mrf.mxu0
    %v743 = vadd.f32 %v184, %v742
    %v744 = vpop.f32.mrf.mxu0
    %v745 = vadd.f32 %v188, %v744
    %746 = vmatprep.mubr.bf16.mxu0 0
    %747 = vmatmul.mubr.bf16.gmra.mxu0 %v247
    %v748 = vpop.f32.mrf.mxu0
    %v749 = vadd.f32 %v184, %v748
    %v750 = vpop.f32.mrf.mxu0
    %v751 = vadd.f32 %v188, %v750
    %v752 = vpop.f32.mrf.mxu0
    %v753 = vadd.f32 %v184, %v752
    %v754 = vpop.f32.mrf.mxu0
    %v755 = vadd.f32 %v188, %v754
    %756 = vmatprep.mubr.bf16.mxu0 0
    %757 = vmatmul.mubr.bf16.gmra.mxu0 %v248
    %v758 = vpop.f32.mrf.mxu0
    %v759 = vadd.f32 %v184, %v758
    %v760 = vpop.f32.mrf.mxu0
    %v761 = vadd.f32 %v188, %v760
    %v762 = vpop.f32.mrf.mxu0
    %v763 = vadd.f32 %v184, %v762
    %v764 = vpop.f32.mrf.mxu0
    %v765 = vadd.f32 %v188, %v764
    %766 = vmatprep.mubr.bf16.mxu0 0
    %767 = vmatmul.mubr.bf16.gmra.mxu0 %v249
    %v768 = vpop.f32.mrf.mxu0
    %v769 = vadd.f32 %v184, %v768
    %v770 = vpop.f32.mrf.mxu0
    %v771 = vadd.f32 %v188, %v770
    %v772 = vpop.f32.mrf.mxu0
    %v773 = vadd.f32 %v184, %v772
    %v774 = vpop.f32.mrf.mxu0
    %v775 = vadd.f32 %v188, %v774
    %776 = vmatprep.mubr.bf16.mxu0 0
    %777 = vmatmul.mubr.bf16.gmra.mxu0 %v250
    %v778 = vpop.f32.mrf.mxu0
    %v779 = vadd.f32 %v184, %v778
    %v780 = vpop.f32.mrf.mxu0
    %v781 = vadd.f32 %v188, %v780
    %v782 = vpop.f32.mrf.mxu0
    %v783 = vadd.f32 %v184, %v782
    %v784 = vpop.f32.mrf.mxu0
    %v785 = vadd.f32 %v188, %v784
    %786 = vmatprep.mubr.bf16.mxu0 0
    %787 = vmatmul.mubr.bf16.gmra.mxu0 %v251
    %v788 = vpop.f32.mrf.mxu0
    %v789 = vadd.f32 %v184, %v788
    %v790 = vpop.f32.mrf.mxu0
    %v791 = vadd.f32 %v188, %v790
    %v792 = vpop.f32.mrf.mxu0
    %v793 = vadd.f32 %v184, %v792
    %v794 = vpop.f32.mrf.mxu0
    %v795 = vadd.f32 %v188, %v794
    %796 = vmatprep.mubr.bf16.mxu0 0
    %797 = vmatmul.mubr.bf16.gmra.mxu0 %v252
    %v798 = vpop.f32.mrf.mxu0
    %v799 = vadd.f32 %v184, %v798
    %v800 = vpop.f32.mrf.mxu0
    %v801 = vadd.f32 %v188, %v800
    %v802 = vpop.f32.mrf.mxu0
    %v803 = vadd.f32 %v184, %v802
    %v804 = vpop.f32.mrf.mxu0
    %v805 = vadd.f32 %v188, %v804
    %806 = vdwg.mxu0
    %807 = vmatprep.subr.bf16.mxu0 %v514
    %808 = vmatpush1.bf16.msra.mxu0 %v513
    %809 = vmatprep.subr.bf16.mxu0 %v506
    %810 = vmatpush1.bf16.msra.mxu0 %v505
    %811 = vmatprep.subr.bf16.mxu0 %v498
    %812 = vmatpush1.bf16.msra.mxu0 %v497
    %813 = vmatprep.subr.bf16.mxu0 %v490
    %814 = vmatpush1.bf16.msra.mxu0 %v489
    %815 = vmatprep.subr.bf16.mxu0 %v482
    %816 = vmatpush1.bf16.msra.mxu0 %v481
    %817 = vmatprep.subr.bf16.mxu0 %v474
    %818 = vmatpush1.bf16.msra.mxu0 %v473
    %819 = vmatprep.subr.bf16.mxu0 %v466
    %820 = vmatpush1.bf16.msra.mxu0 %v465
    %821 = vmatprep.subr.bf16.mxu0 %v458
    %822 = vmatpush1.bf16.msra.mxu0 %v457
    %823 = vmatprep.subr.bf16.mxu0 0
    %824 = vmatpush2.bf16.msra.mxu0 0
    %825 = vmatprep.subr.bf16.mxu0 0
    %826 = vmatpush2.bf16.msra.mxu0 0
    %827 = vmatprep.subr.bf16.mxu0 0
    %828 = vmatpush2.bf16.msra.mxu0 0
    %829 = vmatprep.subr.bf16.mxu0 0
    %830 = vmatpush2.bf16.msra.mxu0 0
    %831 = vmatprep.subr.bf16.mxu0 0
    %832 = vmatpush2.bf16.msra.mxu0 0
    %833 = vmatprep.subr.bf16.mxu0 0
    %834 = vmatpush2.bf16.msra.mxu0 0
    %835 = vmatprep.subr.bf16.mxu0 0
    %836 = vmatpush2.bf16.msra.mxu0 0
    %837 = vmatprep.subr.bf16.mxu0 0
    %838 = vmatpush2.bf16.msra.mxu0 0
    %839 = vmatprep.mubr.bf16.mxu0 0
    %840 = vmatmul.mubr.bf16.gmra.mxu0 %v245
    %v841 = vpop.f32.mrf.mxu0
    %v842 = vadd.f32 %v192, %v841
    %v843 = vpop.f32.mrf.mxu0
    %v844 = vadd.f32 %v196, %v843
    %v845 = vpop.f32.mrf.mxu0
    %v846 = vadd.f32 %v192, %v845
    %v847 = vpop.f32.mrf.mxu0
    %v848 = vadd.f32 %v196, %v847
    %849 = vmatprep.mubr.bf16.mxu0 0
    %850 = vmatmul.mubr.bf16.gmra.mxu0 %v246
    %v851 = vpop.f32.mrf.mxu0
    %v852 = vadd.f32 %v192, %v851
    %v853 = vpop.f32.mrf.mxu0
    %v854 = vadd.f32 %v196, %v853
    %v855 = vpop.f32.mrf.mxu0
    %v856 = vadd.f32 %v192, %v855
    %v857 = vpop.f32.mrf.mxu0
    %v858 = vadd.f32 %v196, %v857
    %859 = vmatprep.mubr.bf16.mxu0 0
    %860 = vmatmul.mubr.bf16.gmra.mxu0 %v247
    %v861 = vpop.f32.mrf.mxu0
    %v862 = vadd.f32 %v192, %v861
    %v863 = vpop.f32.mrf.mxu0
    %v864 = vadd.f32 %v196, %v863
    %v865 = vpop.f32.mrf.mxu0
    %v866 = vadd.f32 %v192, %v865
    %v867 = vpop.f32.mrf.mxu0
    %v868 = vadd.f32 %v196, %v867
    %869 = vmatprep.mubr.bf16.mxu0 0
    %870 = vmatmul.mubr.bf16.gmra.mxu0 %v248
    %v871 = vpop.f32.mrf.mxu0
    %v872 = vadd.f32 %v192, %v871
    %v873 = vpop.f32.mrf.mxu0
    %v874 = vadd.f32 %v196, %v873
    %v875 = vpop.f32.mrf.mxu0
    %v876 = vadd.f32 %v192, %v875
    %v877 = vpop.f32.mrf.mxu0
    %v878 = vadd.f32 %v196, %v877
    %879 = vmatprep.mubr.bf16.mxu0 0
    %880 = vmatmul.mubr.bf16.gmra.mxu0 %v249
    %v881 = vpop.f32.mrf.mxu0
    %v882 = vadd.f32 %v192, %v881
    %v883 = vpop.f32.mrf.mxu0
    %v884 = vadd.f32 %v196, %v883
    %v885 = vpop.f32.mrf.mxu0
    %v886 = vadd.f32 %v192, %v885
    %v887 = vpop.f32.mrf.mxu0
    %v888 = vadd.f32 %v196, %v887
    %889 = vmatprep.mubr.bf16.mxu0 0
    %890 = vmatmul.mubr.bf16.gmra.mxu0 %v250
    %v891 = vpop.f32.mrf.mxu0
    %v892 = vadd.f32 %v192, %v891
    %v893 = vpop.f32.mrf.mxu0
    %v894 = vadd.f32 %v196, %v893
    %v895 = vpop.f32.mrf.mxu0
    %v896 = vadd.f32 %v192, %v895
    %v897 = vpop.f32.mrf.mxu0
    %v898 = vadd.f32 %v196, %v897
    %899 = vmatprep.mubr.bf16.mxu0 0
    %900 = vmatmul.mubr.bf16.gmra.mxu0 %v251
    %v901 = vpop.f32.mrf.mxu0
    %v902 = vadd.f32 %v192, %v901
    %v903 = vpop.f32.mrf.mxu0
    %v904 = vadd.f32 %v196, %v903
    %v905 = vpop.f32.mrf.mxu0
    %v906 = vadd.f32 %v192, %v905
    %v907 = vpop.f32.mrf.mxu0
    %v908 = vadd.f32 %v196, %v907
    %909 = vmatprep.mubr.bf16.mxu0 0
    %910 = vmatmul.mubr.bf16.gmra.mxu0 %v252
    %v911 = vpop.f32.mrf.mxu0
    %v912 = vadd.f32 %v192, %v911
    %v913 = vpop.f32.mrf.mxu0
    %v914 = vadd.f32 %v196, %v913
    %v915 = vpop.f32.mrf.mxu0
    %v916 = vadd.f32 %v192, %v915
    %v917 = vpop.f32.mrf.mxu0
    %v918 = vadd.f32 %v196, %v917
    %919 = vdwg.mxu0
    %920 = vmatprep.subr.bf16.mxu0 %v516
    %921 = vmatpush1.bf16.msra.mxu0 %v515
    %922 = vmatprep.subr.bf16.mxu0 %v508
    %923 = vmatpush1.bf16.msra.mxu0 %v507
    %924 = vmatprep.subr.bf16.mxu0 %v500
    %925 = vmatpush1.bf16.msra.mxu0 %v499
    %926 = vmatprep.subr.bf16.mxu0 %v492
    %927 = vmatpush1.bf16.msra.mxu0 %v491
    %928 = vmatprep.subr.bf16.mxu0 %v484
    %929 = vmatpush1.bf16.msra.mxu0 %v483
    %930 = vmatprep.subr.bf16.mxu0 %v476
    %931 = vmatpush1.bf16.msra.mxu0 %v475
    %932 = vmatprep.subr.bf16.mxu0 %v468
    %933 = vmatpush1.bf16.msra.mxu0 %v467
    %934 = vmatprep.subr.bf16.mxu0 %v460
    %935 = vmatpush1.bf16.msra.mxu0 %v459
    %936 = vmatprep.subr.bf16.mxu0 0
    %937 = vmatpush2.bf16.msra.mxu0 0
    %938 = vmatprep.subr.bf16.mxu0 0
    %939 = vmatpush2.bf16.msra.mxu0 0
    %940 = vmatprep.subr.bf16.mxu0 0
    %941 = vmatpush2.bf16.msra.mxu0 0
    %942 = vmatprep.subr.bf16.mxu0 0
    %943 = vmatpush2.bf16.msra.mxu0 0
    %944 = vmatprep.subr.bf16.mxu0 0
    %945 = vmatpush2.bf16.msra.mxu0 0
    %946 = vmatprep.subr.bf16.mxu0 0
    %947 = vmatpush2.bf16.msra.mxu0 0
    %948 = vmatprep.subr.bf16.mxu0 0
    %949 = vmatpush2.bf16.msra.mxu0 0
    %950 = vmatprep.subr.bf16.mxu0 0
    %951 = vmatpush2.bf16.msra.mxu0 0
    %952 = vmatprep.mubr.bf16.mxu0 0
    %953 = vmatmul.mubr.bf16.gmra.mxu0 %v245
    %v954 = vpop.f32.mrf.mxu0
    %v955 = vadd.f32 %v200, %v954
    %v956 = vpop.f32.mrf.mxu0
    %v957 = vadd.f32 %v204, %v956
    %v958 = vpop.f32.mrf.mxu0
    %v959 = vadd.f32 %v200, %v958
    %v960 = vpop.f32.mrf.mxu0
    %v961 = vadd.f32 %v204, %v960
    %962 = vmatprep.mubr.bf16.mxu0 0
    %963 = vmatmul.mubr.bf16.gmra.mxu0 %v246
    %v964 = vpop.f32.mrf.mxu0
    %v965 = vadd.f32 %v200, %v964
    %v966 = vpop.f32.mrf.mxu0
    %v967 = vadd.f32 %v204, %v966
    %v968 = vpop.f32.mrf.mxu0
    %v969 = vadd.f32 %v200, %v968
    %v970 = vpop.f32.mrf.mxu0
    %v971 = vadd.f32 %v204, %v970
    %972 = vmatprep.mubr.bf16.mxu0 0
    %973 = vmatmul.mubr.bf16.gmra.mxu0 %v247
    %v974 = vpop.f32.mrf.mxu0
    %v975 = vadd.f32 %v200, %v974
    %v976 = vpop.f32.mrf.mxu0
    %v977 = vadd.f32 %v204, %v976
    %v978 = vpop.f32.mrf.mxu0
    %v979 = vadd.f32 %v200, %v978
    %v980 = vpop.f32.mrf.mxu0
    %v981 = vadd.f32 %v204, %v980
    %982 = vmatprep.mubr.bf16.mxu0 0
    %983 = vmatmul.mubr.bf16.gmra.mxu0 %v248
    %v984 = vpop.f32.mrf.mxu0
    %v985 = vadd.f32 %v200, %v984
    %v986 = vpop.f32.mrf.mxu0
    %v987 = vadd.f32 %v204, %v986
    %v988 = vpop.f32.mrf.mxu0
    %v989 = vadd.f32 %v200, %v988
    %v990 = vpop.f32.mrf.mxu0
    %v991 = vadd.f32 %v204, %v990
    %992 = vmatprep.mubr.bf16.mxu0 0
    %993 = vmatmul.mubr.bf16.gmra.mxu0 %v249
    %v994 = vpop.f32.mrf.mxu0
    %v995 = vadd.f32 %v200, %v994
    %v996 = vpop.f32.mrf.mxu0
    %v997 = vadd.f32 %v204, %v996
    %v998 = vpop.f32.mrf.mxu0
    %v999 = vadd.f32 %v200, %v998
    %v1000 = vpop.f32.mrf.mxu0
    %v1001 = vadd.f32 %v204, %v1000
    %1002 = vmatprep.mubr.bf16.mxu0 0
    %1003 = vmatmul.mubr.bf16.gmra.mxu0 %v250
    %v1004 = vpop.f32.mrf.mxu0
    %v1005 = vadd.f32 %v200, %v1004
    %v1006 = vpop.f32.mrf.mxu0
    %v1007 = vadd.f32 %v204, %v1006
    %v1008 = vpop.f32.mrf.mxu0
    %v1009 = vadd.f32 %v200, %v1008
    %v1010 = vpop.f32.mrf.mxu0
    %v1011 = vadd.f32 %v204, %v1010
    %1012 = vmatprep.mubr.bf16.mxu0 0
    %1013 = vmatmul.mubr.bf16.gmra.mxu0 %v251
    %v1014 = vpop.f32.mrf.mxu0
    %v1015 = vadd.f32 %v200, %v1014
    %v1016 = vpop.f32.mrf.mxu0
    %v1017 = vadd.f32 %v204, %v1016
    %v1018 = vpop.f32.mrf.mxu0
    %v1019 = vadd.f32 %v200, %v1018
    %v1020 = vpop.f32.mrf.mxu0
    %v1021 = vadd.f32 %v204, %v1020
    %1022 = vmatprep.mubr.bf16.mxu0 0
    %1023 = vmatmul.mubr.bf16.gmra.mxu0 %v252
    %v1024 = vpop.f32.mrf.mxu0
    %v1025 = vadd.f32 %v200, %v1024
    %v1026 = vpop.f32.mrf.mxu0
    %v1027 = vadd.f32 %v204, %v1026
    %v1028 = vpop.f32.mrf.mxu0
    %v1029 = vadd.f32 %v200, %v1028
    %v1030 = vpop.f32.mrf.mxu0
    %v1031 = vadd.f32 %v204, %v1030
    %1032 = vdwg.mxu0
    %1033 = vst [vmem:[#allocation2] sm:$0xff] %v616
    %1034 = vst [vmem:[#allocation2 + $0x8] sm:$0xff] %v618
    %1035 = vst [vmem:[#allocation2 + $0x10] sm:$0xff] %v729
    %1036 = vst [vmem:[#allocation2 + $0x18] sm:$0xff] %v731
    %1037 = vst [vmem:[#allocation2 + $0x20] sm:$0xff] %v842
    %1038 = vst [vmem:[#allocation2 + $0x28] sm:$0xff] %v844
    %1039 = vst [vmem:[#allocation2 + $0x30] sm:$0xff] %v955
    %1040 = vst [vmem:[#allocation2 + $0x38] sm:$0xff] %v957
    %1041 = vst [vmem:[#allocation2 + $0x40] sm:$0xff] %v620
    %1042 = vst [vmem:[#allocation2 + $0x48] sm:$0xff] %v622
    %1043 = vst [vmem:[#allocation2 + $0x50] sm:$0xff] %v733
    %1044 = vst [vmem:[#allocation2 + $0x58] sm:$0xff] %v735
    %1045 = vst [vmem:[#allocation2 + $0x60] sm:$0xff] %v846
    %1046 = vst [vmem:[#allocation2 + $0x68] sm:$0xff] %v848
    %1047 = vst [vmem:[#allocation2 + $0x70] sm:$0xff] %v959
    %1048 = vst [vmem:[#allocation2 + $0x78] sm:$0xff] %v961
    %1049 = vst [vmem:[#allocation2 + $0x80] sm:$0xff] %v626
    %1050 = vst [vmem:[#allocation2 + $0x88] sm:$0xff] %v628
    %1051 = vst [vmem:[#allocation2 + $0x90] sm:$0xff] %v739
    %1052 = vst [vmem:[#allocation2 + $0x98] sm:$0xff] %v741
    %1053 = vst [vmem:[#allocation2 + $0xa0] sm:$0xff] %v852
    %1054 = vst [vmem:[#allocation2 + $0xa8] sm:$0xff] %v854
    %1055 = vst [vmem:[#allocation2 + $0xb0] sm:$0xff] %v965
    %1056 = vst [vmem:[#allocation2 + $0xb8] sm:$0xff] %v967
    %1057 = vst [vmem:[#allocation2 + $0xc0] sm:$0xff] %v630
    %1058 = vst [vmem:[#allocation2 + $0xc8] sm:$0xff] %v632
    %1059 = vst [vmem:[#allocation2 + $0xd0] sm:$0xff] %v743
    %1060 = vst [vmem:[#allocation2 + $0xd8] sm:$0xff] %v745
    %1061 = vst [vmem:[#allocation2 + $0xe0] sm:$0xff] %v856
    %1062 = vst [vmem:[#allocation2 + $0xe8] sm:$0xff] %v858
    %1063 = vst [vmem:[#allocation2 + $0xf0] sm:$0xff] %v969
    %1064 = vst [vmem:[#allocation2 + $0xf8] sm:$0xff] %v971
    %1065 = vst [vmem:[#allocation2 + $0x100] sm:$0xff] %v636
    %1066 = vst [vmem:[#allocation2 + $0x108] sm:$0xff] %v638
    %1067 = vst [vmem:[#allocation2 + $0x110] sm:$0xff] %v749
    %1068 = vst [vmem:[#allocation2 + $0x118] sm:$0xff] %v751
    %1069 = vst [vmem:[#allocation2 + $0x120] sm:$0xff] %v862
    %1070 = vst [vmem:[#allocation2 + $0x128] sm:$0xff] %v864
    %1071 = vst [vmem:[#allocation2 + $0x130] sm:$0xff] %v975
    %1072 = vst [vmem:[#allocation2 + $0x138] sm:$0xff] %v977
    %1073 = vst [vmem:[#allocation2 + $0x140] sm:$0xff] %v640
    %1074 = vst [vmem:[#allocation2 + $0x148] sm:$0xff] %v642
    %1075 = vst [vmem:[#allocation2 + $0x150] sm:$0xff] %v753
    %1076 = vst [vmem:[#allocation2 + $0x158] sm:$0xff] %v755
    %1077 = vst [vmem:[#allocation2 + $0x160] sm:$0xff] %v866
    %1078 = vst [vmem:[#allocation2 + $0x168] sm:$0xff] %v868
    %1079 = vst [vmem:[#allocation2 + $0x170] sm:$0xff] %v979
    %1080 = vst [vmem:[#allocation2 + $0x178] sm:$0xff] %v981
    %1081 = vst [vmem:[#allocation2 + $0x180] sm:$0xff] %v646
    %1082 = vst [vmem:[#allocation2 + $0x188] sm:$0xff] %v648
    %1083 = vst [vmem:[#allocation2 + $0x190] sm:$0xff] %v759
    %1084 = vst [vmem:[#allocation2 + $0x198] sm:$0xff] %v761
    %1085 = vst [vmem:[#allocation2 + $0x1a0] sm:$0xff] %v872
    %1086 = vst [vmem:[#allocation2 + $0x1a8] sm:$0xff] %v874
    %1087 = vst [vmem:[#allocation2 + $0x1b0] sm:$0xff] %v985
    %1088 = vst [vmem:[#allocation2 + $0x1b8] sm:$0xff] %v987
    %1089 = vst [vmem:[#allocation2 + $0x1c0] sm:$0xff] %v650
    %1090 = vst [vmem:[#allocation2 + $0x1c8] sm:$0xff] %v652
    %1091 = vst [vmem:[#allocation2 + $0x1d0] sm:$0xff] %v763
    %1092 = vst [vmem:[#allocation2 + $0x1d8] sm:$0xff] %v765
    %1093 = vst [vmem:[#allocation2 + $0x1e0] sm:$0xff] %v876
    %1094 = vst [vmem:[#allocation2 + $0x1e8] sm:$0xff] %v878
    %1095 = vst [vmem:[#allocation2 + $0x1f0] sm:$0xff] %v989
    %1096 = vst [vmem:[#allocation2 + $0x1f8] sm:$0xff] %v991
    %1097 = vst [vmem:[#allocation2 + $0x200] sm:$0xff] %v656
    %1098 = vst [vmem:[#allocation2 + $0x208] sm:$0xff] %v658
    %1099 = vst [vmem:[#allocation2 + $0x210] sm:$0xff] %v769
    %1100 = vst [vmem:[#allocation2 + $0x218] sm:$0xff] %v771
    %1101 = vst [vmem:[#allocation2 + $0x220] sm:$0xff] %v882
    %1102 = vst [vmem:[#allocation2 + $0x228] sm:$0xff] %v884
    %1103 = vst [vmem:[#allocation2 + $0x230] sm:$0xff] %v995
    %1104 = vst [vmem:[#allocation2 + $0x238] sm:$0xff] %v997
    %1105 = vst [vmem:[#allocation2 + $0x240] sm:$0xff] %v660
    %1106 = vst [vmem:[#allocation2 + $0x248] sm:$0xff] %v662
    %1107 = vst [vmem:[#allocation2 + $0x250] sm:$0xff] %v773
    %1108 = vst [vmem:[#allocation2 + $0x258] sm:$0xff] %v775
    %1109 = vst [vmem:[#allocation2 + $0x260] sm:$0xff] %v886
    %1110 = vst [vmem:[#allocation2 + $0x268] sm:$0xff] %v888
    %1111 = vst [vmem:[#allocation2 + $0x270] sm:$0xff] %v999
    %1112 = vst [vmem:[#allocation2 + $0x278] sm:$0xff] %v1001
    %1113 = vst [vmem:[#allocation2 + $0x280] sm:$0xff] %v666
    %1114 = vst [vmem:[#allocation2 + $0x288] sm:$0xff] %v668
    %1115 = vst [vmem:[#allocation2 + $0x290] sm:$0xff] %v779
    %1116 = vst [vmem:[#allocation2 + $0x298] sm:$0xff] %v781
    %1117 = vst [vmem:[#allocation2 + $0x2a0] sm:$0xff] %v892
    %1118 = vst [vmem:[#allocation2 + $0x2a8] sm:$0xff] %v894
    %1119 = vst [vmem:[#allocation2 + $0x2b0] sm:$0xff] %v1005
    %1120 = vst [vmem:[#allocation2 + $0x2b8] sm:$0xff] %v1007
    %1121 = vst [vmem:[#allocation2 + $0x2c0] sm:$0xff] %v670
    %1122 = vst [vmem:[#allocation2 + $0x2c8] sm:$0xff] %v672
    %1123 = vst [vmem:[#allocation2 + $0x2d0] sm:$0xff] %v783
    %1124 = vst [vmem:[#allocation2 + $0x2d8] sm:$0xff] %v785
    %1125 = vst [vmem:[#allocation2 + $0x2e0] sm:$0xff] %v896
    %1126 = vst [vmem:[#allocation2 + $0x2e8] sm:$0xff] %v898
    %1127 = vst [vmem:[#allocation2 + $0x2f0] sm:$0xff] %v1009
    %1128 = vst [vmem:[#allocation2 + $0x2f8] sm:$0xff] %v1011
    %1129 = vst [vmem:[#allocation2 + $0x300] sm:$0xff] %v676
    %1130 = vst [vmem:[#allocation2 + $0x308] sm:$0xff] %v678
    %1131 = vst [vmem:[#allocation2 + $0x310] sm:$0xff] %v789
    %1132 = vst [vmem:[#allocation2 + $0x318] sm:$0xff] %v791
    %1133 = vst [vmem:[#allocation2 + $0x320] sm:$0xff] %v902
    %1134 = vst [vmem:[#allocation2 + $0x328] sm:$0xff] %v904
    %1135 = vst [vmem:[#allocation2 + $0x330] sm:$0xff] %v1015
    %1136 = vst [vmem:[#allocation2 + $0x338] sm:$0xff] %v1017
    %1137 = vst [vmem:[#allocation2 + $0x340] sm:$0xff] %v680
    %1138 = vst [vmem:[#allocation2 + $0x348] sm:$0xff] %v682
    %1139 = vst [vmem:[#allocation2 + $0x350] sm:$0xff] %v793
    %1140 = vst [vmem:[#allocation2 + $0x358] sm:$0xff] %v795
    %1141 = vst [vmem:[#allocation2 + $0x360] sm:$0xff] %v906
    %1142 = vst [vmem:[#allocation2 + $0x368] sm:$0xff] %v908
    %1143 = vst [vmem:[#allocation2 + $0x370] sm:$0xff] %v1019
    %1144 = vst [vmem:[#allocation2 + $0x378] sm:$0xff] %v1021
    %1145 = vst [vmem:[#allocation2 + $0x380] sm:$0xff] %v686
    %1146 = vst [vmem:[#allocation2 + $0x388] sm:$0xff] %v688
    %1147 = vst [vmem:[#allocation2 + $0x390] sm:$0xff] %v799
    %1148 = vst [vmem:[#allocation2 + $0x398] sm:$0xff] %v801
    %1149 = vst [vmem:[#allocation2 + $0x3a0] sm:$0xff] %v912
    %1150 = vst [vmem:[#allocation2 + $0x3a8] sm:$0xff] %v914
    %1151 = vst [vmem:[#allocation2 + $0x3b0] sm:$0xff] %v1025
    %1152 = vst [vmem:[#allocation2 + $0x3b8] sm:$0xff] %v1027
    %1153 = vst [vmem:[#allocation2 + $0x3c0] sm:$0xff] %v690
    %1154 = vst [vmem:[#allocation2 + $0x3c8] sm:$0xff] %v692
    %1155 = vst [vmem:[#allocation2 + $0x3d0] sm:$0xff] %v803
    %1156 = vst [vmem:[#allocation2 + $0x3d8] sm:$0xff] %v805
    %1157 = vst [vmem:[#allocation2 + $0x3e0] sm:$0xff] %v916
    %1158 = vst [vmem:[#allocation2 + $0x3e8] sm:$0xff] %v918
    %1159 = vst [vmem:[#allocation2 + $0x3f0] sm:$0xff] %v1029
    %1160 = vst [vmem:[#allocation2 + $0x3f8] sm:$0xff] %v1031
    %v1161 = vld [vmem:[#allocation10] sm:$0xff]
    %v1162 = vld [vmem:[#allocation10 + $0x8] sm:$0xff]
    %v1163 = vld [vmem:[#allocation10 + $0x10] sm:$0xff]
    %v1164 = vld [vmem:[#allocation10 + $0x18] sm:$0xff]
    %v1165 = vld [vmem:[#allocation10 + $0x20] sm:$0xff]
    %v1166 = vld [vmem:[#allocation10 + $0x28] sm:$0xff]
    %v1167 = vld [vmem:[#allocation10 + $0x30] sm:$0xff]
    %v1168 = vld [vmem:[#allocation10 + $0x38] sm:$0xff]
    %v1169 = vld [vmem:[#allocation10 + $0x40] sm:$0xff]
    %v1170 = vld [vmem:[#allocation10 + $0x48] sm:$0xff]
    %v1171 = vld [vmem:[#allocation10 + $0x50] sm:$0xff]
    %v1172 = vld [vmem:[#allocation10 + $0x58] sm:$0xff]
    %v1173 = vld [vmem:[#allocation10 + $0x60] sm:$0xff]
    %v1174 = vld [vmem:[#allocation10 + $0x68] sm:$0xff]
    %v1175 = vld [vmem:[#allocation10 + $0x70] sm:$0xff]
    %v1176 = vld [vmem:[#allocation10 + $0x78] sm:$0xff]
    %v1177 = vld [vmem:[#allocation10 + $0x80] sm:$0xff]
    %v1178 = vld [vmem:[#allocation10 + $0x88] sm:$0xff]
    %v1179 = vld [vmem:[#allocation10 + $0x90] sm:$0xff]
    %v1180 = vld [vmem:[#allocation10 + $0x98] sm:$0xff]
    %v1181 = vld [vmem:[#allocation10 + $0xa0] sm:$0xff]
    %v1182 = vld [vmem:[#allocation10 + $0xa8] sm:$0xff]
    %v1183 = vld [vmem:[#allocation10 + $0xb0] sm:$0xff]
    %v1184 = vld [vmem:[#allocation10 + $0xb8] sm:$0xff]
    %v1185 = vld [vmem:[#allocation10 + $0xc0] sm:$0xff]
    %v1186 = vld [vmem:[#allocation10 + $0xc8] sm:$0xff]
    %v1187 = vld [vmem:[#allocation10 + $0xd0] sm:$0xff]
    %v1188 = vld [vmem:[#allocation10 + $0xd8] sm:$0xff]
    %v1189 = vld [vmem:[#allocation10 + $0xe0] sm:$0xff]
    %v1190 = vld [vmem:[#allocation10 + $0xe8] sm:$0xff]
    %v1191 = vld [vmem:[#allocation10 + $0xf0] sm:$0xff]
    %v1192 = vld [vmem:[#allocation10 + $0xf8] sm:$0xff]
    %v1193 = vld [vmem:[#allocation10 + $0x100] sm:$0xff]
    %v1194 = vld [vmem:[#allocation10 + $0x108] sm:$0xff]
    %v1195 = vld [vmem:[#allocation10 + $0x110] sm:$0xff]
    %v1196 = vld [vmem:[#allocation10 + $0x118] sm:$0xff]
    %v1197 = vld [vmem:[#allocation10 + $0x120] sm:$0xff]
    %v1198 = vld [vmem:[#allocation10 + $0x128] sm:$0xff]
    %v1199 = vld [vmem:[#allocation10 + $0x130] sm:$0xff]
    %v1200 = vld [vmem:[#allocation10 + $0x138] sm:$0xff]
    %v1201 = vld [vmem:[#allocation10 + $0x140] sm:$0xff]
    %v1202 = vld [vmem:[#allocation10 + $0x148] sm:$0xff]
    %v1203 = vld [vmem:[#allocation10 + $0x150] sm:$0xff]
    %v1204 = vld [vmem:[#allocation10 + $0x158] sm:$0xff]
    %v1205 = vld [vmem:[#allocation10 + $0x160] sm:$0xff]
    %v1206 = vld [vmem:[#allocation10 + $0x168] sm:$0xff]
    %v1207 = vld [vmem:[#allocation10 + $0x170] sm:$0xff]
    %v1208 = vld [vmem:[#allocation10 + $0x178] sm:$0xff]
    %v1209 = vld [vmem:[#allocation10 + $0x180] sm:$0xff]
    %v1210 = vld [vmem:[#allocation10 + $0x188] sm:$0xff]
    %v1211 = vld [vmem:[#allocation10 + $0x190] sm:$0xff]
    %v1212 = vld [vmem:[#allocation10 + $0x198] sm:$0xff]
    %v1213 = vld [vmem:[#allocation10 + $0x1a0] sm:$0xff]
    %v1214 = vld [vmem:[#allocation10 + $0x1a8] sm:$0xff]
    %v1215 = vld [vmem:[#allocation10 + $0x1b0] sm:$0xff]
    %v1216 = vld [vmem:[#allocation10 + $0x1b8] sm:$0xff]
    %v1217 = vld [vmem:[#allocation10 + $0x1c0] sm:$0xff]
    %v1218 = vld [vmem:[#allocation10 + $0x1c8] sm:$0xff]
    %v1219 = vld [vmem:[#allocation10 + $0x1d0] sm:$0xff]
    %v1220 = vld [vmem:[#allocation10 + $0x1d8] sm:$0xff]
    %v1221 = vld [vmem:[#allocation10 + $0x1e0] sm:$0xff]
    %v1222 = vld [vmem:[#allocation10 + $0x1e8] sm:$0xff]
    %v1223 = vld [vmem:[#allocation10 + $0x1f0] sm:$0xff]
    %v1224 = vld [vmem:[#allocation10 + $0x1f8] sm:$0xff]
    %v1225 = vld [vmem:[#allocation10 + $0x200] sm:$0xff]
    %v1226 = vld [vmem:[#allocation10 + $0x208] sm:$0xff]
    %v1227 = vld [vmem:[#allocation10 + $0x210] sm:$0xff]
    %v1228 = vld [vmem:[#allocation10 + $0x218] sm:$0xff]
    %v1229 = vld [vmem:[#allocation10 + $0x220] sm:$0xff]
    %v1230 = vld [vmem:[#allocation10 + $0x228] sm:$0xff]
    %v1231 = vld [vmem:[#allocation10 + $0x230] sm:$0xff]
    %v1232 = vld [vmem:[#allocation10 + $0x238] sm:$0xff]
    %v1233 = vld [vmem:[#allocation10 + $0x240] sm:$0xff]
    %v1234 = vld [vmem:[#allocation10 + $0x248] sm:$0xff]
    %v1235 = vld [vmem:[#allocation10 + $0x250] sm:$0xff]
    %v1236 = vld [vmem:[#allocation10 + $0x258] sm:$0xff]
    %v1237 = vld [vmem:[#allocation10 + $0x260] sm:$0xff]
    %v1238 = vld [vmem:[#allocation10 + $0x268] sm:$0xff]
    %v1239 = vld [vmem:[#allocation10 + $0x270] sm:$0xff]
    %v1240 = vld [vmem:[#allocation10 + $0x278] sm:$0xff]
    %v1241 = vld [vmem:[#allocation10 + $0x280] sm:$0xff]
    %v1242 = vld [vmem:[#allocation10 + $0x288] sm:$0xff]
    %v1243 = vld [vmem:[#allocation10 + $0x290] sm:$0xff]
    %v1244 = vld [vmem:[#allocation10 + $0x298] sm:$0xff]
    %v1245 = vld [vmem:[#allocation10 + $0x2a0] sm:$0xff]
    %v1246 = vld [vmem:[#allocation10 + $0x2a8] sm:$0xff]
    %v1247 = vld [vmem:[#allocation10 + $0x2b0] sm:$0xff]
    %v1248 = vld [vmem:[#allocation10 + $0x2b8] sm:$0xff]
    %v1249 = vld [vmem:[#allocation10 + $0x2c0] sm:$0xff]
    %v1250 = vld [vmem:[#allocation10 + $0x2c8] sm:$0xff]
    %v1251 = vld [vmem:[#allocation10 + $0x2d0] sm:$0xff]
    %v1252 = vld [vmem:[#allocation10 + $0x2d8] sm:$0xff]
    %v1253 = vld [vmem:[#allocation10 + $0x2e0] sm:$0xff]
    %v1254 = vld [vmem:[#allocation10 + $0x2e8] sm:$0xff]
    %v1255 = vld [vmem:[#allocation10 + $0x2f0] sm:$0xff]
    %v1256 = vld [vmem:[#allocation10 + $0x2f8] sm:$0xff]
    %v1257 = vld [vmem:[#allocation10 + $0x300] sm:$0xff]
    %v1258 = vld [vmem:[#allocation10 + $0x308] sm:$0xff]
    %v1259 = vld [vmem:[#allocation10 + $0x310] sm:$0xff]
    %v1260 = vld [vmem:[#allocation10 + $0x318] sm:$0xff]
    %v1261 = vld [vmem:[#allocation10 + $0x320] sm:$0xff]
    %v1262 = vld [vmem:[#allocation10 + $0x328] sm:$0xff]
    %v1263 = vld [vmem:[#allocation10 + $0x330] sm:$0xff]
    %v1264 = vld [vmem:[#allocation10 + $0x338] sm:$0xff]
    %v1265 = vld [vmem:[#allocation10 + $0x340] sm:$0xff]
    %v1266 = vld [vmem:[#allocation10 + $0x348] sm:$0xff]
    %v1267 = vld [vmem:[#allocation10 + $0x350] sm:$0xff]
    %v1268 = vld [vmem:[#allocation10 + $0x358] sm:$0xff]
    %v1269 = vld [vmem:[#allocation10 + $0x360] sm:$0xff]
    %v1270 = vld [vmem:[#allocation10 + $0x368] sm:$0xff]
    %v1271 = vld [vmem:[#allocation10 + $0x370] sm:$0xff]
    %v1272 = vld [vmem:[#allocation10 + $0x378] sm:$0xff]
    %v1273 = vld [vmem:[#allocation10 + $0x380] sm:$0xff]
    %v1274 = vld [vmem:[#allocation10 + $0x388] sm:$0xff]
    %v1275 = vld [vmem:[#allocation10 + $0x390] sm:$0xff]
    %v1276 = vld [vmem:[#allocation10 + $0x398] sm:$0xff]
    %v1277 = vld [vmem:[#allocation10 + $0x3a0] sm:$0xff]
    %v1278 = vld [vmem:[#allocation10 + $0x3a8] sm:$0xff]
    %v1279 = vld [vmem:[#allocation10 + $0x3b0] sm:$0xff]
    %v1280 = vld [vmem:[#allocation10 + $0x3b8] sm:$0xff]
    %v1281 = vld [vmem:[#allocation10 + $0x3c0] sm:$0xff]
    %v1282 = vld [vmem:[#allocation10 + $0x3c8] sm:$0xff]
    %v1283 = vld [vmem:[#allocation10 + $0x3d0] sm:$0xff]
    %v1284 = vld [vmem:[#allocation10 + $0x3d8] sm:$0xff]
    %v1285 = vld [vmem:[#allocation10 + $0x3e0] sm:$0xff]
    %v1286 = vld [vmem:[#allocation10 + $0x3e8] sm:$0xff]
    %v1287 = vld [vmem:[#allocation10 + $0x3f0] sm:$0xff]
    %v1288 = vld [vmem:[#allocation10 + $0x3f8] sm:$0xff]
    %v1289 = vld [vmem:[#allocation3] sm:$0xff]
    %v1290 = vld [vmem:[#allocation3 + $0x8] sm:$0xff]
    %v1291 = vld [vmem:[#allocation3 + $0x10] sm:$0xff]
    %v1292 = vld [vmem:[#allocation3 + $0x18] sm:$0xff]
    %v1293 = vld [vmem:[#allocation4] sm:$0xff]
    %v1294 = vld [vmem:[#allocation4 + $0x8] sm:$0xff]
    %v1295 = vld [vmem:[#allocation4 + $0x10] sm:$0xff]
    %v1296 = vld [vmem:[#allocation4 + $0x18] sm:$0xff]
    %s1297 = smul.u32 0, 8
    %s1298 = smul.addr %s1297, 8
    %s1299 = scalar_lea.vmem [#allocation2], %s1298
    %v1300 = vld [vmem:[%s1299] sm:$0xff]
    %v1301 = vld [vmem:[%s1299 + $0x8] sm:$0xff]
    %v1302 = vld [vmem:[%s1299 + $0x10] sm:$0xff]
    %v1303 = vld [vmem:[%s1299 + $0x18] sm:$0xff]
    %v1304 = vld [vmem:[%s1299 + $0x20] sm:$0xff]
    %v1305 = vld [vmem:[%s1299 + $0x28] sm:$0xff]
    %v1306 = vld [vmem:[%s1299 + $0x30] sm:$0xff]
    %v1307 = vld [vmem:[%s1299 + $0x38] sm:$0xff]
    %v1308 = vld [vmem:[%s1299 + $0x40] sm:$0xff]
    %v1309 = vld [vmem:[%s1299 + $0x48] sm:$0xff]
    %v1310 = vld [vmem:[%s1299 + $0x50] sm:$0xff]
    %v1311 = vld [vmem:[%s1299 + $0x58] sm:$0xff]
    %v1312 = vld [vmem:[%s1299 + $0x60] sm:$0xff]
    %v1313 = vld [vmem:[%s1299 + $0x68] sm:$0xff]
    %v1314 = vld [vmem:[%s1299 + $0x70] sm:$0xff]
    %v1315 = vld [vmem:[%s1299 + $0x78] sm:$0xff]
    %v1316 = vpack.c.bf16 %v1291, %v1289
    %v1317 = vpack.c.bf16 %v1292, %v1290
    %v1446 = vunpack.c.l.b16 %v1161
    %v1447 = vunpack.c.h.b16 %v1161
    %v1448 = vunpack.c.l.b16 %v1162
    %v1449 = vunpack.c.h.b16 %v1162
    %v1450 = vunpack.c.l.b16 %v1163
    %v1451 = vunpack.c.h.b16 %v1163
    %v1452 = vunpack.c.l.b16 %v1164
    %v1453 = vunpack.c.h.b16 %v1164
    %v1454 = vunpack.c.l.b16 %v1165
    %v1455 = vunpack.c.h.b16 %v1165
    %v1456 = vunpack.c.l.b16 %v1166
    %v1457 = vunpack.c.h.b16 %v1166
    %v1458 = vunpack.c.l.b16 %v1167
    %v1459 = vunpack.c.h.b16 %v1167
    %v1460 = vunpack.c.l.b16 %v1168
    %v1461 = vunpack.c.h.b16 %v1168
    %v1462 = vunpack.c.l.b16 %v1169
    %v1463 = vunpack.c.h.b16 %v1169
    %v1464 = vunpack.c.l.b16 %v1170
    %v1465 = vunpack.c.h.b16 %v1170
    %v1466 = vunpack.c.l.b16 %v1171
    %v1467 = vunpack.c.h.b16 %v1171
    %v1468 = vunpack.c.l.b16 %v1172
    %v1469 = vunpack.c.h.b16 %v1172
    %v1470 = vunpack.c.l.b16 %v1173
    %v1471 = vunpack.c.h.b16 %v1173
    %v1472 = vunpack.c.l.b16 %v1174
    %v1473 = vunpack.c.h.b16 %v1174
    %v1474 = vunpack.c.l.b16 %v1175
    %v1475 = vunpack.c.h.b16 %v1175
    %v1476 = vunpack.c.l.b16 %v1176
    %v1477 = vunpack.c.h.b16 %v1176
    %v1478 = vunpack.c.l.b16 %v1177
    %v1479 = vunpack.c.h.b16 %v1177
    %v1480 = vunpack.c.l.b16 %v1178
    %v1481 = vunpack.c.h.b16 %v1178
    %v1482 = vunpack.c.l.b16 %v1179
    %v1483 = vunpack.c.h.b16 %v1179
    %v1484 = vunpack.c.l.b16 %v1180
    %v1485 = vunpack.c.h.b16 %v1180
    %v1486 = vunpack.c.l.b16 %v1181
    %v1487 = vunpack.c.h.b16 %v1181
    %v1488 = vunpack.c.l.b16 %v1182
    %v1489 = vunpack.c.h.b16 %v1182
    %v1490 = vunpack.c.l.b16 %v1183
    %v1491 = vunpack.c.h.b16 %v1183
    %v1492 = vunpack.c.l.b16 %v1184
    %v1493 = vunpack.c.h.b16 %v1184
    %v1494 = vunpack.c.l.b16 %v1185
    %v1495 = vunpack.c.h.b16 %v1185
    %v1496 = vunpack.c.l.b16 %v1186
    %v1497 = vunpack.c.h.b16 %v1186
    %v1498 = vunpack.c.l.b16 %v1187
    %v1499 = vunpack.c.h.b16 %v1187
    %v1500 = vunpack.c.l.b16 %v1188
    %v1501 = vunpack.c.h.b16 %v1188
    %v1502 = vunpack.c.l.b16 %v1189
    %v1503 = vunpack.c.h.b16 %v1189
    %v1504 = vunpack.c.l.b16 %v1190
    %v1505 = vunpack.c.h.b16 %v1190
    %v1506 = vunpack.c.l.b16 %v1191
    %v1507 = vunpack.c.h.b16 %v1191
    %v1508 = vunpack.c.l.b16 %v1192
    %v1509 = vunpack.c.h.b16 %v1192
    %v1510 = vunpack.c.l.b16 %v1193
    %v1511 = vunpack.c.h.b16 %v1193
    %v1512 = vunpack.c.l.b16 %v1194
    %v1513 = vunpack.c.h.b16 %v1194
    %v1514 = vunpack.c.l.b16 %v1195
    %v1515 = vunpack.c.h.b16 %v1195
    %v1516 = vunpack.c.l.b16 %v1196
    %v1517 = vunpack.c.h.b16 %v1196
    %v1518 = vunpack.c.l.b16 %v1197
    %v1519 = vunpack.c.h.b16 %v1197
    %v1520 = vunpack.c.l.b16 %v1198
    %v1521 = vunpack.c.h.b16 %v1198
    %v1522 = vunpack.c.l.b16 %v1199
    %v1523 = vunpack.c.h.b16 %v1199
    %v1524 = vunpack.c.l.b16 %v1200
    %v1525 = vunpack.c.h.b16 %v1200
    %v1526 = vunpack.c.l.b16 %v1201
    %v1527 = vunpack.c.h.b16 %v1201
    %v1528 = vunpack.c.l.b16 %v1202
    %v1529 = vunpack.c.h.b16 %v1202
    %v1530 = vunpack.c.l.b16 %v1203
    %v1531 = vunpack.c.h.b16 %v1203
    %v1532 = vunpack.c.l.b16 %v1204
    %v1533 = vunpack.c.h.b16 %v1204
    %v1534 = vunpack.c.l.b16 %v1205
    %v1535 = vunpack.c.h.b16 %v1205
    %v1536 = vunpack.c.l.b16 %v1206
    %v1537 = vunpack.c.h.b16 %v1206
    %v1538 = vunpack.c.l.b16 %v1207
    %v1539 = vunpack.c.h.b16 %v1207
    %v1540 = vunpack.c.l.b16 %v1208
    %v1541 = vunpack.c.h.b16 %v1208
    %v1542 = vunpack.c.l.b16 %v1209
    %v1543 = vunpack.c.h.b16 %v1209
    %v1544 = vunpack.c.l.b16 %v1210
    %v1545 = vunpack.c.h.b16 %v1210
    %v1546 = vunpack.c.l.b16 %v1211
    %v1547 = vunpack.c.h.b16 %v1211
    %v1548 = vunpack.c.l.b16 %v1212
    %v1549 = vunpack.c.h.b16 %v1212
    %v1550 = vunpack.c.l.b16 %v1213
    %v1551 = vunpack.c.h.b16 %v1213
    %v1552 = vunpack.c.l.b16 %v1214
    %v1553 = vunpack.c.h.b16 %v1214
    %v1554 = vunpack.c.l.b16 %v1215
    %v1555 = vunpack.c.h.b16 %v1215
    %v1556 = vunpack.c.l.b16 %v1216
    %v1557 = vunpack.c.h.b16 %v1216
    %v1558 = vunpack.c.l.b16 %v1217
    %v1559 = vunpack.c.h.b16 %v1217
    %v1560 = vunpack.c.l.b16 %v1218
    %v1561 = vunpack.c.h.b16 %v1218
    %v1562 = vunpack.c.l.b16 %v1219
    %v1563 = vunpack.c.h.b16 %v1219
    %v1564 = vunpack.c.l.b16 %v1220
    %v1565 = vunpack.c.h.b16 %v1220
    %v1566 = vunpack.c.l.b16 %v1221
    %v1567 = vunpack.c.h.b16 %v1221
    %v1568 = vunpack.c.l.b16 %v1222
    %v1569 = vunpack.c.h.b16 %v1222
    %v1570 = vunpack.c.l.b16 %v1223
    %v1571 = vunpack.c.h.b16 %v1223
    %v1572 = vunpack.c.l.b16 %v1224
    %v1573 = vunpack.c.h.b16 %v1224
    %v1574 = vunpack.c.l.b16 %v1225
    %v1575 = vunpack.c.h.b16 %v1225
    %v1576 = vunpack.c.l.b16 %v1226
    %v1577 = vunpack.c.h.b16 %v1226
    %v1578 = vunpack.c.l.b16 %v1227
    %v1579 = vunpack.c.h.b16 %v1227
    %v1580 = vunpack.c.l.b16 %v1228
    %v1581 = vunpack.c.h.b16 %v1228
    %v1582 = vunpack.c.l.b16 %v1229
    %v1583 = vunpack.c.h.b16 %v1229
    %v1584 = vunpack.c.l.b16 %v1230
    %v1585 = vunpack.c.h.b16 %v1230
    %v1586 = vunpack.c.l.b16 %v1231
    %v1587 = vunpack.c.h.b16 %v1231
    %v1588 = vunpack.c.l.b16 %v1232
    %v1589 = vunpack.c.h.b16 %v1232
    %v1590 = vunpack.c.l.b16 %v1233
    %v1591 = vunpack.c.h.b16 %v1233
    %v1592 = vunpack.c.l.b16 %v1234
    %v1593 = vunpack.c.h.b16 %v1234
    %v1594 = vunpack.c.l.b16 %v1235
    %v1595 = vunpack.c.h.b16 %v1235
    %v1596 = vunpack.c.l.b16 %v1236
    %v1597 = vunpack.c.h.b16 %v1236
    %v1598 = vunpack.c.l.b16 %v1237
    %v1599 = vunpack.c.h.b16 %v1237
    %v1600 = vunpack.c.l.b16 %v1238
    %v1601 = vunpack.c.h.b16 %v1238
    %v1602 = vunpack.c.l.b16 %v1239
    %v1603 = vunpack.c.h.b16 %v1239
    %v1604 = vunpack.c.l.b16 %v1240
    %v1605 = vunpack.c.h.b16 %v1240
    %v1606 = vunpack.c.l.b16 %v1241
    %v1607 = vunpack.c.h.b16 %v1241
    %v1608 = vunpack.c.l.b16 %v1242
    %v1609 = vunpack.c.h.b16 %v1242
    %v1610 = vunpack.c.l.b16 %v1243
    %v1611 = vunpack.c.h.b16 %v1243
    %v1612 = vunpack.c.l.b16 %v1244
    %v1613 = vunpack.c.h.b16 %v1244
    %v1614 = vunpack.c.l.b16 %v1245
    %v1615 = vunpack.c.h.b16 %v1245
    %v1616 = vunpack.c.l.b16 %v1246
    %v1617 = vunpack.c.h.b16 %v1246
    %v1618 = vunpack.c.l.b16 %v1247
    %v1619 = vunpack.c.h.b16 %v1247
    %v1620 = vunpack.c.l.b16 %v1248
    %v1621 = vunpack.c.h.b16 %v1248
    %v1622 = vunpack.c.l.b16 %v1249
    %v1623 = vunpack.c.h.b16 %v1249
    %v1624 = vunpack.c.l.b16 %v1250
    %v1625 = vunpack.c.h.b16 %v1250
    %v1626 = vunpack.c.l.b16 %v1251
    %v1627 = vunpack.c.h.b16 %v1251
    %v1628 = vunpack.c.l.b16 %v1252
    %v1629 = vunpack.c.h.b16 %v1252
    %v1630 = vunpack.c.l.b16 %v1253
    %v1631 = vunpack.c.h.b16 %v1253
    %v1632 = vunpack.c.l.b16 %v1254
    %v1633 = vunpack.c.h.b16 %v1254
    %v1634 = vunpack.c.l.b16 %v1255
    %v1635 = vunpack.c.h.b16 %v1255
    %v1636 = vunpack.c.l.b16 %v1256
    %v1637 = vunpack.c.h.b16 %v1256
    %v1638 = vunpack.c.l.b16 %v1257
    %v1639 = vunpack.c.h.b16 %v1257
    %v1640 = vunpack.c.l.b16 %v1258
    %v1641 = vunpack.c.h.b16 %v1258
    %v1642 = vunpack.c.l.b16 %v1259
    %v1643 = vunpack.c.h.b16 %v1259
    %v1644 = vunpack.c.l.b16 %v1260
    %v1645 = vunpack.c.h.b16 %v1260
    %v1646 = vunpack.c.l.b16 %v1261
    %v1647 = vunpack.c.h.b16 %v1261
    %v1648 = vunpack.c.l.b16 %v1262
    %v1649 = vunpack.c.h.b16 %v1262
    %v1650 = vunpack.c.l.b16 %v1263
    %v1651 = vunpack.c.h.b16 %v1263
    %v1652 = vunpack.c.l.b16 %v1264
    %v1653 = vunpack.c.h.b16 %v1264
    %v1654 = vunpack.c.l.b16 %v1265
    %v1655 = vunpack.c.h.b16 %v1265
    %v1656 = vunpack.c.l.b16 %v1266
    %v1657 = vunpack.c.h.b16 %v1266
    %v1658 = vunpack.c.l.b16 %v1267
    %v1659 = vunpack.c.h.b16 %v1267
    %v1660 = vunpack.c.l.b16 %v1268
    %v1661 = vunpack.c.h.b16 %v1268
    %v1662 = vunpack.c.l.b16 %v1269
    %v1663 = vunpack.c.h.b16 %v1269
    %v1664 = vunpack.c.l.b16 %v1270
    %v1665 = vunpack.c.h.b16 %v1270
    %v1666 = vunpack.c.l.b16 %v1271
    %v1667 = vunpack.c.h.b16 %v1271
    %v1668 = vunpack.c.l.b16 %v1272
    %v1669 = vunpack.c.h.b16 %v1272
    %v1670 = vunpack.c.l.b16 %v1273
    %v1671 = vunpack.c.h.b16 %v1273
    %v1672 = vunpack.c.l.b16 %v1274
    %v1673 = vunpack.c.h.b16 %v1274
    %v1674 = vunpack.c.l.b16 %v1275
    %v1675 = vunpack.c.h.b16 %v1275
    %v1676 = vunpack.c.l.b16 %v1276
    %v1677 = vunpack.c.h.b16 %v1276
    %v1678 = vunpack.c.l.b16 %v1277
    %v1679 = vunpack.c.h.b16 %v1277
    %v1680 = vunpack.c.l.b16 %v1278
    %v1681 = vunpack.c.h.b16 %v1278
    %v1682 = vunpack.c.l.b16 %v1279
    %v1683 = vunpack.c.h.b16 %v1279
    %v1684 = vunpack.c.l.b16 %v1280
    %v1685 = vunpack.c.h.b16 %v1280
    %v1686 = vunpack.c.l.b16 %v1281
    %v1687 = vunpack.c.h.b16 %v1281
    %v1688 = vunpack.c.l.b16 %v1282
    %v1689 = vunpack.c.h.b16 %v1282
    %v1690 = vunpack.c.l.b16 %v1283
    %v1691 = vunpack.c.h.b16 %v1283
    %v1692 = vunpack.c.l.b16 %v1284
    %v1693 = vunpack.c.h.b16 %v1284
    %v1694 = vunpack.c.l.b16 %v1285
    %v1695 = vunpack.c.h.b16 %v1285
    %v1696 = vunpack.c.l.b16 %v1286
    %v1697 = vunpack.c.h.b16 %v1286
    %v1698 = vunpack.c.l.b16 %v1287
    %v1699 = vunpack.c.h.b16 %v1287
    %v1700 = vunpack.c.l.b16 %v1288
    %v1701 = vunpack.c.h.b16 %v1288
    %v1702 = vpack.c.b16 %v1454, %v1446
    %v1703 = vpack.c.b16 %v1455, %v1447
    %v1704 = vpack.c.b16 %v1456, %v1448
    %v1705 = vpack.c.b16 %v1457, %v1449
    %v1706 = vpack.c.b16 %v1458, %v1450
    %v1707 = vpack.c.b16 %v1459, %v1451
    %v1708 = vpack.c.b16 %v1460, %v1452
    %v1709 = vpack.c.b16 %v1461, %v1453
    %v1710 = vpack.c.b16 %v1470, %v1462
    %v1711 = vpack.c.b16 %v1471, %v1463
    %v1712 = vpack.c.b16 %v1472, %v1464
    %v1713 = vpack.c.b16 %v1473, %v1465
    %v1714 = vpack.c.b16 %v1474, %v1466
    %v1715 = vpack.c.b16 %v1475, %v1467
    %v1716 = vpack.c.b16 %v1476, %v1468
    %v1717 = vpack.c.b16 %v1477, %v1469
    %v1718 = vpack.c.b16 %v1486, %v1478
    %v1719 = vpack.c.b16 %v1487, %v1479
    %v1720 = vpack.c.b16 %v1488, %v1480
    %v1721 = vpack.c.b16 %v1489, %v1481
    %v1722 = vpack.c.b16 %v1490, %v1482
    %v1723 = vpack.c.b16 %v1491, %v1483
    %v1724 = vpack.c.b16 %v1492, %v1484
    %v1725 = vpack.c.b16 %v1493, %v1485
    %v1726 = vpack.c.b16 %v1502, %v1494
    %v1727 = vpack.c.b16 %v1503, %v1495
    %v1728 = vpack.c.b16 %v1504, %v1496
    %v1729 = vpack.c.b16 %v1505, %v1497
    %v1730 = vpack.c.b16 %v1506, %v1498
    %v1731 = vpack.c.b16 %v1507, %v1499
    %v1732 = vpack.c.b16 %v1508, %v1500
    %v1733 = vpack.c.b16 %v1509, %v1501
    %v1734 = vpack.c.b16 %v1518, %v1510
    %v1735 = vpack.c.b16 %v1519, %v1511
    %v1736 = vpack.c.b16 %v1520, %v1512
    %v1737 = vpack.c.b16 %v1521, %v1513
    %v1738 = vpack.c.b16 %v1522, %v1514
    %v1739 = vpack.c.b16 %v1523, %v1515
    %v1740 = vpack.c.b16 %v1524, %v1516
    %v1741 = vpack.c.b16 %v1525, %v1517
    %v1742 = vpack.c.b16 %v1534, %v1526
    %v1743 = vpack.c.b16 %v1535, %v1527
    %v1744 = vpack.c.b16 %v1536, %v1528
    %v1745 = vpack.c.b16 %v1537, %v1529
    %v1746 = vpack.c.b16 %v1538, %v1530
    %v1747 = vpack.c.b16 %v1539, %v1531
    %v1748 = vpack.c.b16 %v1540, %v1532
    %v1749 = vpack.c.b16 %v1541, %v1533
    %v1750 = vpack.c.b16 %v1550, %v1542
    %v1751 = vpack.c.b16 %v1551, %v1543
    %v1752 = vpack.c.b16 %v1552, %v1544
    %v1753 = vpack.c.b16 %v1553, %v1545
    %v1754 = vpack.c.b16 %v1554, %v1546
    %v1755 = vpack.c.b16 %v1555, %v1547
    %v1756 = vpack.c.b16 %v1556, %v1548
    %v1757 = vpack.c.b16 %v1557, %v1549
    %v1758 = vpack.c.b16 %v1566, %v1558
    %v1759 = vpack.c.b16 %v1567, %v1559
    %v1760 = vpack.c.b16 %v1568, %v1560
    %v1761 = vpack.c.b16 %v1569, %v1561
    %v1762 = vpack.c.b16 %v1570, %v1562
    %v1763 = vpack.c.b16 %v1571, %v1563
    %v1764 = vpack.c.b16 %v1572, %v1564
    %v1765 = vpack.c.b16 %v1573, %v1565
    %v1766 = vpack.c.b16 %v1582, %v1574
    %v1767 = vpack.c.b16 %v1583, %v1575
    %v1768 = vpack.c.b16 %v1584, %v1576
    %v1769 = vpack.c.b16 %v1585, %v1577
    %v1770 = vpack.c.b16 %v1586, %v1578
    %v1771 = vpack.c.b16 %v1587, %v1579
    %v1772 = vpack.c.b16 %v1588, %v1580
    %v1773 = vpack.c.b16 %v1589, %v1581
    %v1774 = vpack.c.b16 %v1598, %v1590
    %v1775 = vpack.c.b16 %v1599, %v1591
    %v1776 = vpack.c.b16 %v1600, %v1592
    %v1777 = vpack.c.b16 %v1601, %v1593
    %v1778 = vpack.c.b16 %v1602, %v1594
    %v1779 = vpack.c.b16 %v1603, %v1595
    %v1780 = vpack.c.b16 %v1604, %v1596
    %v1781 = vpack.c.b16 %v1605, %v1597
    %v1782 = vpack.c.b16 %v1614, %v1606
    %v1783 = vpack.c.b16 %v1615, %v1607
    %v1784 = vpack.c.b16 %v1616, %v1608
    %v1785 = vpack.c.b16 %v1617, %v1609
    %v1786 = vpack.c.b16 %v1618, %v1610
    %v1787 = vpack.c.b16 %v1619, %v1611
    %v1788 = vpack.c.b16 %v1620, %v1612
    %v1789 = vpack.c.b16 %v1621, %v1613
    %v1790 = vpack.c.b16 %v1630, %v1622
    %v1791 = vpack.c.b16 %v1631, %v1623
    %v1792 = vpack.c.b16 %v1632, %v1624
    %v1793 = vpack.c.b16 %v1633, %v1625
    %v1794 = vpack.c.b16 %v1634, %v1626
    %v1795 = vpack.c.b16 %v1635, %v1627
    %v1796 = vpack.c.b16 %v1636, %v1628
    %v1797 = vpack.c.b16 %v1637, %v1629
    %v1798 = vpack.c.b16 %v1646, %v1638
    %v1799 = vpack.c.b16 %v1647, %v1639
    %v1800 = vpack.c.b16 %v1648, %v1640
    %v1801 = vpack.c.b16 %v1649, %v1641
    %v1802 = vpack.c.b16 %v1650, %v1642
    %v1803 = vpack.c.b16 %v1651, %v1643
    %v1804 = vpack.c.b16 %v1652, %v1644
    %v1805 = vpack.c.b16 %v1653, %v1645
    %v1806 = vpack.c.b16 %v1662, %v1654
    %v1807 = vpack.c.b16 %v1663, %v1655
    %v1808 = vpack.c.b16 %v1664, %v1656
    %v1809 = vpack.c.b16 %v1665, %v1657
    %v1810 = vpack.c.b16 %v1666, %v1658
    %v1811 = vpack.c.b16 %v1667, %v1659
    %v1812 = vpack.c.b16 %v1668, %v1660
    %v1813 = vpack.c.b16 %v1669, %v1661
    %v1814 = vpack.c.b16 %v1678, %v1670
    %v1815 = vpack.c.b16 %v1679, %v1671
    %v1816 = vpack.c.b16 %v1680, %v1672
    %v1817 = vpack.c.b16 %v1681, %v1673
    %v1818 = vpack.c.b16 %v1682, %v1674
    %v1819 = vpack.c.b16 %v1683, %v1675
    %v1820 = vpack.c.b16 %v1684, %v1676
    %v1821 = vpack.c.b16 %v1685, %v1677
    %v1822 = vpack.c.b16 %v1694, %v1686
    %v1823 = vpack.c.b16 %v1695, %v1687
    %v1824 = vpack.c.b16 %v1696, %v1688
    %v1825 = vpack.c.b16 %v1697, %v1689
    %v1826 = vpack.c.b16 %v1698, %v1690
    %v1827 = vpack.c.b16 %v1699, %v1691
    %v1828 = vpack.c.b16 %v1700, %v1692
    %v1829 = vpack.c.b16 %v1701, %v1693
    %1958 = vmatprep.subr.bf16.mxu0 %v1759
    %1959 = vmatpush1.bf16.msra.mxu0 %v1758
    %1960 = vmatprep.subr.bf16.mxu0 %v1751
    %1961 = vmatpush1.bf16.msra.mxu0 %v1750
    %1962 = vmatprep.subr.bf16.mxu0 %v1743
    %1963 = vmatpush1.bf16.msra.mxu0 %v1742
    %1964 = vmatprep.subr.bf16.mxu0 %v1735
    %1965 = vmatpush1.bf16.msra.mxu0 %v1734
    %1966 = vmatprep.subr.bf16.mxu0 %v1727
    %1967 = vmatpush1.bf16.msra.mxu0 %v1726
    %1968 = vmatprep.subr.bf16.mxu0 %v1719
    %1969 = vmatpush1.bf16.msra.mxu0 %v1718
    %1970 = vmatprep.subr.bf16.mxu0 %v1711
    %1971 = vmatpush1.bf16.msra.mxu0 %v1710
    %1972 = vmatprep.subr.bf16.mxu0 %v1703
    %1973 = vmatpush1.bf16.msra.mxu0 %v1702
    %1974 = vmatprep.subr.bf16.mxu0 %v1823
    %1975 = vmatpush2.bf16.msra.mxu0 %v1822
    %1976 = vmatprep.subr.bf16.mxu0 %v1815
    %1977 = vmatpush2.bf16.msra.mxu0 %v1814
    %1978 = vmatprep.subr.bf16.mxu0 %v1807
    %1979 = vmatpush2.bf16.msra.mxu0 %v1806
    %1980 = vmatprep.subr.bf16.mxu0 %v1799
    %1981 = vmatpush2.bf16.msra.mxu0 %v1798
    %1982 = vmatprep.subr.bf16.mxu0 %v1791
    %1983 = vmatpush2.bf16.msra.mxu0 %v1790
    %1984 = vmatprep.subr.bf16.mxu0 %v1783
    %1985 = vmatpush2.bf16.msra.mxu0 %v1782
    %1986 = vmatprep.subr.bf16.mxu0 %v1775
    %1987 = vmatpush2.bf16.msra.mxu0 %v1774
    %1988 = vmatprep.subr.bf16.mxu0 %v1767
    %1989 = vmatpush2.bf16.msra.mxu0 %v1766
    %1990 = vmatprep.mubr.bf16.mxu0 %v1317
    %1991 = vmatmul.mubr.bf16.gmra.mxu0 %v1316
    %v1992 = vpop.f32.mrf.mxu0
    %v1993 = vadd.f32 0.0, %v1992
    %v1994 = vpop.f32.mrf.mxu0
    %v1995 = vadd.f32 0.0, %v1994
    %v1996 = vpop.f32.mrf.mxu0
    %v1997 = vadd.f32 0.0, %v1996
    %v1998 = vpop.f32.mrf.mxu0
    %v1999 = vadd.f32 0.0, %v1998
    %2000 = vdwg.mxu0
    %2001 = vmatprep.subr.bf16.mxu0 %v1761
    %2002 = vmatpush1.bf16.msra.mxu0 %v1760
    %2003 = vmatprep.subr.bf16.mxu0 %v1753
    %2004 = vmatpush1.bf16.msra.mxu0 %v1752
    %2005 = vmatprep.subr.bf16.mxu0 %v1745
    %2006 = vmatpush1.bf16.msra.mxu0 %v1744
    %2007 = vmatprep.subr.bf16.mxu0 %v1737
    %2008 = vmatpush1.bf16.msra.mxu0 %v1736
    %2009 = vmatprep.subr.bf16.mxu0 %v1729
    %2010 = vmatpush1.bf16.msra.mxu0 %v1728
    %2011 = vmatprep.subr.bf16.mxu0 %v1721
    %2012 = vmatpush1.bf16.msra.mxu0 %v1720
    %2013 = vmatprep.subr.bf16.mxu0 %v1713
    %2014 = vmatpush1.bf16.msra.mxu0 %v1712
    %2015 = vmatprep.subr.bf16.mxu0 %v1705
    %2016 = vmatpush1.bf16.msra.mxu0 %v1704
    %2017 = vmatprep.subr.bf16.mxu0 %v1825
    %2018 = vmatpush2.bf16.msra.mxu0 %v1824
    %2019 = vmatprep.subr.bf16.mxu0 %v1817
    %2020 = vmatpush2.bf16.msra.mxu0 %v1816
    %2021 = vmatprep.subr.bf16.mxu0 %v1809
    %2022 = vmatpush2.bf16.msra.mxu0 %v1808
    %2023 = vmatprep.subr.bf16.mxu0 %v1801
    %2024 = vmatpush2.bf16.msra.mxu0 %v1800
    %2025 = vmatprep.subr.bf16.mxu0 %v1793
    %2026 = vmatpush2.bf16.msra.mxu0 %v1792
    %2027 = vmatprep.subr.bf16.mxu0 %v1785
    %2028 = vmatpush2.bf16.msra.mxu0 %v1784
    %2029 = vmatprep.subr.bf16.mxu0 %v1777
    %2030 = vmatpush2.bf16.msra.mxu0 %v1776
    %2031 = vmatprep.subr.bf16.mxu0 %v1769
    %2032 = vmatpush2.bf16.msra.mxu0 %v1768
    %2033 = vmatprep.mubr.bf16.mxu0 %v1317
    %2034 = vmatmul.mubr.bf16.gmra.mxu0 %v1316
    %v2035 = vpop.f32.mrf.mxu0
    %v2036 = vadd.f32 0.0, %v2035
    %v2037 = vpop.f32.mrf.mxu0
    %v2038 = vadd.f32 0.0, %v2037
    %v2039 = vpop.f32.mrf.mxu0
    %v2040 = vadd.f32 0.0, %v2039
    %v2041 = vpop.f32.mrf.mxu0
    %v2042 = vadd.f32 0.0, %v2041
    %2043 = vdwg.mxu0
    %2044 = vmatprep.subr.bf16.mxu0 %v1763
    %2045 = vmatpush1.bf16.msra.mxu0 %v1762
    %2046 = vmatprep.subr.bf16.mxu0 %v1755
    %2047 = vmatpush1.bf16.msra.mxu0 %v1754
    %2048 = vmatprep.subr.bf16.mxu0 %v1747
    %2049 = vmatpush1.bf16.msra.mxu0 %v1746
    %2050 = vmatprep.subr.bf16.mxu0 %v1739
    %2051 = vmatpush1.bf16.msra.mxu0 %v1738
    %2052 = vmatprep.subr.bf16.mxu0 %v1731
    %2053 = vmatpush1.bf16.msra.mxu0 %v1730
    %2054 = vmatprep.subr.bf16.mxu0 %v1723
    %2055 = vmatpush1.bf16.msra.mxu0 %v1722
    %2056 = vmatprep.subr.bf16.mxu0 %v1715
    %2057 = vmatpush1.bf16.msra.mxu0 %v1714
    %2058 = vmatprep.subr.bf16.mxu0 %v1707
    %2059 = vmatpush1.bf16.msra.mxu0 %v1706
    %2060 = vmatprep.subr.bf16.mxu0 %v1827
    %2061 = vmatpush2.bf16.msra.mxu0 %v1826
    %2062 = vmatprep.subr.bf16.mxu0 %v1819
    %2063 = vmatpush2.bf16.msra.mxu0 %v1818
    %2064 = vmatprep.subr.bf16.mxu0 %v1811
    %2065 = vmatpush2.bf16.msra.mxu0 %v1810
    %2066 = vmatprep.subr.bf16.mxu0 %v1803
    %2067 = vmatpush2.bf16.msra.mxu0 %v1802
    %2068 = vmatprep.subr.bf16.mxu0 %v1795
    %2069 = vmatpush2.bf16.msra.mxu0 %v1794
    %2070 = vmatprep.subr.bf16.mxu0 %v1787
    %2071 = vmatpush2.bf16.msra.mxu0 %v1786
    %2072 = vmatprep.subr.bf16.mxu0 %v1779
    %2073 = vmatpush2.bf16.msra.mxu0 %v1778
    %2074 = vmatprep.subr.bf16.mxu0 %v1771
    %2075 = vmatpush2.bf16.msra.mxu0 %v1770
    %2076 = vmatprep.mubr.bf16.mxu0 %v1317
    %2077 = vmatmul.mubr.bf16.gmra.mxu0 %v1316
    %v2078 = vpop.f32.mrf.mxu0
    %v2079 = vadd.f32 0.0, %v2078
    %v2080 = vpop.f32.mrf.mxu0
    %v2081 = vadd.f32 0.0, %v2080
    %v2082 = vpop.f32.mrf.mxu0
    %v2083 = vadd.f32 0.0, %v2082
    %v2084 = vpop.f32.mrf.mxu0
    %v2085 = vadd.f32 0.0, %v2084
    %2086 = vdwg.mxu0
    %2087 = vmatprep.subr.bf16.mxu0 %v1765
    %2088 = vmatpush1.bf16.msra.mxu0 %v1764
    %2089 = vmatprep.subr.bf16.mxu0 %v1757
    %2090 = vmatpush1.bf16.msra.mxu0 %v1756
    %2091 = vmatprep.subr.bf16.mxu0 %v1749
    %2092 = vmatpush1.bf16.msra.mxu0 %v1748
    %2093 = vmatprep.subr.bf16.mxu0 %v1741
    %2094 = vmatpush1.bf16.msra.mxu0 %v1740
    %2095 = vmatprep.subr.bf16.mxu0 %v1733
    %2096 = vmatpush1.bf16.msra.mxu0 %v1732
    %2097 = vmatprep.subr.bf16.mxu0 %v1725
    %2098 = vmatpush1.bf16.msra.mxu0 %v1724
    %2099 = vmatprep.subr.bf16.mxu0 %v1717
    %2100 = vmatpush1.bf16.msra.mxu0 %v1716
    %2101 = vmatprep.subr.bf16.mxu0 %v1709
    %2102 = vmatpush1.bf16.msra.mxu0 %v1708
    %2103 = vmatprep.subr.bf16.mxu0 %v1829
    %2104 = vmatpush2.bf16.msra.mxu0 %v1828
    %2105 = vmatprep.subr.bf16.mxu0 %v1821
    %2106 = vmatpush2.bf16.msra.mxu0 %v1820
    %2107 = vmatprep.subr.bf16.mxu0 %v1813
    %2108 = vmatpush2.bf16.msra.mxu0 %v1812
    %2109 = vmatprep.subr.bf16.mxu0 %v1805
    %2110 = vmatpush2.bf16.msra.mxu0 %v1804
    %2111 = vmatprep.subr.bf16.mxu0 %v1797
    %2112 = vmatpush2.bf16.msra.mxu0 %v1796
    %2113 = vmatprep.subr.bf16.mxu0 %v1789
    %2114 = vmatpush2.bf16.msra.mxu0 %v1788
    %2115 = vmatprep.subr.bf16.mxu0 %v1781
    %2116 = vmatpush2.bf16.msra.mxu0 %v1780
    %2117 = vmatprep.subr.bf16.mxu0 %v1773
    %2118 = vmatpush2.bf16.msra.mxu0 %v1772
    %2119 = vmatprep.mubr.bf16.mxu0 %v1317
    %2120 = vmatmul.mubr.bf16.gmra.mxu0 %v1316
    %v2121 = vpop.f32.mrf.mxu0
    %v2122 = vadd.f32 0.0, %v2121
    %v2123 = vpop.f32.mrf.mxu0
    %v2124 = vadd.f32 0.0, %v2123
    %v2125 = vpop.f32.mrf.mxu0
    %v2126 = vadd.f32 0.0, %v2125
    %v2127 = vpop.f32.mrf.mxu0
    %v2128 = vadd.f32 0.0, %v2127
    %2129 = vdwg.mxu0
    %v2130 = vadd.f32 %v1300, %v1993
    %v2131 = vadd.f32 %v1301, %v1995
    %v2132 = vadd.f32 %v1302, %v2036
    %v2133 = vadd.f32 %v1303, %v2038
    %v2134 = vadd.f32 %v1304, %v2079
    %v2135 = vadd.f32 %v1305, %v2081
    %v2136 = vadd.f32 %v1306, %v2122
    %v2137 = vadd.f32 %v1307, %v2124
    %v2138 = vadd.f32 %v1308, %v1997
    %v2139 = vadd.f32 %v1309, %v1999
    %v2140 = vadd.f32 %v1310, %v2040
    %v2141 = vadd.f32 %v1311, %v2042
    %v2142 = vadd.f32 %v1312, %v2083
    %v2143 = vadd.f32 %v1313, %v2085
    %v2144 = vadd.f32 %v1314, %v2126
    %v2145 = vadd.f32 %v1315, %v2128
    %v2146 = vxor.u32 %v2130, 2147483648
    %v2147 = vxor.u32 %v2131, 2147483648
    %v2148 = vxor.u32 %v2132, 2147483648
    %v2149 = vxor.u32 %v2133, 2147483648
    %v2150 = vxor.u32 %v2138, 2147483648
    %v2151 = vxor.u32 %v2139, 2147483648
    %v2152 = vxor.u32 %v2140, 2147483648
    %v2153 = vxor.u32 %v2141, 2147483648
    %v2154 = vmul.f32 %v2146, 1.442695
    %v2155 = vpow.pop %v2154
    %v2156 = vmul.f32 %v2147, 1.442695
    %v2157 = vpow.pop %v2156
    %v2158 = vmul.f32 %v2148, 1.442695
    %v2159 = vpow.pop %v2158
    %v2160 = vmul.f32 %v2149, 1.442695
    %v2161 = vpow.pop %v2160
    %v2162 = vmul.f32 %v2150, 1.442695
    %v2163 = vpow.pop %v2162
    %v2164 = vmul.f32 %v2151, 1.442695
    %v2165 = vpow.pop %v2164
    %v2166 = vmul.f32 %v2152, 1.442695
    %v2167 = vpow.pop %v2166
    %v2168 = vmul.f32 %v2153, 1.442695
    %v2169 = vpow.pop %v2168
    %v2170 = vadd.f32 %v2155, 1.0
    %v2171 = vadd.f32 %v2157, 1.0
    %v2172 = vadd.f32 %v2159, 1.0
    %v2173 = vadd.f32 %v2161, 1.0
    %v2174 = vadd.f32 %v2163, 1.0
    %v2175 = vadd.f32 %v2165, 1.0
    %v2176 = vadd.f32 %v2167, 1.0
    %v2177 = vadd.f32 %v2169, 1.0
    %v2178 = vrcp.pop %v2170
    %v2179 = vmul.f32 1.0, %v2178
    %v2180 = vrcp.pop %v2171
    %v2181 = vmul.f32 1.0, %v2180
    %v2182 = vrcp.pop %v2172
    %v2183 = vmul.f32 1.0, %v2182
    %v2184 = vrcp.pop %v2173
    %v2185 = vmul.f32 1.0, %v2184
    %v2186 = vrcp.pop %v2174
    %v2187 = vmul.f32 1.0, %v2186
    %v2188 = vrcp.pop %v2175
    %v2189 = vmul.f32 1.0, %v2188
    %v2190 = vrcp.pop %v2176
    %v2191 = vmul.f32 1.0, %v2190
    %v2192 = vrcp.pop %v2177
    %v2193 = vmul.f32 1.0, %v2192
    %v2194 = vtanh.pop %v2134
    %v2195 = vtanh.pop %v2135
    %v2196 = vtanh.pop %v2142
    %v2197 = vtanh.pop %v2143
    %v2198 = vxor.u32 %v2136, 2147483648
    %v2199 = vxor.u32 %v2137, 2147483648
    %v2200 = vxor.u32 %v2144, 2147483648
    %v2201 = vxor.u32 %v2145, 2147483648
    %v2202 = vmul.f32 %v2198, 1.442695
    %v2203 = vpow.pop %v2202
    %v2204 = vmul.f32 %v2199, 1.442695
    %v2205 = vpow.pop %v2204
    %v2206 = vmul.f32 %v2200, 1.442695
    %v2207 = vpow.pop %v2206
    %v2208 = vmul.f32 %v2201, 1.442695
    %v2209 = vpow.pop %v2208
    %v2210 = vadd.f32 %v2203, 1.0
    %v2211 = vadd.f32 %v2205, 1.0
    %v2212 = vadd.f32 %v2207, 1.0
    %v2213 = vadd.f32 %v2209, 1.0
    %v2214 = vrcp.pop %v2210
    %v2215 = vmul.f32 1.0, %v2214
    %v2216 = vrcp.pop %v2211
    %v2217 = vmul.f32 1.0, %v2216
    %v2218 = vrcp.pop %v2212
    %v2219 = vmul.f32 1.0, %v2218
    %v2220 = vrcp.pop %v2213
    %v2221 = vmul.f32 1.0, %v2220
    %v2222 = vmul.f32 %v2183, %v1293
    %v2223 = vmul.f32 %v2185, %v1294
    %v2224 = vmul.f32 %v2191, %v1295
    %v2225 = vmul.f32 %v2193, %v1296
    %v2226 = vmul.f32 %v2179, %v2194
    %v2227 = vmul.f32 %v2181, %v2195
    %v2228 = vmul.f32 %v2187, %v2196
    %v2229 = vmul.f32 %v2189, %v2197
    %v2230 = vadd.f32 %v2222, %v2226
    %v2231 = vadd.f32 %v2223, %v2227
    %v2232 = vadd.f32 %v2224, %v2228
    %v2233 = vadd.f32 %v2225, %v2229
    %v2234 = vtanh.pop %v2230
    %v2235 = vtanh.pop %v2231
    %v2236 = vtanh.pop %v2232
    %v2237 = vtanh.pop %v2233
    %v2238 = vmul.f32 %v2215, %v2234
    %v2239 = vmul.f32 %v2217, %v2235
    %v2240 = vmul.f32 %v2219, %v2236
    %v2241 = vmul.f32 %v2221, %v2237
    %s2242 = smul.u32 2, 8
    %s2243 = smul.addr %s2242, 8
    %s2244 = scalar_lea.vmem [#allocation2], %s2243
    %v2245 = vld [vmem:[%s2244] sm:$0xff]
    %v2246 = vld [vmem:[%s2244 + $0x8] sm:$0xff]
    %v2247 = vld [vmem:[%s2244 + $0x10] sm:$0xff]
    %v2248 = vld [vmem:[%s2244 + $0x18] sm:$0xff]
    %v2249 = vld [vmem:[%s2244 + $0x20] sm:$0xff]
    %v2250 = vld [vmem:[%s2244 + $0x28] sm:$0xff]
    %v2251 = vld [vmem:[%s2244 + $0x30] sm:$0xff]
    %v2252 = vld [vmem:[%s2244 + $0x38] sm:$0xff]
    %v2253 = vld [vmem:[%s2244 + $0x40] sm:$0xff]
    %v2254 = vld [vmem:[%s2244 + $0x48] sm:$0xff]
    %v2255 = vld [vmem:[%s2244 + $0x50] sm:$0xff]
    %v2256 = vld [vmem:[%s2244 + $0x58] sm:$0xff]
    %v2257 = vld [vmem:[%s2244 + $0x60] sm:$0xff]
    %v2258 = vld [vmem:[%s2244 + $0x68] sm:$0xff]
    %v2259 = vld [vmem:[%s2244 + $0x70] sm:$0xff]
    %v2260 = vld [vmem:[%s2244 + $0x78] sm:$0xff]
    %v2261 = vpack.c.bf16 %v2240, %v2238
    %v2262 = vpack.c.bf16 %v2241, %v2239
    %2263 = vmatprep.subr.bf16.mxu0 %v1759
    %2264 = vmatpush1.bf16.msra.mxu0 %v1758
    %2265 = vmatprep.subr.bf16.mxu0 %v1751
    %2266 = vmatpush1.bf16.msra.mxu0 %v1750
    %2267 = vmatprep.subr.bf16.mxu0 %v1743
    %2268 = vmatpush1.bf16.msra.mxu0 %v1742
    %2269 = vmatprep.subr.bf16.mxu0 %v1735
    %2270 = vmatpush1.bf16.msra.mxu0 %v1734
    %2271 = vmatprep.subr.bf16.mxu0 %v1727
    %2272 = vmatpush1.bf16.msra.mxu0 %v1726
    %2273 = vmatprep.subr.bf16.mxu0 %v1719
    %2274 = vmatpush1.bf16.msra.mxu0 %v1718
    %2275 = vmatprep.subr.bf16.mxu0 %v1711
    %2276 = vmatpush1.bf16.msra.mxu0 %v1710
    %2277 = vmatprep.subr.bf16.mxu0 %v1703
    %2278 = vmatpush1.bf16.msra.mxu0 %v1702
    %2279 = vmatprep.subr.bf16.mxu0 %v1823
    %2280 = vmatpush2.bf16.msra.mxu0 %v1822
    %2281 = vmatprep.subr.bf16.mxu0 %v1815
    %2282 = vmatpush2.bf16.msra.mxu0 %v1814
    %2283 = vmatprep.subr.bf16.mxu0 %v1807
    %2284 = vmatpush2.bf16.msra.mxu0 %v1806
    %2285 = vmatprep.subr.bf16.mxu0 %v1799
    %2286 = vmatpush2.bf16.msra.mxu0 %v1798
    %2287 = vmatprep.subr.bf16.mxu0 %v1791
    %2288 = vmatpush2.bf16.msra.mxu0 %v1790
    %2289 = vmatprep.subr.bf16.mxu0 %v1783
    %2290 = vmatpush2.bf16.msra.mxu0 %v1782
    %2291 = vmatprep.subr.bf16.mxu0 %v1775
    %2292 = vmatpush2.bf16.msra.mxu0 %v1774
    %2293 = vmatprep.subr.bf16.mxu0 %v1767
    %2294 = vmatpush2.bf16.msra.mxu0 %v1766
    %2295 = vmatprep.mubr.bf16.mxu0 %v2262
    %2296 = vmatmul.mubr.bf16.gmra.mxu0 %v2261
    %v2297 = vpop.f32.mrf.mxu0
    %v2298 = vadd.f32 0.0, %v2297
    %v2299 = vpop.f32.mrf.mxu0
    %v2300 = vadd.f32 0.0, %v2299
    %v2301 = vpop.f32.mrf.mxu0
    %v2302 = vadd.f32 0.0, %v2301
    %v2303 = vpop.f32.mrf.mxu0
    %v2304 = vadd.f32 0.0, %v2303
    %2305 = vdwg.mxu0
    %2306 = vmatprep.subr.bf16.mxu0 %v1761
    %2307 = vmatpush1.bf16.msra.mxu0 %v1760
    %2308 = vmatprep.subr.bf16.mxu0 %v1753
    %2309 = vmatpush1.bf16.msra.mxu0 %v1752
    %2310 = vmatprep.subr.bf16.mxu0 %v1745
    %2311 = vmatpush1.bf16.msra.mxu0 %v1744
    %2312 = vmatprep.subr.bf16.mxu0 %v1737
    %2313 = vmatpush1.bf16.msra.mxu0 %v1736
    %2314 = vmatprep.subr.bf16.mxu0 %v1729
    %2315 = vmatpush1.bf16.msra.mxu0 %v1728
    %2316 = vmatprep.subr.bf16.mxu0 %v1721
    %2317 = vmatpush1.bf16.msra.mxu0 %v1720
    %2318 = vmatprep.subr.bf16.mxu0 %v1713
    %2319 = vmatpush1.bf16.msra.mxu0 %v1712
    %2320 = vmatprep.subr.bf16.mxu0 %v1705
    %2321 = vmatpush1.bf16.msra.mxu0 %v1704
    %2322 = vmatprep.subr.bf16.mxu0 %v1825
    %2323 = vmatpush2.bf16.msra.mxu0 %v1824
    %2324 = vmatprep.subr.bf16.mxu0 %v1817
    %2325 = vmatpush2.bf16.msra.mxu0 %v1816
    %2326 = vmatprep.subr.bf16.mxu0 %v1809
    %2327 = vmatpush2.bf16.msra.mxu0 %v1808
    %2328 = vmatprep.subr.bf16.mxu0 %v1801
    %2329 = vmatpush2.bf16.msra.mxu0 %v1800
    %2330 = vmatprep.subr.bf16.mxu0 %v1793
    %2331 = vmatpush2.bf16.msra.mxu0 %v1792
    %2332 = vmatprep.subr.bf16.mxu0 %v1785
    %2333 = vmatpush2.bf16.msra.mxu0 %v1784
    %2334 = vmatprep.subr.bf16.mxu0 %v1777
    %2335 = vmatpush2.bf16.msra.mxu0 %v1776
    %2336 = vmatprep.subr.bf16.mxu0 %v1769
    %2337 = vmatpush2.bf16.msra.mxu0 %v1768
    %2338 = vmatprep.mubr.bf16.mxu0 %v2262
    %2339 = vmatmul.mubr.bf16.gmra.mxu0 %v2261
    %v2340 = vpop.f32.mrf.mxu0
    %v2341 = vadd.f32 0.0, %v2340
    %v2342 = vpop.f32.mrf.mxu0
    %v2343 = vadd.f32 0.0, %v2342
    %v2344 = vpop.f32.mrf.mxu0
    %v2345 = vadd.f32 0.0, %v2344
    %v2346 = vpop.f32.mrf.mxu0
    %v2347 = vadd.f32 0.0, %v2346
    %2348 = vdwg.mxu0
    %2349 = vmatprep.subr.bf16.mxu0 %v1763
    %2350 = vmatpush1.bf16.msra.mxu0 %v1762
    %2351 = vmatprep.subr.bf16.mxu0 %v1755
    %2352 = vmatpush1.bf16.msra.mxu0 %v1754
    %2353 = vmatprep.subr.bf16.mxu0 %v1747
    %2354 = vmatpush1.bf16.msra.mxu0 %v1746
    %2355 = vmatprep.subr.bf16.mxu0 %v1739
    %2356 = vmatpush1.bf16.msra.mxu0 %v1738
    %2357 = vmatprep.subr.bf16.mxu0 %v1731
    %2358 = vmatpush1.bf16.msra.mxu0 %v1730
    %2359 = vmatprep.subr.bf16.mxu0 %v1723
    %2360 = vmatpush1.bf16.msra.mxu0 %v1722
    %2361 = vmatprep.subr.bf16.mxu0 %v1715
    %2362 = vmatpush1.bf16.msra.mxu0 %v1714
    %2363 = vmatprep.subr.bf16.mxu0 %v1707
    %2364 = vmatpush1.bf16.msra.mxu0 %v1706
    %2365 = vmatprep.subr.bf16.mxu0 %v1827
    %2366 = vmatpush2.bf16.msra.mxu0 %v1826
    %2367 = vmatprep.subr.bf16.mxu0 %v1819
    %2368 = vmatpush2.bf16.msra.mxu0 %v1818
    %2369 = vmatprep.subr.bf16.mxu0 %v1811
    %2370 = vmatpush2.bf16.msra.mxu0 %v1810
    %2371 = vmatprep.subr.bf16.mxu0 %v1803
    %2372 = vmatpush2.bf16.msra.mxu0 %v1802
    %2373 = vmatprep.subr.bf16.mxu0 %v1795
    %2374 = vmatpush2.bf16.msra.mxu0 %v1794
    %2375 = vmatprep.subr.bf16.mxu0 %v1787
    %2376 = vmatpush2.bf16.msra.mxu0 %v1786
    %2377 = vmatprep.subr.bf16.mxu0 %v1779
    %2378 = vmatpush2.bf16.msra.mxu0 %v1778
    %2379 = vmatprep.subr.bf16.mxu0 %v1771
    %2380 = vmatpush2.bf16.msra.mxu0 %v1770
    %2381 = vmatprep.mubr.bf16.mxu0 %v2262
    %2382 = vmatmul.mubr.bf16.gmra.mxu0 %v2261
    %v2383 = vpop.f32.mrf.mxu0
    %v2384 = vadd.f32 0.0, %v2383
    %v2385 = vpop.f32.mrf.mxu0
    %v2386 = vadd.f32 0.0, %v2385
    %v2387 = vpop.f32.mrf.mxu0
    %v2388 = vadd.f32 0.0, %v2387
    %v2389 = vpop.f32.mrf.mxu0
    %v2390 = vadd.f32 0.0, %v2389
    %2391 = vdwg.mxu0
    %2392 = vmatprep.subr.bf16.mxu0 %v1765
    %2393 = vmatpush1.bf16.msra.mxu0 %v1764
    %2394 = vmatprep.subr.bf16.mxu0 %v1757
    %2395 = vmatpush1.bf16.msra.mxu0 %v1756
    %2396 = vmatprep.subr.bf16.mxu0 %v1749
    %2397 = vmatpush1.bf16.msra.mxu0 %v1748
    %2398 = vmatprep.subr.bf16.mxu0 %v1741
    %2399 = vmatpush1.bf16.msra.mxu0 %v1740
    %2400 = vmatprep.subr.bf16.mxu0 %v1733
    %2401 = vmatpush1.bf16.msra.mxu0 %v1732
    %2402 = vmatprep.subr.bf16.mxu0 %v1725
    %2403 = vmatpush1.bf16.msra.mxu0 %v1724
    %2404 = vmatprep.subr.bf16.mxu0 %v1717
    %2405 = vmatpush1.bf16.msra.mxu0 %v1716
    %2406 = vmatprep.subr.bf16.mxu0 %v1709
    %2407 = vmatpush1.bf16.msra.mxu0 %v1708
    %2408 = vmatprep.subr.bf16.mxu0 %v1829
    %2409 = vmatpush2.bf16.msra.mxu0 %v1828
    %2410 = vmatprep.subr.bf16.mxu0 %v1821
    %2411 = vmatpush2.bf16.msra.mxu0 %v1820
    %2412 = vmatprep.subr.bf16.mxu0 %v1813
    %2413 = vmatpush2.bf16.msra.mxu0 %v1812
    %2414 = vmatprep.subr.bf16.mxu0 %v1805
    %2415 = vmatpush2.bf16.msra.mxu0 %v1804
    %2416 = vmatprep.subr.bf16.mxu0 %v1797
    %2417 = vmatpush2.bf16.msra.mxu0 %v1796
    %2418 = vmatprep.subr.bf16.mxu0 %v1789
    %2419 = vmatpush2.bf16.msra.mxu0 %v1788
    %2420 = vmatprep.subr.bf16.mxu0 %v1781
    %2421 = vmatpush2.bf16.msra.mxu0 %v1780
    %2422 = vmatprep.subr.bf16.mxu0 %v1773
    %2423 = vmatpush2.bf16.msra.mxu0 %v1772
    %2424 = vmatprep.mubr.bf16.mxu0 %v2262
    %2425 = vmatmul.mubr.bf16.gmra.mxu0 %v2261
    %v2426 = vpop.f32.mrf.mxu0
    %v2427 = vadd.f32 0.0, %v2426
    %v2428 = vpop.f32.mrf.mxu0
    %v2429 = vadd.f32 0.0, %v2428
    %v2430 = vpop.f32.mrf.mxu0
    %v2431 = vadd.f32 0.0, %v2430
    %v2432 = vpop.f32.mrf.mxu0
    %v2433 = vadd.f32 0.0, %v2432
    %2434 = vdwg.mxu0
    %v2435 = vadd.f32 %v2245, %v2298
    %v2436 = vadd.f32 %v2246, %v2300
    %v2437 = vadd.f32 %v2247, %v2341
    %v2438 = vadd.f32 %v2248, %v2343
    %v2439 = vadd.f32 %v2249, %v2384
    %v2440 = vadd.f32 %v2250, %v2386
    %v2441 = vadd.f32 %v2251, %v2427
    %v2442 = vadd.f32 %v2252, %v2429
    %v2443 = vadd.f32 %v2253, %v2302
    %v2444 = vadd.f32 %v2254, %v2304
    %v2445 = vadd.f32 %v2255, %v2345
    %v2446 = vadd.f32 %v2256, %v2347
    %v2447 = vadd.f32 %v2257, %v2388
    %v2448 = vadd.f32 %v2258, %v2390
    %v2449 = vadd.f32 %v2259, %v2431
    %v2450 = vadd.f32 %v2260, %v2433
    %v2451 = vxor.u32 %v2435, 2147483648
    %v2452 = vxor.u32 %v2436, 2147483648
    %v2453 = vxor.u32 %v2437, 2147483648
    %v2454 = vxor.u32 %v2438, 2147483648
    %v2455 = vxor.u32 %v2443, 2147483648
    %v2456 = vxor.u32 %v2444, 2147483648
    %v2457 = vxor.u32 %v2445, 2147483648
    %v2458 = vxor.u32 %v2446, 2147483648
    %v2459 = vmul.f32 %v2451, 1.442695
    %v2460 = vpow.pop %v2459
    %v2461 = vmul.f32 %v2452, 1.442695
    %v2462 = vpow.pop %v2461
    %v2463 = vmul.f32 %v2453, 1.442695
    %v2464 = vpow.pop %v2463
    %v2465 = vmul.f32 %v2454, 1.442695
    %v2466 = vpow.pop %v2465
    %v2467 = vmul.f32 %v2455, 1.442695
    %v2468 = vpow.pop %v2467
    %v2469 = vmul.f32 %v2456, 1.442695
    %v2470 = vpow.pop %v2469
    %v2471 = vmul.f32 %v2457, 1.442695
    %v2472 = vpow.pop %v2471
    %v2473 = vmul.f32 %v2458, 1.442695
    %v2474 = vpow.pop %v2473
    %v2475 = vadd.f32 %v2460, 1.0
    %v2476 = vadd.f32 %v2462, 1.0
    %v2477 = vadd.f32 %v2464, 1.0
    %v2478 = vadd.f32 %v2466, 1.0
    %v2479 = vadd.f32 %v2468, 1.0
    %v2480 = vadd.f32 %v2470, 1.0
    %v2481 = vadd.f32 %v2472, 1.0
    %v2482 = vadd.f32 %v2474, 1.0
    %v2483 = vrcp.pop %v2475
    %v2484 = vmul.f32 1.0, %v2483
    %v2485 = vrcp.pop %v2476
    %v2486 = vmul.f32 1.0, %v2485
    %v2487 = vrcp.pop %v2477
    %v2488 = vmul.f32 1.0, %v2487
    %v2489 = vrcp.pop %v2478
    %v2490 = vmul.f32 1.0, %v2489
    %v2491 = vrcp.pop %v2479
    %v2492 = vmul.f32 1.0, %v2491
    %v2493 = vrcp.pop %v2480
    %v2494 = vmul.f32 1.0, %v2493
    %v2495 = vrcp.pop %v2481
    %v2496 = vmul.f32 1.0, %v2495
    %v2497 = vrcp.pop %v2482
    %v2498 = vmul.f32 1.0, %v2497
    %v2499 = vtanh.pop %v2439
    %v2500 = vtanh.pop %v2440
    %v2501 = vtanh.pop %v2447
    %v2502 = vtanh.pop %v2448
    %v2503 = vxor.u32 %v2441, 2147483648
    %v2504 = vxor.u32 %v2442, 2147483648
    %v2505 = vxor.u32 %v2449, 2147483648
    %v2506 = vxor.u32 %v2450, 2147483648
    %v2507 = vmul.f32 %v2503, 1.442695
    %v2508 = vpow.pop %v2507
    %v2509 = vmul.f32 %v2504, 1.442695
    %v2510 = vpow.pop %v2509
    %v2511 = vmul.f32 %v2505, 1.442695
    %v2512 = vpow.pop %v2511
    %v2513 = vmul.f32 %v2506, 1.442695
    %v2514 = vpow.pop %v2513
    %v2515 = vadd.f32 %v2508, 1.0
    %v2516 = vadd.f32 %v2510, 1.0
    %v2517 = vadd.f32 %v2512, 1.0
    %v2518 = vadd.f32 %v2514, 1.0
    %v2519 = vrcp.pop %v2515
    %v2520 = vmul.f32 1.0, %v2519
    %v2521 = vrcp.pop %v2516
    %v2522 = vmul.f32 1.0, %v2521
    %v2523 = vrcp.pop %v2517
    %v2524 = vmul.f32 1.0, %v2523
    %v2525 = vrcp.pop %v2518
    %v2526 = vmul.f32 1.0, %v2525
    %v2527 = vmul.f32 %v2488, %v2230
    %v2528 = vmul.f32 %v2490, %v2231
    %v2529 = vmul.f32 %v2496, %v2232
    %v2530 = vmul.f32 %v2498, %v2233
    %v2531 = vmul.f32 %v2484, %v2499
    %v2532 = vmul.f32 %v2486, %v2500
    %v2533 = vmul.f32 %v2492, %v2501
    %v2534 = vmul.f32 %v2494, %v2502
    %v2535 = vadd.f32 %v2527, %v2531
    %v2536 = vadd.f32 %v2528, %v2532
    %v2537 = vadd.f32 %v2529, %v2533
    %v2538 = vadd.f32 %v2530, %v2534
    %v2539 = vtanh.pop %v2535
    %v2540 = vtanh.pop %v2536
    %v2541 = vtanh.pop %v2537
    %v2542 = vtanh.pop %v2538
    %v2543 = vmul.f32 %v2520, %v2539
    %v2544 = vmul.f32 %v2522, %v2540
    %v2545 = vmul.f32 %v2524, %v2541
    %v2546 = vmul.f32 %v2526, %v2542
    %s2547 = smul.u32 4, 8
    %s2548 = smul.addr %s2547, 8
    %s2549 = scalar_lea.vmem [#allocation2], %s2548
    %v2550 = vld [vmem:[%s2549] sm:$0xff]
    %v2551 = vld [vmem:[%s2549 + $0x8] sm:$0xff]
    %v2552 = vld [vmem:[%s2549 + $0x10] sm:$0xff]
    %v2553 = vld [vmem:[%s2549 + $0x18] sm:$0xff]
    %v2554 = vld [vmem:[%s2549 + $0x20] sm:$0xff]
    %v2555 = vld [vmem:[%s2549 + $0x28] sm:$0xff]
    %v2556 = vld [vmem:[%s2549 + $0x30] sm:$0xff]
    %v2557 = vld [vmem:[%s2549 + $0x38] sm:$0xff]
    %v2558 = vld [vmem:[%s2549 + $0x40] sm:$0xff]
    %v2559 = vld [vmem:[%s2549 + $0x48] sm:$0xff]
    %v2560 = vld [vmem:[%s2549 + $0x50] sm:$0xff]
    %v2561 = vld [vmem:[%s2549 + $0x58] sm:$0xff]
    %v2562 = vld [vmem:[%s2549 + $0x60] sm:$0xff]
    %v2563 = vld [vmem:[%s2549 + $0x68] sm:$0xff]
    %v2564 = vld [vmem:[%s2549 + $0x70] sm:$0xff]
    %v2565 = vld [vmem:[%s2549 + $0x78] sm:$0xff]
    %v2566 = vpack.c.bf16 %v2545, %v2543
    %v2567 = vpack.c.bf16 %v2546, %v2544
    %2568 = vmatprep.subr.bf16.mxu0 %v1759
    %2569 = vmatpush1.bf16.msra.mxu0 %v1758
    %2570 = vmatprep.subr.bf16.mxu0 %v1751
    %2571 = vmatpush1.bf16.msra.mxu0 %v1750
    %2572 = vmatprep.subr.bf16.mxu0 %v1743
    %2573 = vmatpush1.bf16.msra.mxu0 %v1742
    %2574 = vmatprep.subr.bf16.mxu0 %v1735
    %2575 = vmatpush1.bf16.msra.mxu0 %v1734
    %2576 = vmatprep.subr.bf16.mxu0 %v1727
    %2577 = vmatpush1.bf16.msra.mxu0 %v1726
    %2578 = vmatprep.subr.bf16.mxu0 %v1719
    %2579 = vmatpush1.bf16.msra.mxu0 %v1718
    %2580 = vmatprep.subr.bf16.mxu0 %v1711
    %2581 = vmatpush1.bf16.msra.mxu0 %v1710
    %2582 = vmatprep.subr.bf16.mxu0 %v1703
    %2583 = vmatpush1.bf16.msra.mxu0 %v1702
    %2584 = vmatprep.subr.bf16.mxu0 %v1823
    %2585 = vmatpush2.bf16.msra.mxu0 %v1822
    %2586 = vmatprep.subr.bf16.mxu0 %v1815
    %2587 = vmatpush2.bf16.msra.mxu0 %v1814
    %2588 = vmatprep.subr.bf16.mxu0 %v1807
    %2589 = vmatpush2.bf16.msra.mxu0 %v1806
    %2590 = vmatprep.subr.bf16.mxu0 %v1799
    %2591 = vmatpush2.bf16.msra.mxu0 %v1798
    %2592 = vmatprep.subr.bf16.mxu0 %v1791
    %2593 = vmatpush2.bf16.msra.mxu0 %v1790
    %2594 = vmatprep.subr.bf16.mxu0 %v1783
    %2595 = vmatpush2.bf16.msra.mxu0 %v1782
    %2596 = vmatprep.subr.bf16.mxu0 %v1775
    %2597 = vmatpush2.bf16.msra.mxu0 %v1774
    %2598 = vmatprep.subr.bf16.mxu0 %v1767
    %2599 = vmatpush2.bf16.msra.mxu0 %v1766
    %2600 = vmatprep.mubr.bf16.mxu0 %v2567
    %2601 = vmatmul.mubr.bf16.gmra.mxu0 %v2566
    %v2602 = vpop.f32.mrf.mxu0
    %v2603 = vadd.f32 0.0, %v2602
    %v2604 = vpop.f32.mrf.mxu0
    %v2605 = vadd.f32 0.0, %v2604
    %v2606 = vpop.f32.mrf.mxu0
    %v2607 = vadd.f32 0.0, %v2606
    %v2608 = vpop.f32.mrf.mxu0
    %v2609 = vadd.f32 0.0, %v2608
    %2610 = vdwg.mxu0
    %2611 = vmatprep.subr.bf16.mxu0 %v1761
    %2612 = vmatpush1.bf16.msra.mxu0 %v1760
    %2613 = vmatprep.subr.bf16.mxu0 %v1753
    %2614 = vmatpush1.bf16.msra.mxu0 %v1752
    %2615 = vmatprep.subr.bf16.mxu0 %v1745
    %2616 = vmatpush1.bf16.msra.mxu0 %v1744
    %2617 = vmatprep.subr.bf16.mxu0 %v1737
    %2618 = vmatpush1.bf16.msra.mxu0 %v1736
    %2619 = vmatprep.subr.bf16.mxu0 %v1729
    %2620 = vmatpush1.bf16.msra.mxu0 %v1728
    %2621 = vmatprep.subr.bf16.mxu0 %v1721
    %2622 = vmatpush1.bf16.msra.mxu0 %v1720
    %2623 = vmatprep.subr.bf16.mxu0 %v1713
    %2624 = vmatpush1.bf16.msra.mxu0 %v1712
    %2625 = vmatprep.subr.bf16.mxu0 %v1705
    %2626 = vmatpush1.bf16.msra.mxu0 %v1704
    %2627 = vmatprep.subr.bf16.mxu0 %v1825
    %2628 = vmatpush2.bf16.msra.mxu0 %v1824
    %2629 = vmatprep.subr.bf16.mxu0 %v1817
    %2630 = vmatpush2.bf16.msra.mxu0 %v1816
    %2631 = vmatprep.subr.bf16.mxu0 %v1809
    %2632 = vmatpush2.bf16.msra.mxu0 %v1808
    %2633 = vmatprep.subr.bf16.mxu0 %v1801
    %2634 = vmatpush2.bf16.msra.mxu0 %v1800
    %2635 = vmatprep.subr.bf16.mxu0 %v1793
    %2636 = vmatpush2.bf16.msra.mxu0 %v1792
    %2637 = vmatprep.subr.bf16.mxu0 %v1785
    %2638 = vmatpush2.bf16.msra.mxu0 %v1784
    %2639 = vmatprep.subr.bf16.mxu0 %v1777
    %2640 = vmatpush2.bf16.msra.mxu0 %v1776
    %2641 = vmatprep.subr.bf16.mxu0 %v1769
    %2642 = vmatpush2.bf16.msra.mxu0 %v1768
    %2643 = vmatprep.mubr.bf16.mxu0 %v2567
    %2644 = vmatmul.mubr.bf16.gmra.mxu0 %v2566
    %v2645 = vpop.f32.mrf.mxu0
    %v2646 = vadd.f32 0.0, %v2645
    %v2647 = vpop.f32.mrf.mxu0
    %v2648 = vadd.f32 0.0, %v2647
    %v2649 = vpop.f32.mrf.mxu0
    %v2650 = vadd.f32 0.0, %v2649
    %v2651 = vpop.f32.mrf.mxu0
    %v2652 = vadd.f32 0.0, %v2651
    %2653 = vdwg.mxu0
    %2654 = vmatprep.subr.bf16.mxu0 %v1763
    %2655 = vmatpush1.bf16.msra.mxu0 %v1762
    %2656 = vmatprep.subr.bf16.mxu0 %v1755
    %2657 = vmatpush1.bf16.msra.mxu0 %v1754
    %2658 = vmatprep.subr.bf16.mxu0 %v1747
    %2659 = vmatpush1.bf16.msra.mxu0 %v1746
    %2660 = vmatprep.subr.bf16.mxu0 %v1739
    %2661 = vmatpush1.bf16.msra.mxu0 %v1738
    %2662 = vmatprep.subr.bf16.mxu0 %v1731
    %2663 = vmatpush1.bf16.msra.mxu0 %v1730
    %2664 = vmatprep.subr.bf16.mxu0 %v1723
    %2665 = vmatpush1.bf16.msra.mxu0 %v1722
    %2666 = vmatprep.subr.bf16.mxu0 %v1715
    %2667 = vmatpush1.bf16.msra.mxu0 %v1714
    %2668 = vmatprep.subr.bf16.mxu0 %v1707
    %2669 = vmatpush1.bf16.msra.mxu0 %v1706
    %2670 = vmatprep.subr.bf16.mxu0 %v1827
    %2671 = vmatpush2.bf16.msra.mxu0 %v1826
    %2672 = vmatprep.subr.bf16.mxu0 %v1819
    %2673 = vmatpush2.bf16.msra.mxu0 %v1818
    %2674 = vmatprep.subr.bf16.mxu0 %v1811
    %2675 = vmatpush2.bf16.msra.mxu0 %v1810
    %2676 = vmatprep.subr.bf16.mxu0 %v1803
    %2677 = vmatpush2.bf16.msra.mxu0 %v1802
    %2678 = vmatprep.subr.bf16.mxu0 %v1795
    %2679 = vmatpush2.bf16.msra.mxu0 %v1794
    %2680 = vmatprep.subr.bf16.mxu0 %v1787
    %2681 = vmatpush2.bf16.msra.mxu0 %v1786
    %2682 = vmatprep.subr.bf16.mxu0 %v1779
    %2683 = vmatpush2.bf16.msra.mxu0 %v1778
    %2684 = vmatprep.subr.bf16.mxu0 %v1771
    %2685 = vmatpush2.bf16.msra.mxu0 %v1770
    %2686 = vmatprep.mubr.bf16.mxu0 %v2567
    %2687 = vmatmul.mubr.bf16.gmra.mxu0 %v2566
    %v2688 = vpop.f32.mrf.mxu0
    %v2689 = vadd.f32 0.0, %v2688
    %v2690 = vpop.f32.mrf.mxu0
    %v2691 = vadd.f32 0.0, %v2690
    %v2692 = vpop.f32.mrf.mxu0
    %v2693 = vadd.f32 0.0, %v2692
    %v2694 = vpop.f32.mrf.mxu0
    %v2695 = vadd.f32 0.0, %v2694
    %2696 = vdwg.mxu0
    %2697 = vmatprep.subr.bf16.mxu0 %v1765
    %2698 = vmatpush1.bf16.msra.mxu0 %v1764
    %2699 = vmatprep.subr.bf16.mxu0 %v1757
    %2700 = vmatpush1.bf16.msra.mxu0 %v1756
    %2701 = vmatprep.subr.bf16.mxu0 %v1749
    %2702 = vmatpush1.bf16.msra.mxu0 %v1748
    %2703 = vmatprep.subr.bf16.mxu0 %v1741
    %2704 = vmatpush1.bf16.msra.mxu0 %v1740
    %2705 = vmatprep.subr.bf16.mxu0 %v1733
    %2706 = vmatpush1.bf16.msra.mxu0 %v1732
    %2707 = vmatprep.subr.bf16.mxu0 %v1725
    %2708 = vmatpush1.bf16.msra.mxu0 %v1724
    %2709 = vmatprep.subr.bf16.mxu0 %v1717
    %2710 = vmatpush1.bf16.msra.mxu0 %v1716
    %2711 = vmatprep.subr.bf16.mxu0 %v1709
    %2712 = vmatpush1.bf16.msra.mxu0 %v1708
    %2713 = vmatprep.subr.bf16.mxu0 %v1829
    %2714 = vmatpush2.bf16.msra.mxu0 %v1828
    %2715 = vmatprep.subr.bf16.mxu0 %v1821
    %2716 = vmatpush2.bf16.msra.mxu0 %v1820
    %2717 = vmatprep.subr.bf16.mxu0 %v1813
    %2718 = vmatpush2.bf16.msra.mxu0 %v1812
    %2719 = vmatprep.subr.bf16.mxu0 %v1805
    %2720 = vmatpush2.bf16.msra.mxu0 %v1804
    %2721 = vmatprep.subr.bf16.mxu0 %v1797
    %2722 = vmatpush2.bf16.msra.mxu0 %v1796
    %2723 = vmatprep.subr.bf16.mxu0 %v1789
    %2724 = vmatpush2.bf16.msra.mxu0 %v1788
    %2725 = vmatprep.subr.bf16.mxu0 %v1781
    %2726 = vmatpush2.bf16.msra.mxu0 %v1780
    %2727 = vmatprep.subr.bf16.mxu0 %v1773
    %2728 = vmatpush2.bf16.msra.mxu0 %v1772
    %2729 = vmatprep.mubr.bf16.mxu0 %v2567
    %2730 = vmatmul.mubr.bf16.gmra.mxu0 %v2566
    %v2731 = vpop.f32.mrf.mxu0
    %v2732 = vadd.f32 0.0, %v2731
    %v2733 = vpop.f32.mrf.mxu0
    %v2734 = vadd.f32 0.0, %v2733
    %v2735 = vpop.f32.mrf.mxu0
    %v2736 = vadd.f32 0.0, %v2735
    %v2737 = vpop.f32.mrf.mxu0
    %v2738 = vadd.f32 0.0, %v2737
    %2739 = vdwg.mxu0
    %v2740 = vadd.f32 %v2550, %v2603
    %v2741 = vadd.f32 %v2551, %v2605
    %v2742 = vadd.f32 %v2552, %v2646
    %v2743 = vadd.f32 %v2553, %v2648
    %v2744 = vadd.f32 %v2554, %v2689
    %v2745 = vadd.f32 %v2555, %v2691
    %v2746 = vadd.f32 %v2556, %v2732
    %v2747 = vadd.f32 %v2557, %v2734
    %v2748 = vadd.f32 %v2558, %v2607
    %v2749 = vadd.f32 %v2559, %v2609
    %v2750 = vadd.f32 %v2560, %v2650
    %v2751 = vadd.f32 %v2561, %v2652
    %v2752 = vadd.f32 %v2562, %v2693
    %v2753 = vadd.f32 %v2563, %v2695
    %v2754 = vadd.f32 %v2564, %v2736
    %v2755 = vadd.f32 %v2565, %v2738
    %v2756 = vxor.u32 %v2740, 2147483648
    %v2757 = vxor.u32 %v2741, 2147483648
    %v2758 = vxor.u32 %v2742, 2147483648
    %v2759 = vxor.u32 %v2743, 2147483648
    %v2760 = vxor.u32 %v2748, 2147483648
    %v2761 = vxor.u32 %v2749, 2147483648
    %v2762 = vxor.u32 %v2750, 2147483648
    %v2763 = vxor.u32 %v2751, 2147483648
    %v2764 = vmul.f32 %v2756, 1.442695
    %v2765 = vpow.pop %v2764
    %v2766 = vmul.f32 %v2757, 1.442695
    %v2767 = vpow.pop %v2766
    %v2768 = vmul.f32 %v2758, 1.442695
    %v2769 = vpow.pop %v2768
    %v2770 = vmul.f32 %v2759, 1.442695
    %v2771 = vpow.pop %v2770
    %v2772 = vmul.f32 %v2760, 1.442695
    %v2773 = vpow.pop %v2772
    %v2774 = vmul.f32 %v2761, 1.442695
    %v2775 = vpow.pop %v2774
    %v2776 = vmul.f32 %v2762, 1.442695
    %v2777 = vpow.pop %v2776
    %v2778 = vmul.f32 %v2763, 1.442695
    %v2779 = vpow.pop %v2778
    %v2780 = vadd.f32 %v2765, 1.0
    %v2781 = vadd.f32 %v2767, 1.0
    %v2782 = vadd.f32 %v2769, 1.0
    %v2783 = vadd.f32 %v2771, 1.0
    %v2784 = vadd.f32 %v2773, 1.0
    %v2785 = vadd.f32 %v2775, 1.0
    %v2786 = vadd.f32 %v2777, 1.0
    %v2787 = vadd.f32 %v2779, 1.0
    %v2788 = vrcp.pop %v2780
    %v2789 = vmul.f32 1.0, %v2788
    %v2790 = vrcp.pop %v2781
    %v2791 = vmul.f32 1.0, %v2790
    %v2792 = vrcp.pop %v2782
    %v2793 = vmul.f32 1.0, %v2792
    %v2794 = vrcp.pop %v2783
    %v2795 = vmul.f32 1.0, %v2794
    %v2796 = vrcp.pop %v2784
    %v2797 = vmul.f32 1.0, %v2796
    %v2798 = vrcp.pop %v2785
    %v2799 = vmul.f32 1.0, %v2798
    %v2800 = vrcp.pop %v2786
    %v2801 = vmul.f32 1.0, %v2800
    %v2802 = vrcp.pop %v2787
    %v2803 = vmul.f32 1.0, %v2802
    %v2804 = vtanh.pop %v2744
    %v2805 = vtanh.pop %v2745
    %v2806 = vtanh.pop %v2752
    %v2807 = vtanh.pop %v2753
    %v2808 = vxor.u32 %v2746, 2147483648
    %v2809 = vxor.u32 %v2747, 2147483648
    %v2810 = vxor.u32 %v2754, 2147483648
    %v2811 = vxor.u32 %v2755, 2147483648
    %v2812 = vmul.f32 %v2808, 1.442695
    %v2813 = vpow.pop %v2812
    %v2814 = vmul.f32 %v2809, 1.442695
    %v2815 = vpow.pop %v2814
    %v2816 = vmul.f32 %v2810, 1.442695
    %v2817 = vpow.pop %v2816
    %v2818 = vmul.f32 %v2811, 1.442695
    %v2819 = vpow.pop %v2818
    %v2820 = vadd.f32 %v2813, 1.0
    %v2821 = vadd.f32 %v2815, 1.0
    %v2822 = vadd.f32 %v2817, 1.0
    %v2823 = vadd.f32 %v2819, 1.0
    %v2824 = vrcp.pop %v2820
    %v2825 = vmul.f32 1.0, %v2824
    %v2826 = vrcp.pop %v2821
    %v2827 = vmul.f32 1.0, %v2826
    %v2828 = vrcp.pop %v2822
    %v2829 = vmul.f32 1.0, %v2828
    %v2830 = vrcp.pop %v2823
    %v2831 = vmul.f32 1.0, %v2830
    %v2832 = vmul.f32 %v2793, %v2535
    %v2833 = vmul.f32 %v2795, %v2536
    %v2834 = vmul.f32 %v2801, %v2537
    %v2835 = vmul.f32 %v2803, %v2538
    %v2836 = vmul.f32 %v2789, %v2804
    %v2837 = vmul.f32 %v2791, %v2805
    %v2838 = vmul.f32 %v2797, %v2806
    %v2839 = vmul.f32 %v2799, %v2807
    %v2840 = vadd.f32 %v2832, %v2836
    %v2841 = vadd.f32 %v2833, %v2837
    %v2842 = vadd.f32 %v2834, %v2838
    %v2843 = vadd.f32 %v2835, %v2839
    %v2844 = vtanh.pop %v2840
    %v2845 = vtanh.pop %v2841
    %v2846 = vtanh.pop %v2842
    %v2847 = vtanh.pop %v2843
    %v2848 = vmul.f32 %v2825, %v2844
    %v2849 = vmul.f32 %v2827, %v2845
    %v2850 = vmul.f32 %v2829, %v2846
    %v2851 = vmul.f32 %v2831, %v2847
    %s2852 = smul.u32 6, 8
    %s2853 = smul.addr %s2852, 8
    %s2854 = scalar_lea.vmem [#allocation2], %s2853
    %v2855 = vld [vmem:[%s2854] sm:$0xff]
    %v2856 = vld [vmem:[%s2854 + $0x8] sm:$0xff]
    %v2857 = vld [vmem:[%s2854 + $0x10] sm:$0xff]
    %v2858 = vld [vmem:[%s2854 + $0x18] sm:$0xff]
    %v2859 = vld [vmem:[%s2854 + $0x20] sm:$0xff]
    %v2860 = vld [vmem:[%s2854 + $0x28] sm:$0xff]
    %v2861 = vld [vmem:[%s2854 + $0x30] sm:$0xff]
    %v2862 = vld [vmem:[%s2854 + $0x38] sm:$0xff]
    %v2863 = vld [vmem:[%s2854 + $0x40] sm:$0xff]
    %v2864 = vld [vmem:[%s2854 + $0x48] sm:$0xff]
    %v2865 = vld [vmem:[%s2854 + $0x50] sm:$0xff]
    %v2866 = vld [vmem:[%s2854 + $0x58] sm:$0xff]
    %v2867 = vld [vmem:[%s2854 + $0x60] sm:$0xff]
    %v2868 = vld [vmem:[%s2854 + $0x68] sm:$0xff]
    %v2869 = vld [vmem:[%s2854 + $0x70] sm:$0xff]
    %v2870 = vld [vmem:[%s2854 + $0x78] sm:$0xff]
    %v2871 = vpack.c.bf16 %v2850, %v2848
    %v2872 = vpack.c.bf16 %v2851, %v2849
    %2873 = vmatprep.subr.bf16.mxu0 %v1759
    %2874 = vmatpush1.bf16.msra.mxu0 %v1758
    %2875 = vmatprep.subr.bf16.mxu0 %v1751
    %2876 = vmatpush1.bf16.msra.mxu0 %v1750
    %2877 = vmatprep.subr.bf16.mxu0 %v1743
    %2878 = vmatpush1.bf16.msra.mxu0 %v1742
    %2879 = vmatprep.subr.bf16.mxu0 %v1735
    %2880 = vmatpush1.bf16.msra.mxu0 %v1734
    %2881 = vmatprep.subr.bf16.mxu0 %v1727
    %2882 = vmatpush1.bf16.msra.mxu0 %v1726
    %2883 = vmatprep.subr.bf16.mxu0 %v1719
    %2884 = vmatpush1.bf16.msra.mxu0 %v1718
    %2885 = vmatprep.subr.bf16.mxu0 %v1711
    %2886 = vmatpush1.bf16.msra.mxu0 %v1710
    %2887 = vmatprep.subr.bf16.mxu0 %v1703
    %2888 = vmatpush1.bf16.msra.mxu0 %v1702
    %2889 = vmatprep.subr.bf16.mxu0 %v1823
    %2890 = vmatpush2.bf16.msra.mxu0 %v1822
    %2891 = vmatprep.subr.bf16.mxu0 %v1815
    %2892 = vmatpush2.bf16.msra.mxu0 %v1814
    %2893 = vmatprep.subr.bf16.mxu0 %v1807
    %2894 = vmatpush2.bf16.msra.mxu0 %v1806
    %2895 = vmatprep.subr.bf16.mxu0 %v1799
    %2896 = vmatpush2.bf16.msra.mxu0 %v1798
    %2897 = vmatprep.subr.bf16.mxu0 %v1791
    %2898 = vmatpush2.bf16.msra.mxu0 %v1790
    %2899 = vmatprep.subr.bf16.mxu0 %v1783
    %2900 = vmatpush2.bf16.msra.mxu0 %v1782
    %2901 = vmatprep.subr.bf16.mxu0 %v1775
    %2902 = vmatpush2.bf16.msra.mxu0 %v1774
    %2903 = vmatprep.subr.bf16.mxu0 %v1767
    %2904 = vmatpush2.bf16.msra.mxu0 %v1766
    %2905 = vmatprep.mubr.bf16.mxu0 %v2872
    %2906 = vmatmul.mubr.bf16.gmra.mxu0 %v2871
    %v2907 = vpop.f32.mrf.mxu0
    %v2908 = vadd.f32 0.0, %v2907
    %v2909 = vpop.f32.mrf.mxu0
    %v2910 = vadd.f32 0.0, %v2909
    %v2911 = vpop.f32.mrf.mxu0
    %v2912 = vadd.f32 0.0, %v2911
    %v2913 = vpop.f32.mrf.mxu0
    %v2914 = vadd.f32 0.0, %v2913
    %2915 = vdwg.mxu0
    %2916 = vmatprep.subr.bf16.mxu0 %v1761
    %2917 = vmatpush1.bf16.msra.mxu0 %v1760
    %2918 = vmatprep.subr.bf16.mxu0 %v1753
    %2919 = vmatpush1.bf16.msra.mxu0 %v1752
    %2920 = vmatprep.subr.bf16.mxu0 %v1745
    %2921 = vmatpush1.bf16.msra.mxu0 %v1744
    %2922 = vmatprep.subr.bf16.mxu0 %v1737
    %2923 = vmatpush1.bf16.msra.mxu0 %v1736
    %2924 = vmatprep.subr.bf16.mxu0 %v1729
    %2925 = vmatpush1.bf16.msra.mxu0 %v1728
    %2926 = vmatprep.subr.bf16.mxu0 %v1721
    %2927 = vmatpush1.bf16.msra.mxu0 %v1720
    %2928 = vmatprep.subr.bf16.mxu0 %v1713
    %2929 = vmatpush1.bf16.msra.mxu0 %v1712
    %2930 = vmatprep.subr.bf16.mxu0 %v1705
    %2931 = vmatpush1.bf16.msra.mxu0 %v1704
    %2932 = vmatprep.subr.bf16.mxu0 %v1825
    %2933 = vmatpush2.bf16.msra.mxu0 %v1824
    %2934 = vmatprep.subr.bf16.mxu0 %v1817
    %2935 = vmatpush2.bf16.msra.mxu0 %v1816
    %2936 = vmatprep.subr.bf16.mxu0 %v1809
    %2937 = vmatpush2.bf16.msra.mxu0 %v1808
    %2938 = vmatprep.subr.bf16.mxu0 %v1801
    %2939 = vmatpush2.bf16.msra.mxu0 %v1800
    %2940 = vmatprep.subr.bf16.mxu0 %v1793
    %2941 = vmatpush2.bf16.msra.mxu0 %v1792
    %2942 = vmatprep.subr.bf16.mxu0 %v1785
    %2943 = vmatpush2.bf16.msra.mxu0 %v1784
    %2944 = vmatprep.subr.bf16.mxu0 %v1777
    %2945 = vmatpush2.bf16.msra.mxu0 %v1776
    %2946 = vmatprep.subr.bf16.mxu0 %v1769
    %2947 = vmatpush2.bf16.msra.mxu0 %v1768
    %2948 = vmatprep.mubr.bf16.mxu0 %v2872
    %2949 = vmatmul.mubr.bf16.gmra.mxu0 %v2871
    %v2950 = vpop.f32.mrf.mxu0
    %v2951 = vadd.f32 0.0, %v2950
    %v2952 = vpop.f32.mrf.mxu0
    %v2953 = vadd.f32 0.0, %v2952
    %v2954 = vpop.f32.mrf.mxu0
    %v2955 = vadd.f32 0.0, %v2954
    %v2956 = vpop.f32.mrf.mxu0
    %v2957 = vadd.f32 0.0, %v2956
    %2958 = vdwg.mxu0
    %2959 = vmatprep.subr.bf16.mxu0 %v1763
    %2960 = vmatpush1.bf16.msra.mxu0 %v1762
    %2961 = vmatprep.subr.bf16.mxu0 %v1755
    %2962 = vmatpush1.bf16.msra.mxu0 %v1754
    %2963 = vmatprep.subr.bf16.mxu0 %v1747
    %2964 = vmatpush1.bf16.msra.mxu0 %v1746
    %2965 = vmatprep.subr.bf16.mxu0 %v1739
    %2966 = vmatpush1.bf16.msra.mxu0 %v1738
    %2967 = vmatprep.subr.bf16.mxu0 %v1731
    %2968 = vmatpush1.bf16.msra.mxu0 %v1730
    %2969 = vmatprep.subr.bf16.mxu0 %v1723
    %2970 = vmatpush1.bf16.msra.mxu0 %v1722
    %2971 = vmatprep.subr.bf16.mxu0 %v1715
    %2972 = vmatpush1.bf16.msra.mxu0 %v1714
    %2973 = vmatprep.subr.bf16.mxu0 %v1707
    %2974 = vmatpush1.bf16.msra.mxu0 %v1706
    %2975 = vmatprep.subr.bf16.mxu0 %v1827
    %2976 = vmatpush2.bf16.msra.mxu0 %v1826
    %2977 = vmatprep.subr.bf16.mxu0 %v1819
    %2978 = vmatpush2.bf16.msra.mxu0 %v1818
    %2979 = vmatprep.subr.bf16.mxu0 %v1811
    %2980 = vmatpush2.bf16.msra.mxu0 %v1810
    %2981 = vmatprep.subr.bf16.mxu0 %v1803
    %2982 = vmatpush2.bf16.msra.mxu0 %v1802
    %2983 = vmatprep.subr.bf16.mxu0 %v1795
    %2984 = vmatpush2.bf16.msra.mxu0 %v1794
    %2985 = vmatprep.subr.bf16.mxu0 %v1787
    %2986 = vmatpush2.bf16.msra.mxu0 %v1786
    %2987 = vmatprep.subr.bf16.mxu0 %v1779
    %2988 = vmatpush2.bf16.msra.mxu0 %v1778
    %2989 = vmatprep.subr.bf16.mxu0 %v1771
    %2990 = vmatpush2.bf16.msra.mxu0 %v1770
    %2991 = vmatprep.mubr.bf16.mxu0 %v2872
    %2992 = vmatmul.mubr.bf16.gmra.mxu0 %v2871
    %v2993 = vpop.f32.mrf.mxu0
    %v2994 = vadd.f32 0.0, %v2993
    %v2995 = vpop.f32.mrf.mxu0
    %v2996 = vadd.f32 0.0, %v2995
    %v2997 = vpop.f32.mrf.mxu0
    %v2998 = vadd.f32 0.0, %v2997
    %v2999 = vpop.f32.mrf.mxu0
    %v3000 = vadd.f32 0.0, %v2999
    %3001 = vdwg.mxu0
    %3002 = vmatprep.subr.bf16.mxu0 %v1765
    %3003 = vmatpush1.bf16.msra.mxu0 %v1764
    %3004 = vmatprep.subr.bf16.mxu0 %v1757
    %3005 = vmatpush1.bf16.msra.mxu0 %v1756
    %3006 = vmatprep.subr.bf16.mxu0 %v1749
    %3007 = vmatpush1.bf16.msra.mxu0 %v1748
    %3008 = vmatprep.subr.bf16.mxu0 %v1741
    %3009 = vmatpush1.bf16.msra.mxu0 %v1740
    %3010 = vmatprep.subr.bf16.mxu0 %v1733
    %3011 = vmatpush1.bf16.msra.mxu0 %v1732
    %3012 = vmatprep.subr.bf16.mxu0 %v1725
    %3013 = vmatpush1.bf16.msra.mxu0 %v1724
    %3014 = vmatprep.subr.bf16.mxu0 %v1717
    %3015 = vmatpush1.bf16.msra.mxu0 %v1716
    %3016 = vmatprep.subr.bf16.mxu0 %v1709
    %3017 = vmatpush1.bf16.msra.mxu0 %v1708
    %3018 = vmatprep.subr.bf16.mxu0 %v1829
    %3019 = vmatpush2.bf16.msra.mxu0 %v1828
    %3020 = vmatprep.subr.bf16.mxu0 %v1821
    %3021 = vmatpush2.bf16.msra.mxu0 %v1820
    %3022 = vmatprep.subr.bf16.mxu0 %v1813
    %3023 = vmatpush2.bf16.msra.mxu0 %v1812
    %3024 = vmatprep.subr.bf16.mxu0 %v1805
    %3025 = vmatpush2.bf16.msra.mxu0 %v1804
    %3026 = vmatprep.subr.bf16.mxu0 %v1797
    %3027 = vmatpush2.bf16.msra.mxu0 %v1796
    %3028 = vmatprep.subr.bf16.mxu0 %v1789
    %3029 = vmatpush2.bf16.msra.mxu0 %v1788
    %3030 = vmatprep.subr.bf16.mxu0 %v1781
    %3031 = vmatpush2.bf16.msra.mxu0 %v1780
    %3032 = vmatprep.subr.bf16.mxu0 %v1773
    %3033 = vmatpush2.bf16.msra.mxu0 %v1772
    %3034 = vmatprep.mubr.bf16.mxu0 %v2872
    %3035 = vmatmul.mubr.bf16.gmra.mxu0 %v2871
    %v3036 = vpop.f32.mrf.mxu0
    %v3037 = vadd.f32 0.0, %v3036
    %v3038 = vpop.f32.mrf.mxu0
    %v3039 = vadd.f32 0.0, %v3038
    %v3040 = vpop.f32.mrf.mxu0
    %v3041 = vadd.f32 0.0, %v3040
    %v3042 = vpop.f32.mrf.mxu0
    %v3043 = vadd.f32 0.0, %v3042
    %3044 = vdwg.mxu0
    %v3045 = vadd.f32 %v2855, %v2908
    %v3046 = vadd.f32 %v2856, %v2910
    %v3047 = vadd.f32 %v2857, %v2951
    %v3048 = vadd.f32 %v2858, %v2953
    %v3049 = vadd.f32 %v2859, %v2994
    %v3050 = vadd.f32 %v2860, %v2996
    %v3051 = vadd.f32 %v2861, %v3037
    %v3052 = vadd.f32 %v2862, %v3039
    %v3053 = vadd.f32 %v2863, %v2912
    %v3054 = vadd.f32 %v2864, %v2914
    %v3055 = vadd.f32 %v2865, %v2955
    %v3056 = vadd.f32 %v2866, %v2957
    %v3057 = vadd.f32 %v2867, %v2998
    %v3058 = vadd.f32 %v2868, %v3000
    %v3059 = vadd.f32 %v2869, %v3041
    %v3060 = vadd.f32 %v2870, %v3043
    %v3061 = vxor.u32 %v3045, 2147483648
    %v3062 = vxor.u32 %v3046, 2147483648
    %v3063 = vxor.u32 %v3047, 2147483648
    %v3064 = vxor.u32 %v3048, 2147483648
    %v3065 = vxor.u32 %v3053, 2147483648
    %v3066 = vxor.u32 %v3054, 2147483648
    %v3067 = vxor.u32 %v3055, 2147483648
    %v3068 = vxor.u32 %v3056, 2147483648
    %v3069 = vmul.f32 %v3061, 1.442695
    %v3070 = vpow.pop %v3069
    %v3071 = vmul.f32 %v3062, 1.442695
    %v3072 = vpow.pop %v3071
    %v3073 = vmul.f32 %v3063, 1.442695
    %v3074 = vpow.pop %v3073
    %v3075 = vmul.f32 %v3064, 1.442695
    %v3076 = vpow.pop %v3075
    %v3077 = vmul.f32 %v3065, 1.442695
    %v3078 = vpow.pop %v3077
    %v3079 = vmul.f32 %v3066, 1.442695
    %v3080 = vpow.pop %v3079
    %v3081 = vmul.f32 %v3067, 1.442695
    %v3082 = vpow.pop %v3081
    %v3083 = vmul.f32 %v3068, 1.442695
    %v3084 = vpow.pop %v3083
    %v3085 = vadd.f32 %v3070, 1.0
    %v3086 = vadd.f32 %v3072, 1.0
    %v3087 = vadd.f32 %v3074, 1.0
    %v3088 = vadd.f32 %v3076, 1.0
    %v3089 = vadd.f32 %v3078, 1.0
    %v3090 = vadd.f32 %v3080, 1.0
    %v3091 = vadd.f32 %v3082, 1.0
    %v3092 = vadd.f32 %v3084, 1.0
    %v3093 = vrcp.pop %v3085
    %v3094 = vmul.f32 1.0, %v3093
    %v3095 = vrcp.pop %v3086
    %v3096 = vmul.f32 1.0, %v3095
    %v3097 = vrcp.pop %v3087
    %v3098 = vmul.f32 1.0, %v3097
    %v3099 = vrcp.pop %v3088
    %v3100 = vmul.f32 1.0, %v3099
    %v3101 = vrcp.pop %v3089
    %v3102 = vmul.f32 1.0, %v3101
    %v3103 = vrcp.pop %v3090
    %v3104 = vmul.f32 1.0, %v3103
    %v3105 = vrcp.pop %v3091
    %v3106 = vmul.f32 1.0, %v3105
    %v3107 = vrcp.pop %v3092
    %v3108 = vmul.f32 1.0, %v3107
    %v3109 = vtanh.pop %v3049
    %v3110 = vtanh.pop %v3050
    %v3111 = vtanh.pop %v3057
    %v3112 = vtanh.pop %v3058
    %v3113 = vxor.u32 %v3051, 2147483648
    %v3114 = vxor.u32 %v3052, 2147483648
    %v3115 = vxor.u32 %v3059, 2147483648
    %v3116 = vxor.u32 %v3060, 2147483648
    %v3117 = vmul.f32 %v3113, 1.442695
    %v3118 = vpow.pop %v3117
    %v3119 = vmul.f32 %v3114, 1.442695
    %v3120 = vpow.pop %v3119
    %v3121 = vmul.f32 %v3115, 1.442695
    %v3122 = vpow.pop %v3121
    %v3123 = vmul.f32 %v3116, 1.442695
    %v3124 = vpow.pop %v3123
    %v3125 = vadd.f32 %v3118, 1.0
    %v3126 = vadd.f32 %v3120, 1.0
    %v3127 = vadd.f32 %v3122, 1.0
    %v3128 = vadd.f32 %v3124, 1.0
    %v3129 = vrcp.pop %v3125
    %v3130 = vmul.f32 1.0, %v3129
    %v3131 = vrcp.pop %v3126
    %v3132 = vmul.f32 1.0, %v3131
    %v3133 = vrcp.pop %v3127
    %v3134 = vmul.f32 1.0, %v3133
    %v3135 = vrcp.pop %v3128
    %v3136 = vmul.f32 1.0, %v3135
    %v3137 = vmul.f32 %v3098, %v2840
    %v3138 = vmul.f32 %v3100, %v2841
    %v3139 = vmul.f32 %v3106, %v2842
    %v3140 = vmul.f32 %v3108, %v2843
    %v3141 = vmul.f32 %v3094, %v3109
    %v3142 = vmul.f32 %v3096, %v3110
    %v3143 = vmul.f32 %v3102, %v3111
    %v3144 = vmul.f32 %v3104, %v3112
    %v3145 = vadd.f32 %v3137, %v3141
    %v3146 = vadd.f32 %v3138, %v3142
    %v3147 = vadd.f32 %v3139, %v3143
    %v3148 = vadd.f32 %v3140, %v3144
    %v3149 = vtanh.pop %v3145
    %v3150 = vtanh.pop %v3146
    %v3151 = vtanh.pop %v3147
    %v3152 = vtanh.pop %v3148
    %v3153 = vmul.f32 %v3130, %v3149
    %v3154 = vmul.f32 %v3132, %v3150
    %v3155 = vmul.f32 %v3134, %v3151
    %v3156 = vmul.f32 %v3136, %v3152
    %s3157 = smul.u32 8, 8
    %s3158 = smul.addr %s3157, 8
    %s3159 = scalar_lea.vmem [#allocation2], %s3158
    %v3160 = vld [vmem:[%s3159] sm:$0xff]
    %v3161 = vld [vmem:[%s3159 + $0x8] sm:$0xff]
    %v3162 = vld [vmem:[%s3159 + $0x10] sm:$0xff]
    %v3163 = vld [vmem:[%s3159 + $0x18] sm:$0xff]
    %v3164 = vld [vmem:[%s3159 + $0x20] sm:$0xff]
    %v3165 = vld [vmem:[%s3159 + $0x28] sm:$0xff]
    %v3166 = vld [vmem:[%s3159 + $0x30] sm:$0xff]
    %v3167 = vld [vmem:[%s3159 + $0x38] sm:$0xff]
    %v3168 = vld [vmem:[%s3159 + $0x40] sm:$0xff]
    %v3169 = vld [vmem:[%s3159 + $0x48] sm:$0xff]
    %v3170 = vld [vmem:[%s3159 + $0x50] sm:$0xff]
    %v3171 = vld [vmem:[%s3159 + $0x58] sm:$0xff]
    %v3172 = vld [vmem:[%s3159 + $0x60] sm:$0xff]
    %v3173 = vld [vmem:[%s3159 + $0x68] sm:$0xff]
    %v3174 = vld [vmem:[%s3159 + $0x70] sm:$0xff]
    %v3175 = vld [vmem:[%s3159 + $0x78] sm:$0xff]
    %v3176 = vpack.c.bf16 %v3155, %v3153
    %v3177 = vpack.c.bf16 %v3156, %v3154
    %3178 = vmatprep.subr.bf16.mxu0 %v1759
    %3179 = vmatpush1.bf16.msra.mxu0 %v1758
    %3180 = vmatprep.subr.bf16.mxu0 %v1751
    %3181 = vmatpush1.bf16.msra.mxu0 %v1750
    %3182 = vmatprep.subr.bf16.mxu0 %v1743
    %3183 = vmatpush1.bf16.msra.mxu0 %v1742
    %3184 = vmatprep.subr.bf16.mxu0 %v1735
    %3185 = vmatpush1.bf16.msra.mxu0 %v1734
    %3186 = vmatprep.subr.bf16.mxu0 %v1727
    %3187 = vmatpush1.bf16.msra.mxu0 %v1726
    %3188 = vmatprep.subr.bf16.mxu0 %v1719
    %3189 = vmatpush1.bf16.msra.mxu0 %v1718
    %3190 = vmatprep.subr.bf16.mxu0 %v1711
    %3191 = vmatpush1.bf16.msra.mxu0 %v1710
    %3192 = vmatprep.subr.bf16.mxu0 %v1703
    %3193 = vmatpush1.bf16.msra.mxu0 %v1702
    %3194 = vmatprep.subr.bf16.mxu0 %v1823
    %3195 = vmatpush2.bf16.msra.mxu0 %v1822
    %3196 = vmatprep.subr.bf16.mxu0 %v1815
    %3197 = vmatpush2.bf16.msra.mxu0 %v1814
    %3198 = vmatprep.subr.bf16.mxu0 %v1807
    %3199 = vmatpush2.bf16.msra.mxu0 %v1806
    %3200 = vmatprep.subr.bf16.mxu0 %v1799
    %3201 = vmatpush2.bf16.msra.mxu0 %v1798
    %3202 = vmatprep.subr.bf16.mxu0 %v1791
    %3203 = vmatpush2.bf16.msra.mxu0 %v1790
    %3204 = vmatprep.subr.bf16.mxu0 %v1783
    %3205 = vmatpush2.bf16.msra.mxu0 %v1782
    %3206 = vmatprep.subr.bf16.mxu0 %v1775
    %3207 = vmatpush2.bf16.msra.mxu0 %v1774
    %3208 = vmatprep.subr.bf16.mxu0 %v1767
    %3209 = vmatpush2.bf16.msra.mxu0 %v1766
    %3210 = vmatprep.mubr.bf16.mxu0 %v3177
    %3211 = vmatmul.mubr.bf16.gmra.mxu0 %v3176
    %v3212 = vpop.f32.mrf.mxu0
    %v3213 = vadd.f32 0.0, %v3212
    %v3214 = vpop.f32.mrf.mxu0
    %v3215 = vadd.f32 0.0, %v3214
    %v3216 = vpop.f32.mrf.mxu0
    %v3217 = vadd.f32 0.0, %v3216
    %v3218 = vpop.f32.mrf.mxu0
    %v3219 = vadd.f32 0.0, %v3218
    %3220 = vdwg.mxu0
    %3221 = vmatprep.subr.bf16.mxu0 %v1761
    %3222 = vmatpush1.bf16.msra.mxu0 %v1760
    %3223 = vmatprep.subr.bf16.mxu0 %v1753
    %3224 = vmatpush1.bf16.msra.mxu0 %v1752
    %3225 = vmatprep.subr.bf16.mxu0 %v1745
    %3226 = vmatpush1.bf16.msra.mxu0 %v1744
    %3227 = vmatprep.subr.bf16.mxu0 %v1737
    %3228 = vmatpush1.bf16.msra.mxu0 %v1736
    %3229 = vmatprep.subr.bf16.mxu0 %v1729
    %3230 = vmatpush1.bf16.msra.mxu0 %v1728
    %3231 = vmatprep.subr.bf16.mxu0 %v1721
    %3232 = vmatpush1.bf16.msra.mxu0 %v1720
    %3233 = vmatprep.subr.bf16.mxu0 %v1713
    %3234 = vmatpush1.bf16.msra.mxu0 %v1712
    %3235 = vmatprep.subr.bf16.mxu0 %v1705
    %3236 = vmatpush1.bf16.msra.mxu0 %v1704
    %3237 = vmatprep.subr.bf16.mxu0 %v1825
    %3238 = vmatpush2.bf16.msra.mxu0 %v1824
    %3239 = vmatprep.subr.bf16.mxu0 %v1817
    %3240 = vmatpush2.bf16.msra.mxu0 %v1816
    %3241 = vmatprep.subr.bf16.mxu0 %v1809
    %3242 = vmatpush2.bf16.msra.mxu0 %v1808
    %3243 = vmatprep.subr.bf16.mxu0 %v1801
    %3244 = vmatpush2.bf16.msra.mxu0 %v1800
    %3245 = vmatprep.subr.bf16.mxu0 %v1793
    %3246 = vmatpush2.bf16.msra.mxu0 %v1792
    %3247 = vmatprep.subr.bf16.mxu0 %v1785
    %3248 = vmatpush2.bf16.msra.mxu0 %v1784
    %3249 = vmatprep.subr.bf16.mxu0 %v1777
    %3250 = vmatpush2.bf16.msra.mxu0 %v1776
    %3251 = vmatprep.subr.bf16.mxu0 %v1769
    %3252 = vmatpush2.bf16.msra.mxu0 %v1768
    %3253 = vmatprep.mubr.bf16.mxu0 %v3177
    %3254 = vmatmul.mubr.bf16.gmra.mxu0 %v3176
    %v3255 = vpop.f32.mrf.mxu0
    %v3256 = vadd.f32 0.0, %v3255
    %v3257 = vpop.f32.mrf.mxu0
    %v3258 = vadd.f32 0.0, %v3257
    %v3259 = vpop.f32.mrf.mxu0
    %v3260 = vadd.f32 0.0, %v3259
    %v3261 = vpop.f32.mrf.mxu0
    %v3262 = vadd.f32 0.0, %v3261
    %3263 = vdwg.mxu0
    %3264 = vmatprep.subr.bf16.mxu0 %v1763
    %3265 = vmatpush1.bf16.msra.mxu0 %v1762
    %3266 = vmatprep.subr.bf16.mxu0 %v1755
    %3267 = vmatpush1.bf16.msra.mxu0 %v1754
    %3268 = vmatprep.subr.bf16.mxu0 %v1747
    %3269 = vmatpush1.bf16.msra.mxu0 %v1746
    %3270 = vmatprep.subr.bf16.mxu0 %v1739
    %3271 = vmatpush1.bf16.msra.mxu0 %v1738
    %3272 = vmatprep.subr.bf16.mxu0 %v1731
    %3273 = vmatpush1.bf16.msra.mxu0 %v1730
    %3274 = vmatprep.subr.bf16.mxu0 %v1723
    %3275 = vmatpush1.bf16.msra.mxu0 %v1722
    %3276 = vmatprep.subr.bf16.mxu0 %v1715
    %3277 = vmatpush1.bf16.msra.mxu0 %v1714
    %3278 = vmatprep.subr.bf16.mxu0 %v1707
    %3279 = vmatpush1.bf16.msra.mxu0 %v1706
    %3280 = vmatprep.subr.bf16.mxu0 %v1827
    %3281 = vmatpush2.bf16.msra.mxu0 %v1826
    %3282 = vmatprep.subr.bf16.mxu0 %v1819
    %3283 = vmatpush2.bf16.msra.mxu0 %v1818
    %3284 = vmatprep.subr.bf16.mxu0 %v1811
    %3285 = vmatpush2.bf16.msra.mxu0 %v1810
    %3286 = vmatprep.subr.bf16.mxu0 %v1803
    %3287 = vmatpush2.bf16.msra.mxu0 %v1802
    %3288 = vmatprep.subr.bf16.mxu0 %v1795
    %3289 = vmatpush2.bf16.msra.mxu0 %v1794
    %3290 = vmatprep.subr.bf16.mxu0 %v1787
    %3291 = vmatpush2.bf16.msra.mxu0 %v1786
    %3292 = vmatprep.subr.bf16.mxu0 %v1779
    %3293 = vmatpush2.bf16.msra.mxu0 %v1778
    %3294 = vmatprep.subr.bf16.mxu0 %v1771
    %3295 = vmatpush2.bf16.msra.mxu0 %v1770
    %3296 = vmatprep.mubr.bf16.mxu0 %v3177
    %3297 = vmatmul.mubr.bf16.gmra.mxu0 %v3176
    %v3298 = vpop.f32.mrf.mxu0
    %v3299 = vadd.f32 0.0, %v3298
    %v3300 = vpop.f32.mrf.mxu0
    %v3301 = vadd.f32 0.0, %v3300
    %v3302 = vpop.f32.mrf.mxu0
    %v3303 = vadd.f32 0.0, %v3302
    %v3304 = vpop.f32.mrf.mxu0
    %v3305 = vadd.f32 0.0, %v3304
    %3306 = vdwg.mxu0
    %3307 = vmatprep.subr.bf16.mxu0 %v1765
    %3308 = vmatpush1.bf16.msra.mxu0 %v1764
    %3309 = vmatprep.subr.bf16.mxu0 %v1757
    %3310 = vmatpush1.bf16.msra.mxu0 %v1756
    %3311 = vmatprep.subr.bf16.mxu0 %v1749
    %3312 = vmatpush1.bf16.msra.mxu0 %v1748
    %3313 = vmatprep.subr.bf16.mxu0 %v1741
    %3314 = vmatpush1.bf16.msra.mxu0 %v1740
    %3315 = vmatprep.subr.bf16.mxu0 %v1733
    %3316 = vmatpush1.bf16.msra.mxu0 %v1732
    %3317 = vmatprep.subr.bf16.mxu0 %v1725
    %3318 = vmatpush1.bf16.msra.mxu0 %v1724
    %3319 = vmatprep.subr.bf16.mxu0 %v1717
    %3320 = vmatpush1.bf16.msra.mxu0 %v1716
    %3321 = vmatprep.subr.bf16.mxu0 %v1709
    %3322 = vmatpush1.bf16.msra.mxu0 %v1708
    %3323 = vmatprep.subr.bf16.mxu0 %v1829
    %3324 = vmatpush2.bf16.msra.mxu0 %v1828
    %3325 = vmatprep.subr.bf16.mxu0 %v1821
    %3326 = vmatpush2.bf16.msra.mxu0 %v1820
    %3327 = vmatprep.subr.bf16.mxu0 %v1813
    %3328 = vmatpush2.bf16.msra.mxu0 %v1812
    %3329 = vmatprep.subr.bf16.mxu0 %v1805
    %3330 = vmatpush2.bf16.msra.mxu0 %v1804
    %3331 = vmatprep.subr.bf16.mxu0 %v1797
    %3332 = vmatpush2.bf16.msra.mxu0 %v1796
    %3333 = vmatprep.subr.bf16.mxu0 %v1789
    %3334 = vmatpush2.bf16.msra.mxu0 %v1788
    %3335 = vmatprep.subr.bf16.mxu0 %v1781
    %3336 = vmatpush2.bf16.msra.mxu0 %v1780
    %3337 = vmatprep.subr.bf16.mxu0 %v1773
    %3338 = vmatpush2.bf16.msra.mxu0 %v1772
    %3339 = vmatprep.mubr.bf16.mxu0 %v3177
    %3340 = vmatmul.mubr.bf16.gmra.mxu0 %v3176
    %v3341 = vpop.f32.mrf.mxu0
    %v3342 = vadd.f32 0.0, %v3341
    %v3343 = vpop.f32.mrf.mxu0
    %v3344 = vadd.f32 0.0, %v3343
    %v3345 = vpop.f32.mrf.mxu0
    %v3346 = vadd.f32 0.0, %v3345
    %v3347 = vpop.f32.mrf.mxu0
    %v3348 = vadd.f32 0.0, %v3347
    %3349 = vdwg.mxu0
    %v3350 = vadd.f32 %v3160, %v3213
    %v3351 = vadd.f32 %v3161, %v3215
    %v3352 = vadd.f32 %v3162, %v3256
    %v3353 = vadd.f32 %v3163, %v3258
    %v3354 = vadd.f32 %v3164, %v3299
    %v3355 = vadd.f32 %v3165, %v3301
    %v3356 = vadd.f32 %v3166, %v3342
    %v3357 = vadd.f32 %v3167, %v3344
    %v3358 = vadd.f32 %v3168, %v3217
    %v3359 = vadd.f32 %v3169, %v3219
    %v3360 = vadd.f32 %v3170, %v3260
    %v3361 = vadd.f32 %v3171, %v3262
    %v3362 = vadd.f32 %v3172, %v3303
    %v3363 = vadd.f32 %v3173, %v3305
    %v3364 = vadd.f32 %v3174, %v3346
    %v3365 = vadd.f32 %v3175, %v3348
    %v3366 = vxor.u32 %v3350, 2147483648
    %v3367 = vxor.u32 %v3351, 2147483648
    %v3368 = vxor.u32 %v3352, 2147483648
    %v3369 = vxor.u32 %v3353, 2147483648
    %v3370 = vxor.u32 %v3358, 2147483648
    %v3371 = vxor.u32 %v3359, 2147483648
    %v3372 = vxor.u32 %v3360, 2147483648
    %v3373 = vxor.u32 %v3361, 2147483648
    %v3374 = vmul.f32 %v3366, 1.442695
    %v3375 = vpow.pop %v3374
    %v3376 = vmul.f32 %v3367, 1.442695
    %v3377 = vpow.pop %v3376
    %v3378 = vmul.f32 %v3368, 1.442695
    %v3379 = vpow.pop %v3378
    %v3380 = vmul.f32 %v3369, 1.442695
    %v3381 = vpow.pop %v3380
    %v3382 = vmul.f32 %v3370, 1.442695
    %v3383 = vpow.pop %v3382
    %v3384 = vmul.f32 %v3371, 1.442695
    %v3385 = vpow.pop %v3384
    %v3386 = vmul.f32 %v3372, 1.442695
    %v3387 = vpow.pop %v3386
    %v3388 = vmul.f32 %v3373, 1.442695
    %v3389 = vpow.pop %v3388
    %v3390 = vadd.f32 %v3375, 1.0
    %v3391 = vadd.f32 %v3377, 1.0
    %v3392 = vadd.f32 %v3379, 1.0
    %v3393 = vadd.f32 %v3381, 1.0
    %v3394 = vadd.f32 %v3383, 1.0
    %v3395 = vadd.f32 %v3385, 1.0
    %v3396 = vadd.f32 %v3387, 1.0
    %v3397 = vadd.f32 %v3389, 1.0
    %v3398 = vrcp.pop %v3390
    %v3399 = vmul.f32 1.0, %v3398
    %v3400 = vrcp.pop %v3391
    %v3401 = vmul.f32 1.0, %v3400
    %v3402 = vrcp.pop %v3392
    %v3403 = vmul.f32 1.0, %v3402
    %v3404 = vrcp.pop %v3393
    %v3405 = vmul.f32 1.0, %v3404
    %v3406 = vrcp.pop %v3394
    %v3407 = vmul.f32 1.0, %v3406
    %v3408 = vrcp.pop %v3395
    %v3409 = vmul.f32 1.0, %v3408
    %v3410 = vrcp.pop %v3396
    %v3411 = vmul.f32 1.0, %v3410
    %v3412 = vrcp.pop %v3397
    %v3413 = vmul.f32 1.0, %v3412
    %v3414 = vtanh.pop %v3354
    %v3415 = vtanh.pop %v3355
    %v3416 = vtanh.pop %v3362
    %v3417 = vtanh.pop %v3363
    %v3418 = vxor.u32 %v3356, 2147483648
    %v3419 = vxor.u32 %v3357, 2147483648
    %v3420 = vxor.u32 %v3364, 2147483648
    %v3421 = vxor.u32 %v3365, 2147483648
    %v3422 = vmul.f32 %v3418, 1.442695
    %v3423 = vpow.pop %v3422
    %v3424 = vmul.f32 %v3419, 1.442695
    %v3425 = vpow.pop %v3424
    %v3426 = vmul.f32 %v3420, 1.442695
    %v3427 = vpow.pop %v3426
    %v3428 = vmul.f32 %v3421, 1.442695
    %v3429 = vpow.pop %v3428
    %v3430 = vadd.f32 %v3423, 1.0
    %v3431 = vadd.f32 %v3425, 1.0
    %v3432 = vadd.f32 %v3427, 1.0
    %v3433 = vadd.f32 %v3429, 1.0
    %v3434 = vrcp.pop %v3430
    %v3435 = vmul.f32 1.0, %v3434
    %v3436 = vrcp.pop %v3431
    %v3437 = vmul.f32 1.0, %v3436
    %v3438 = vrcp.pop %v3432
    %v3439 = vmul.f32 1.0, %v3438
    %v3440 = vrcp.pop %v3433
    %v3441 = vmul.f32 1.0, %v3440
    %v3442 = vmul.f32 %v3403, %v3145
    %v3443 = vmul.f32 %v3405, %v3146
    %v3444 = vmul.f32 %v3411, %v3147
    %v3445 = vmul.f32 %v3413, %v3148
    %v3446 = vmul.f32 %v3399, %v3414
    %v3447 = vmul.f32 %v3401, %v3415
    %v3448 = vmul.f32 %v3407, %v3416
    %v3449 = vmul.f32 %v3409, %v3417
    %v3450 = vadd.f32 %v3442, %v3446
    %v3451 = vadd.f32 %v3443, %v3447
    %v3452 = vadd.f32 %v3444, %v3448
    %v3453 = vadd.f32 %v3445, %v3449
    %v3454 = vtanh.pop %v3450
    %v3455 = vtanh.pop %v3451
    %v3456 = vtanh.pop %v3452
    %v3457 = vtanh.pop %v3453
    %v3458 = vmul.f32 %v3435, %v3454
    %v3459 = vmul.f32 %v3437, %v3455
    %v3460 = vmul.f32 %v3439, %v3456
    %v3461 = vmul.f32 %v3441, %v3457
    %s3462 = smul.u32 10, 8
    %s3463 = smul.addr %s3462, 8
    %s3464 = scalar_lea.vmem [#allocation2], %s3463
    %v3465 = vld [vmem:[%s3464] sm:$0xff]
    %v3466 = vld [vmem:[%s3464 + $0x8] sm:$0xff]
    %v3467 = vld [vmem:[%s3464 + $0x10] sm:$0xff]
    %v3468 = vld [vmem:[%s3464 + $0x18] sm:$0xff]
    %v3469 = vld [vmem:[%s3464 + $0x20] sm:$0xff]
    %v3470 = vld [vmem:[%s3464 + $0x28] sm:$0xff]
    %v3471 = vld [vmem:[%s3464 + $0x30] sm:$0xff]
    %v3472 = vld [vmem:[%s3464 + $0x38] sm:$0xff]
    %v3473 = vld [vmem:[%s3464 + $0x40] sm:$0xff]
    %v3474 = vld [vmem:[%s3464 + $0x48] sm:$0xff]
    %v3475 = vld [vmem:[%s3464 + $0x50] sm:$0xff]
    %v3476 = vld [vmem:[%s3464 + $0x58] sm:$0xff]
    %v3477 = vld [vmem:[%s3464 + $0x60] sm:$0xff]
    %v3478 = vld [vmem:[%s3464 + $0x68] sm:$0xff]
    %v3479 = vld [vmem:[%s3464 + $0x70] sm:$0xff]
    %v3480 = vld [vmem:[%s3464 + $0x78] sm:$0xff]
    %v3481 = vpack.c.bf16 %v3460, %v3458
    %v3482 = vpack.c.bf16 %v3461, %v3459
    %3483 = vmatprep.subr.bf16.mxu0 %v1759
    %3484 = vmatpush1.bf16.msra.mxu0 %v1758
    %3485 = vmatprep.subr.bf16.mxu0 %v1751
    %3486 = vmatpush1.bf16.msra.mxu0 %v1750
    %3487 = vmatprep.subr.bf16.mxu0 %v1743
    %3488 = vmatpush1.bf16.msra.mxu0 %v1742
    %3489 = vmatprep.subr.bf16.mxu0 %v1735
    %3490 = vmatpush1.bf16.msra.mxu0 %v1734
    %3491 = vmatprep.subr.bf16.mxu0 %v1727
    %3492 = vmatpush1.bf16.msra.mxu0 %v1726
    %3493 = vmatprep.subr.bf16.mxu0 %v1719
    %3494 = vmatpush1.bf16.msra.mxu0 %v1718
    %3495 = vmatprep.subr.bf16.mxu0 %v1711
    %3496 = vmatpush1.bf16.msra.mxu0 %v1710
    %3497 = vmatprep.subr.bf16.mxu0 %v1703
    %3498 = vmatpush1.bf16.msra.mxu0 %v1702
    %3499 = vmatprep.subr.bf16.mxu0 %v1823
    %3500 = vmatpush2.bf16.msra.mxu0 %v1822
    %3501 = vmatprep.subr.bf16.mxu0 %v1815
    %3502 = vmatpush2.bf16.msra.mxu0 %v1814
    %3503 = vmatprep.subr.bf16.mxu0 %v1807
    %3504 = vmatpush2.bf16.msra.mxu0 %v1806
    %3505 = vmatprep.subr.bf16.mxu0 %v1799
    %3506 = vmatpush2.bf16.msra.mxu0 %v1798
    %3507 = vmatprep.subr.bf16.mxu0 %v1791
    %3508 = vmatpush2.bf16.msra.mxu0 %v1790
    %3509 = vmatprep.subr.bf16.mxu0 %v1783
    %3510 = vmatpush2.bf16.msra.mxu0 %v1782
    %3511 = vmatprep.subr.bf16.mxu0 %v1775
    %3512 = vmatpush2.bf16.msra.mxu0 %v1774
    %3513 = vmatprep.subr.bf16.mxu0 %v1767
    %3514 = vmatpush2.bf16.msra.mxu0 %v1766
    %3515 = vmatprep.mubr.bf16.mxu0 %v3482
    %3516 = vmatmul.mubr.bf16.gmra.mxu0 %v3481
    %v3517 = vpop.f32.mrf.mxu0
    %v3518 = vadd.f32 0.0, %v3517
    %v3519 = vpop.f32.mrf.mxu0
    %v3520 = vadd.f32 0.0, %v3519
    %v3521 = vpop.f32.mrf.mxu0
    %v3522 = vadd.f32 0.0, %v3521
    %v3523 = vpop.f32.mrf.mxu0
    %v3524 = vadd.f32 0.0, %v3523
    %3525 = vdwg.mxu0
    %3526 = vmatprep.subr.bf16.mxu0 %v1761
    %3527 = vmatpush1.bf16.msra.mxu0 %v1760
    %3528 = vmatprep.subr.bf16.mxu0 %v1753
    %3529 = vmatpush1.bf16.msra.mxu0 %v1752
    %3530 = vmatprep.subr.bf16.mxu0 %v1745
    %3531 = vmatpush1.bf16.msra.mxu0 %v1744
    %3532 = vmatprep.subr.bf16.mxu0 %v1737
    %3533 = vmatpush1.bf16.msra.mxu0 %v1736
    %3534 = vmatprep.subr.bf16.mxu0 %v1729
    %3535 = vmatpush1.bf16.msra.mxu0 %v1728
    %3536 = vmatprep.subr.bf16.mxu0 %v1721
    %3537 = vmatpush1.bf16.msra.mxu0 %v1720
    %3538 = vmatprep.subr.bf16.mxu0 %v1713
    %3539 = vmatpush1.bf16.msra.mxu0 %v1712
    %3540 = vmatprep.subr.bf16.mxu0 %v1705
    %3541 = vmatpush1.bf16.msra.mxu0 %v1704
    %3542 = vmatprep.subr.bf16.mxu0 %v1825
    %3543 = vmatpush2.bf16.msra.mxu0 %v1824
    %3544 = vmatprep.subr.bf16.mxu0 %v1817
    %3545 = vmatpush2.bf16.msra.mxu0 %v1816
    %3546 = vmatprep.subr.bf16.mxu0 %v1809
    %3547 = vmatpush2.bf16.msra.mxu0 %v1808
    %3548 = vmatprep.subr.bf16.mxu0 %v1801
    %3549 = vmatpush2.bf16.msra.mxu0 %v1800
    %3550 = vmatprep.subr.bf16.mxu0 %v1793
    %3551 = vmatpush2.bf16.msra.mxu0 %v1792
    %3552 = vmatprep.subr.bf16.mxu0 %v1785
    %3553 = vmatpush2.bf16.msra.mxu0 %v1784
    %3554 = vmatprep.subr.bf16.mxu0 %v1777
    %3555 = vmatpush2.bf16.msra.mxu0 %v1776
    %3556 = vmatprep.subr.bf16.mxu0 %v1769
    %3557 = vmatpush2.bf16.msra.mxu0 %v1768
    %3558 = vmatprep.mubr.bf16.mxu0 %v3482
    %3559 = vmatmul.mubr.bf16.gmra.mxu0 %v3481
    %v3560 = vpop.f32.mrf.mxu0
    %v3561 = vadd.f32 0.0, %v3560
    %v3562 = vpop.f32.mrf.mxu0
    %v3563 = vadd.f32 0.0, %v3562
    %v3564 = vpop.f32.mrf.mxu0
    %v3565 = vadd.f32 0.0, %v3564
    %v3566 = vpop.f32.mrf.mxu0
    %v3567 = vadd.f32 0.0, %v3566
    %3568 = vdwg.mxu0
    %3569 = vmatprep.subr.bf16.mxu0 %v1763
    %3570 = vmatpush1.bf16.msra.mxu0 %v1762
    %3571 = vmatprep.subr.bf16.mxu0 %v1755
    %3572 = vmatpush1.bf16.msra.mxu0 %v1754
    %3573 = vmatprep.subr.bf16.mxu0 %v1747
    %3574 = vmatpush1.bf16.msra.mxu0 %v1746
    %3575 = vmatprep.subr.bf16.mxu0 %v1739
    %3576 = vmatpush1.bf16.msra.mxu0 %v1738
    %3577 = vmatprep.subr.bf16.mxu0 %v1731
    %3578 = vmatpush1.bf16.msra.mxu0 %v1730
    %3579 = vmatprep.subr.bf16.mxu0 %v1723
    %3580 = vmatpush1.bf16.msra.mxu0 %v1722
    %3581 = vmatprep.subr.bf16.mxu0 %v1715
    %3582 = vmatpush1.bf16.msra.mxu0 %v1714
    %3583 = vmatprep.subr.bf16.mxu0 %v1707
    %3584 = vmatpush1.bf16.msra.mxu0 %v1706
    %3585 = vmatprep.subr.bf16.mxu0 %v1827
    %3586 = vmatpush2.bf16.msra.mxu0 %v1826
    %3587 = vmatprep.subr.bf16.mxu0 %v1819
    %3588 = vmatpush2.bf16.msra.mxu0 %v1818
    %3589 = vmatprep.subr.bf16.mxu0 %v1811
    %3590 = vmatpush2.bf16.msra.mxu0 %v1810
    %3591 = vmatprep.subr.bf16.mxu0 %v1803
    %3592 = vmatpush2.bf16.msra.mxu0 %v1802
    %3593 = vmatprep.subr.bf16.mxu0 %v1795
    %3594 = vmatpush2.bf16.msra.mxu0 %v1794
    %3595 = vmatprep.subr.bf16.mxu0 %v1787
    %3596 = vmatpush2.bf16.msra.mxu0 %v1786
    %3597 = vmatprep.subr.bf16.mxu0 %v1779
    %3598 = vmatpush2.bf16.msra.mxu0 %v1778
    %3599 = vmatprep.subr.bf16.mxu0 %v1771
    %3600 = vmatpush2.bf16.msra.mxu0 %v1770
    %3601 = vmatprep.mubr.bf16.mxu0 %v3482
    %3602 = vmatmul.mubr.bf16.gmra.mxu0 %v3481
    %v3603 = vpop.f32.mrf.mxu0
    %v3604 = vadd.f32 0.0, %v3603
    %v3605 = vpop.f32.mrf.mxu0
    %v3606 = vadd.f32 0.0, %v3605
    %v3607 = vpop.f32.mrf.mxu0
    %v3608 = vadd.f32 0.0, %v3607
    %v3609 = vpop.f32.mrf.mxu0
    %v3610 = vadd.f32 0.0, %v3609
    %3611 = vdwg.mxu0
    %3612 = vmatprep.subr.bf16.mxu0 %v1765
    %3613 = vmatpush1.bf16.msra.mxu0 %v1764
    %3614 = vmatprep.subr.bf16.mxu0 %v1757
    %3615 = vmatpush1.bf16.msra.mxu0 %v1756
    %3616 = vmatprep.subr.bf16.mxu0 %v1749
    %3617 = vmatpush1.bf16.msra.mxu0 %v1748
    %3618 = vmatprep.subr.bf16.mxu0 %v1741
    %3619 = vmatpush1.bf16.msra.mxu0 %v1740
    %3620 = vmatprep.subr.bf16.mxu0 %v1733
    %3621 = vmatpush1.bf16.msra.mxu0 %v1732
    %3622 = vmatprep.subr.bf16.mxu0 %v1725
    %3623 = vmatpush1.bf16.msra.mxu0 %v1724
    %3624 = vmatprep.subr.bf16.mxu0 %v1717
    %3625 = vmatpush1.bf16.msra.mxu0 %v1716
    %3626 = vmatprep.subr.bf16.mxu0 %v1709
    %3627 = vmatpush1.bf16.msra.mxu0 %v1708
    %3628 = vmatprep.subr.bf16.mxu0 %v1829
    %3629 = vmatpush2.bf16.msra.mxu0 %v1828
    %3630 = vmatprep.subr.bf16.mxu0 %v1821
    %3631 = vmatpush2.bf16.msra.mxu0 %v1820
    %3632 = vmatprep.subr.bf16.mxu0 %v1813
    %3633 = vmatpush2.bf16.msra.mxu0 %v1812
    %3634 = vmatprep.subr.bf16.mxu0 %v1805
    %3635 = vmatpush2.bf16.msra.mxu0 %v1804
    %3636 = vmatprep.subr.bf16.mxu0 %v1797
    %3637 = vmatpush2.bf16.msra.mxu0 %v1796
    %3638 = vmatprep.subr.bf16.mxu0 %v1789
    %3639 = vmatpush2.bf16.msra.mxu0 %v1788
    %3640 = vmatprep.subr.bf16.mxu0 %v1781
    %3641 = vmatpush2.bf16.msra.mxu0 %v1780
    %3642 = vmatprep.subr.bf16.mxu0 %v1773
    %3643 = vmatpush2.bf16.msra.mxu0 %v1772
    %3644 = vmatprep.mubr.bf16.mxu0 %v3482
    %3645 = vmatmul.mubr.bf16.gmra.mxu0 %v3481
    %v3646 = vpop.f32.mrf.mxu0
    %v3647 = vadd.f32 0.0, %v3646
    %v3648 = vpop.f32.mrf.mxu0
    %v3649 = vadd.f32 0.0, %v3648
    %v3650 = vpop.f32.mrf.mxu0
    %v3651 = vadd.f32 0.0, %v3650
    %v3652 = vpop.f32.mrf.mxu0
    %v3653 = vadd.f32 0.0, %v3652
    %3654 = vdwg.mxu0
    %v3655 = vadd.f32 %v3465, %v3518
    %v3656 = vadd.f32 %v3466, %v3520
    %v3657 = vadd.f32 %v3467, %v3561
    %v3658 = vadd.f32 %v3468, %v3563
    %v3659 = vadd.f32 %v3469, %v3604
    %v3660 = vadd.f32 %v3470, %v3606
    %v3661 = vadd.f32 %v3471, %v3647
    %v3662 = vadd.f32 %v3472, %v3649
    %v3663 = vadd.f32 %v3473, %v3522
    %v3664 = vadd.f32 %v3474, %v3524
    %v3665 = vadd.f32 %v3475, %v3565
    %v3666 = vadd.f32 %v3476, %v3567
    %v3667 = vadd.f32 %v3477, %v3608
    %v3668 = vadd.f32 %v3478, %v3610
    %v3669 = vadd.f32 %v3479, %v3651
    %v3670 = vadd.f32 %v3480, %v3653
    %v3671 = vxor.u32 %v3655, 2147483648
    %v3672 = vxor.u32 %v3656, 2147483648
    %v3673 = vxor.u32 %v3657, 2147483648
    %v3674 = vxor.u32 %v3658, 2147483648
    %v3675 = vxor.u32 %v3663, 2147483648
    %v3676 = vxor.u32 %v3664, 2147483648
    %v3677 = vxor.u32 %v3665, 2147483648
    %v3678 = vxor.u32 %v3666, 2147483648
    %v3679 = vmul.f32 %v3671, 1.442695
    %v3680 = vpow.pop %v3679
    %v3681 = vmul.f32 %v3672, 1.442695
    %v3682 = vpow.pop %v3681
    %v3683 = vmul.f32 %v3673, 1.442695
    %v3684 = vpow.pop %v3683
    %v3685 = vmul.f32 %v3674, 1.442695
    %v3686 = vpow.pop %v3685
    %v3687 = vmul.f32 %v3675, 1.442695
    %v3688 = vpow.pop %v3687
    %v3689 = vmul.f32 %v3676, 1.442695
    %v3690 = vpow.pop %v3689
    %v3691 = vmul.f32 %v3677, 1.442695
    %v3692 = vpow.pop %v3691
    %v3693 = vmul.f32 %v3678, 1.442695
    %v3694 = vpow.pop %v3693
    %v3695 = vadd.f32 %v3680, 1.0
    %v3696 = vadd.f32 %v3682, 1.0
    %v3697 = vadd.f32 %v3684, 1.0
    %v3698 = vadd.f32 %v3686, 1.0
    %v3699 = vadd.f32 %v3688, 1.0
    %v3700 = vadd.f32 %v3690, 1.0
    %v3701 = vadd.f32 %v3692, 1.0
    %v3702 = vadd.f32 %v3694, 1.0
    %v3703 = vrcp.pop %v3695
    %v3704 = vmul.f32 1.0, %v3703
    %v3705 = vrcp.pop %v3696
    %v3706 = vmul.f32 1.0, %v3705
    %v3707 = vrcp.pop %v3697
    %v3708 = vmul.f32 1.0, %v3707
    %v3709 = vrcp.pop %v3698
    %v3710 = vmul.f32 1.0, %v3709
    %v3711 = vrcp.pop %v3699
    %v3712 = vmul.f32 1.0, %v3711
    %v3713 = vrcp.pop %v3700
    %v3714 = vmul.f32 1.0, %v3713
    %v3715 = vrcp.pop %v3701
    %v3716 = vmul.f32 1.0, %v3715
    %v3717 = vrcp.pop %v3702
    %v3718 = vmul.f32 1.0, %v3717
    %v3719 = vtanh.pop %v3659
    %v3720 = vtanh.pop %v3660
    %v3721 = vtanh.pop %v3667
    %v3722 = vtanh.pop %v3668
    %v3723 = vxor.u32 %v3661, 2147483648
    %v3724 = vxor.u32 %v3662, 2147483648
    %v3725 = vxor.u32 %v3669, 2147483648
    %v3726 = vxor.u32 %v3670, 2147483648
    %v3727 = vmul.f32 %v3723, 1.442695
    %v3728 = vpow.pop %v3727
    %v3729 = vmul.f32 %v3724, 1.442695
    %v3730 = vpow.pop %v3729
    %v3731 = vmul.f32 %v3725, 1.442695
    %v3732 = vpow.pop %v3731
    %v3733 = vmul.f32 %v3726, 1.442695
    %v3734 = vpow.pop %v3733
    %v3735 = vadd.f32 %v3728, 1.0
    %v3736 = vadd.f32 %v3730, 1.0
    %v3737 = vadd.f32 %v3732, 1.0
    %v3738 = vadd.f32 %v3734, 1.0
    %v3739 = vrcp.pop %v3735
    %v3740 = vmul.f32 1.0, %v3739
    %v3741 = vrcp.pop %v3736
    %v3742 = vmul.f32 1.0, %v3741
    %v3743 = vrcp.pop %v3737
    %v3744 = vmul.f32 1.0, %v3743
    %v3745 = vrcp.pop %v3738
    %v3746 = vmul.f32 1.0, %v3745
    %v3747 = vmul.f32 %v3708, %v3450
    %v3748 = vmul.f32 %v3710, %v3451
    %v3749 = vmul.f32 %v3716, %v3452
    %v3750 = vmul.f32 %v3718, %v3453
    %v3751 = vmul.f32 %v3704, %v3719
    %v3752 = vmul.f32 %v3706, %v3720
    %v3753 = vmul.f32 %v3712, %v3721
    %v3754 = vmul.f32 %v3714, %v3722
    %v3755 = vadd.f32 %v3747, %v3751
    %v3756 = vadd.f32 %v3748, %v3752
    %v3757 = vadd.f32 %v3749, %v3753
    %v3758 = vadd.f32 %v3750, %v3754
    %v3759 = vtanh.pop %v3755
    %v3760 = vtanh.pop %v3756
    %v3761 = vtanh.pop %v3757
    %v3762 = vtanh.pop %v3758
    %v3763 = vmul.f32 %v3740, %v3759
    %v3764 = vmul.f32 %v3742, %v3760
    %v3765 = vmul.f32 %v3744, %v3761
    %v3766 = vmul.f32 %v3746, %v3762
    %s3767 = smul.u32 12, 8
    %s3768 = smul.addr %s3767, 8
    %s3769 = scalar_lea.vmem [#allocation2], %s3768
    %v3770 = vld [vmem:[%s3769] sm:$0xff]
    %v3771 = vld [vmem:[%s3769 + $0x8] sm:$0xff]
    %v3772 = vld [vmem:[%s3769 + $0x10] sm:$0xff]
    %v3773 = vld [vmem:[%s3769 + $0x18] sm:$0xff]
    %v3774 = vld [vmem:[%s3769 + $0x20] sm:$0xff]
    %v3775 = vld [vmem:[%s3769 + $0x28] sm:$0xff]
    %v3776 = vld [vmem:[%s3769 + $0x30] sm:$0xff]
    %v3777 = vld [vmem:[%s3769 + $0x38] sm:$0xff]
    %v3778 = vld [vmem:[%s3769 + $0x40] sm:$0xff]
    %v3779 = vld [vmem:[%s3769 + $0x48] sm:$0xff]
    %v3780 = vld [vmem:[%s3769 + $0x50] sm:$0xff]
    %v3781 = vld [vmem:[%s3769 + $0x58] sm:$0xff]
    %v3782 = vld [vmem:[%s3769 + $0x60] sm:$0xff]
    %v3783 = vld [vmem:[%s3769 + $0x68] sm:$0xff]
    %v3784 = vld [vmem:[%s3769 + $0x70] sm:$0xff]
    %v3785 = vld [vmem:[%s3769 + $0x78] sm:$0xff]
    %v3786 = vpack.c.bf16 %v3765, %v3763
    %v3787 = vpack.c.bf16 %v3766, %v3764
    %3788 = vmatprep.subr.bf16.mxu0 %v1759
    %3789 = vmatpush1.bf16.msra.mxu0 %v1758
    %3790 = vmatprep.subr.bf16.mxu0 %v1751
    %3791 = vmatpush1.bf16.msra.mxu0 %v1750
    %3792 = vmatprep.subr.bf16.mxu0 %v1743
    %3793 = vmatpush1.bf16.msra.mxu0 %v1742
    %3794 = vmatprep.subr.bf16.mxu0 %v1735
    %3795 = vmatpush1.bf16.msra.mxu0 %v1734
    %3796 = vmatprep.subr.bf16.mxu0 %v1727
    %3797 = vmatpush1.bf16.msra.mxu0 %v1726
    %3798 = vmatprep.subr.bf16.mxu0 %v1719
    %3799 = vmatpush1.bf16.msra.mxu0 %v1718
    %3800 = vmatprep.subr.bf16.mxu0 %v1711
    %3801 = vmatpush1.bf16.msra.mxu0 %v1710
    %3802 = vmatprep.subr.bf16.mxu0 %v1703
    %3803 = vmatpush1.bf16.msra.mxu0 %v1702
    %3804 = vmatprep.subr.bf16.mxu0 %v1823
    %3805 = vmatpush2.bf16.msra.mxu0 %v1822
    %3806 = vmatprep.subr.bf16.mxu0 %v1815
    %3807 = vmatpush2.bf16.msra.mxu0 %v1814
    %3808 = vmatprep.subr.bf16.mxu0 %v1807
    %3809 = vmatpush2.bf16.msra.mxu0 %v1806
    %3810 = vmatprep.subr.bf16.mxu0 %v1799
    %3811 = vmatpush2.bf16.msra.mxu0 %v1798
    %3812 = vmatprep.subr.bf16.mxu0 %v1791
    %3813 = vmatpush2.bf16.msra.mxu0 %v1790
    %3814 = vmatprep.subr.bf16.mxu0 %v1783
    %3815 = vmatpush2.bf16.msra.mxu0 %v1782
    %3816 = vmatprep.subr.bf16.mxu0 %v1775
    %3817 = vmatpush2.bf16.msra.mxu0 %v1774
    %3818 = vmatprep.subr.bf16.mxu0 %v1767
    %3819 = vmatpush2.bf16.msra.mxu0 %v1766
    %3820 = vmatprep.mubr.bf16.mxu0 %v3787
    %3821 = vmatmul.mubr.bf16.gmra.mxu0 %v3786
    %v3822 = vpop.f32.mrf.mxu0
    %v3823 = vadd.f32 0.0, %v3822
    %v3824 = vpop.f32.mrf.mxu0
    %v3825 = vadd.f32 0.0, %v3824
    %v3826 = vpop.f32.mrf.mxu0
    %v3827 = vadd.f32 0.0, %v3826
    %v3828 = vpop.f32.mrf.mxu0
    %v3829 = vadd.f32 0.0, %v3828
    %3830 = vdwg.mxu0
    %3831 = vmatprep.subr.bf16.mxu0 %v1761
    %3832 = vmatpush1.bf16.msra.mxu0 %v1760
    %3833 = vmatprep.subr.bf16.mxu0 %v1753
    %3834 = vmatpush1.bf16.msra.mxu0 %v1752
    %3835 = vmatprep.subr.bf16.mxu0 %v1745
    %3836 = vmatpush1.bf16.msra.mxu0 %v1744
    %3837 = vmatprep.subr.bf16.mxu0 %v1737
    %3838 = vmatpush1.bf16.msra.mxu0 %v1736
    %3839 = vmatprep.subr.bf16.mxu0 %v1729
    %3840 = vmatpush1.bf16.msra.mxu0 %v1728
    %3841 = vmatprep.subr.bf16.mxu0 %v1721
    %3842 = vmatpush1.bf16.msra.mxu0 %v1720
    %3843 = vmatprep.subr.bf16.mxu0 %v1713
    %3844 = vmatpush1.bf16.msra.mxu0 %v1712
    %3845 = vmatprep.subr.bf16.mxu0 %v1705
    %3846 = vmatpush1.bf16.msra.mxu0 %v1704
    %3847 = vmatprep.subr.bf16.mxu0 %v1825
    %3848 = vmatpush2.bf16.msra.mxu0 %v1824
    %3849 = vmatprep.subr.bf16.mxu0 %v1817
    %3850 = vmatpush2.bf16.msra.mxu0 %v1816
    %3851 = vmatprep.subr.bf16.mxu0 %v1809
    %3852 = vmatpush2.bf16.msra.mxu0 %v1808
    %3853 = vmatprep.subr.bf16.mxu0 %v1801
    %3854 = vmatpush2.bf16.msra.mxu0 %v1800
    %3855 = vmatprep.subr.bf16.mxu0 %v1793
    %3856 = vmatpush2.bf16.msra.mxu0 %v1792
    %3857 = vmatprep.subr.bf16.mxu0 %v1785
    %3858 = vmatpush2.bf16.msra.mxu0 %v1784
    %3859 = vmatprep.subr.bf16.mxu0 %v1777
    %3860 = vmatpush2.bf16.msra.mxu0 %v1776
    %3861 = vmatprep.subr.bf16.mxu0 %v1769
    %3862 = vmatpush2.bf16.msra.mxu0 %v1768
    %3863 = vmatprep.mubr.bf16.mxu0 %v3787
    %3864 = vmatmul.mubr.bf16.gmra.mxu0 %v3786
    %v3865 = vpop.f32.mrf.mxu0
    %v3866 = vadd.f32 0.0, %v3865
    %v3867 = vpop.f32.mrf.mxu0
    %v3868 = vadd.f32 0.0, %v3867
    %v3869 = vpop.f32.mrf.mxu0
    %v3870 = vadd.f32 0.0, %v3869
    %v3871 = vpop.f32.mrf.mxu0
    %v3872 = vadd.f32 0.0, %v3871
    %3873 = vdwg.mxu0
    %3874 = vmatprep.subr.bf16.mxu0 %v1763
    %3875 = vmatpush1.bf16.msra.mxu0 %v1762
    %3876 = vmatprep.subr.bf16.mxu0 %v1755
    %3877 = vmatpush1.bf16.msra.mxu0 %v1754
    %3878 = vmatprep.subr.bf16.mxu0 %v1747
    %3879 = vmatpush1.bf16.msra.mxu0 %v1746
    %3880 = vmatprep.subr.bf16.mxu0 %v1739
    %3881 = vmatpush1.bf16.msra.mxu0 %v1738
    %3882 = vmatprep.subr.bf16.mxu0 %v1731
    %3883 = vmatpush1.bf16.msra.mxu0 %v1730
    %3884 = vmatprep.subr.bf16.mxu0 %v1723
    %3885 = vmatpush1.bf16.msra.mxu0 %v1722
    %3886 = vmatprep.subr.bf16.mxu0 %v1715
    %3887 = vmatpush1.bf16.msra.mxu0 %v1714
    %3888 = vmatprep.subr.bf16.mxu0 %v1707
    %3889 = vmatpush1.bf16.msra.mxu0 %v1706
    %3890 = vmatprep.subr.bf16.mxu0 %v1827
    %3891 = vmatpush2.bf16.msra.mxu0 %v1826
    %3892 = vmatprep.subr.bf16.mxu0 %v1819
    %3893 = vmatpush2.bf16.msra.mxu0 %v1818
    %3894 = vmatprep.subr.bf16.mxu0 %v1811
    %3895 = vmatpush2.bf16.msra.mxu0 %v1810
    %3896 = vmatprep.subr.bf16.mxu0 %v1803
    %3897 = vmatpush2.bf16.msra.mxu0 %v1802
    %3898 = vmatprep.subr.bf16.mxu0 %v1795
    %3899 = vmatpush2.bf16.msra.mxu0 %v1794
    %3900 = vmatprep.subr.bf16.mxu0 %v1787
    %3901 = vmatpush2.bf16.msra.mxu0 %v1786
    %3902 = vmatprep.subr.bf16.mxu0 %v1779
    %3903 = vmatpush2.bf16.msra.mxu0 %v1778
    %3904 = vmatprep.subr.bf16.mxu0 %v1771
    %3905 = vmatpush2.bf16.msra.mxu0 %v1770
    %3906 = vmatprep.mubr.bf16.mxu0 %v3787
    %3907 = vmatmul.mubr.bf16.gmra.mxu0 %v3786
    %v3908 = vpop.f32.mrf.mxu0
    %v3909 = vadd.f32 0.0, %v3908
    %v3910 = vpop.f32.mrf.mxu0
    %v3911 = vadd.f32 0.0, %v3910
    %v3912 = vpop.f32.mrf.mxu0
    %v3913 = vadd.f32 0.0, %v3912
    %v3914 = vpop.f32.mrf.mxu0
    %v3915 = vadd.f32 0.0, %v3914
    %3916 = vdwg.mxu0
    %3917 = vmatprep.subr.bf16.mxu0 %v1765
    %3918 = vmatpush1.bf16.msra.mxu0 %v1764
    %3919 = vmatprep.subr.bf16.mxu0 %v1757
    %3920 = vmatpush1.bf16.msra.mxu0 %v1756
    %3921 = vmatprep.subr.bf16.mxu0 %v1749
    %3922 = vmatpush1.bf16.msra.mxu0 %v1748
    %3923 = vmatprep.subr.bf16.mxu0 %v1741
    %3924 = vmatpush1.bf16.msra.mxu0 %v1740
    %3925 = vmatprep.subr.bf16.mxu0 %v1733
    %3926 = vmatpush1.bf16.msra.mxu0 %v1732
    %3927 = vmatprep.subr.bf16.mxu0 %v1725
    %3928 = vmatpush1.bf16.msra.mxu0 %v1724
    %3929 = vmatprep.subr.bf16.mxu0 %v1717
    %3930 = vmatpush1.bf16.msra.mxu0 %v1716
    %3931 = vmatprep.subr.bf16.mxu0 %v1709
    %3932 = vmatpush1.bf16.msra.mxu0 %v1708
    %3933 = vmatprep.subr.bf16.mxu0 %v1829
    %3934 = vmatpush2.bf16.msra.mxu0 %v1828
    %3935 = vmatprep.subr.bf16.mxu0 %v1821
    %3936 = vmatpush2.bf16.msra.mxu0 %v1820
    %3937 = vmatprep.subr.bf16.mxu0 %v1813
    %3938 = vmatpush2.bf16.msra.mxu0 %v1812
    %3939 = vmatprep.subr.bf16.mxu0 %v1805
    %3940 = vmatpush2.bf16.msra.mxu0 %v1804
    %3941 = vmatprep.subr.bf16.mxu0 %v1797
    %3942 = vmatpush2.bf16.msra.mxu0 %v1796
    %3943 = vmatprep.subr.bf16.mxu0 %v1789
    %3944 = vmatpush2.bf16.msra.mxu0 %v1788
    %3945 = vmatprep.subr.bf16.mxu0 %v1781
    %3946 = vmatpush2.bf16.msra.mxu0 %v1780
    %3947 = vmatprep.subr.bf16.mxu0 %v1773
    %3948 = vmatpush2.bf16.msra.mxu0 %v1772
    %3949 = vmatprep.mubr.bf16.mxu0 %v3787
    %3950 = vmatmul.mubr.bf16.gmra.mxu0 %v3786
    %v3951 = vpop.f32.mrf.mxu0
    %v3952 = vadd.f32 0.0, %v3951
    %v3953 = vpop.f32.mrf.mxu0
    %v3954 = vadd.f32 0.0, %v3953
    %v3955 = vpop.f32.mrf.mxu0
    %v3956 = vadd.f32 0.0, %v3955
    %v3957 = vpop.f32.mrf.mxu0
    %v3958 = vadd.f32 0.0, %v3957
    %3959 = vdwg.mxu0
    %v3960 = vadd.f32 %v3770, %v3823
    %v3961 = vadd.f32 %v3771, %v3825
    %v3962 = vadd.f32 %v3772, %v3866
    %v3963 = vadd.f32 %v3773, %v3868
    %v3964 = vadd.f32 %v3774, %v3909
    %v3965 = vadd.f32 %v3775, %v3911
    %v3966 = vadd.f32 %v3776, %v3952
    %v3967 = vadd.f32 %v3777, %v3954
    %v3968 = vadd.f32 %v3778, %v3827
    %v3969 = vadd.f32 %v3779, %v3829
    %v3970 = vadd.f32 %v3780, %v3870
    %v3971 = vadd.f32 %v3781, %v3872
    %v3972 = vadd.f32 %v3782, %v3913
    %v3973 = vadd.f32 %v3783, %v3915
    %v3974 = vadd.f32 %v3784, %v3956
    %v3975 = vadd.f32 %v3785, %v3958
    %v3976 = vxor.u32 %v3960, 2147483648
    %v3977 = vxor.u32 %v3961, 2147483648
    %v3978 = vxor.u32 %v3962, 2147483648
    %v3979 = vxor.u32 %v3963, 2147483648
    %v3980 = vxor.u32 %v3968, 2147483648
    %v3981 = vxor.u32 %v3969, 2147483648
    %v3982 = vxor.u32 %v3970, 2147483648
    %v3983 = vxor.u32 %v3971, 2147483648
    %v3984 = vmul.f32 %v3976, 1.442695
    %v3985 = vpow.pop %v3984
    %v3986 = vmul.f32 %v3977, 1.442695
    %v3987 = vpow.pop %v3986
    %v3988 = vmul.f32 %v3978, 1.442695
    %v3989 = vpow.pop %v3988
    %v3990 = vmul.f32 %v3979, 1.442695
    %v3991 = vpow.pop %v3990
    %v3992 = vmul.f32 %v3980, 1.442695
    %v3993 = vpow.pop %v3992
    %v3994 = vmul.f32 %v3981, 1.442695
    %v3995 = vpow.pop %v3994
    %v3996 = vmul.f32 %v3982, 1.442695
    %v3997 = vpow.pop %v3996
    %v3998 = vmul.f32 %v3983, 1.442695
    %v3999 = vpow.pop %v3998
    %v4000 = vadd.f32 %v3985, 1.0
    %v4001 = vadd.f32 %v3987, 1.0
    %v4002 = vadd.f32 %v3989, 1.0
    %v4003 = vadd.f32 %v3991, 1.0
    %v4004 = vadd.f32 %v3993, 1.0
    %v4005 = vadd.f32 %v3995, 1.0
    %v4006 = vadd.f32 %v3997, 1.0
    %v4007 = vadd.f32 %v3999, 1.0
    %v4008 = vrcp.pop %v4000
    %v4009 = vmul.f32 1.0, %v4008
    %v4010 = vrcp.pop %v4001
    %v4011 = vmul.f32 1.0, %v4010
    %v4012 = vrcp.pop %v4002
    %v4013 = vmul.f32 1.0, %v4012
    %v4014 = vrcp.pop %v4003
    %v4015 = vmul.f32 1.0, %v4014
    %v4016 = vrcp.pop %v4004
    %v4017 = vmul.f32 1.0, %v4016
    %v4018 = vrcp.pop %v4005
    %v4019 = vmul.f32 1.0, %v4018
    %v4020 = vrcp.pop %v4006
    %v4021 = vmul.f32 1.0, %v4020
    %v4022 = vrcp.pop %v4007
    %v4023 = vmul.f32 1.0, %v4022
    %v4024 = vtanh.pop %v3964
    %v4025 = vtanh.pop %v3965
    %v4026 = vtanh.pop %v3972
    %v4027 = vtanh.pop %v3973
    %v4028 = vxor.u32 %v3966, 2147483648
    %v4029 = vxor.u32 %v3967, 2147483648
    %v4030 = vxor.u32 %v3974, 2147483648
    %v4031 = vxor.u32 %v3975, 2147483648
    %v4032 = vmul.f32 %v4028, 1.442695
    %v4033 = vpow.pop %v4032
    %v4034 = vmul.f32 %v4029, 1.442695
    %v4035 = vpow.pop %v4034
    %v4036 = vmul.f32 %v4030, 1.442695
    %v4037 = vpow.pop %v4036
    %v4038 = vmul.f32 %v4031, 1.442695
    %v4039 = vpow.pop %v4038
    %v4040 = vadd.f32 %v4033, 1.0
    %v4041 = vadd.f32 %v4035, 1.0
    %v4042 = vadd.f32 %v4037, 1.0
    %v4043 = vadd.f32 %v4039, 1.0
    %v4044 = vrcp.pop %v4040
    %v4045 = vmul.f32 1.0, %v4044
    %v4046 = vrcp.pop %v4041
    %v4047 = vmul.f32 1.0, %v4046
    %v4048 = vrcp.pop %v4042
    %v4049 = vmul.f32 1.0, %v4048
    %v4050 = vrcp.pop %v4043
    %v4051 = vmul.f32 1.0, %v4050
    %v4052 = vmul.f32 %v4013, %v3755
    %v4053 = vmul.f32 %v4015, %v3756
    %v4054 = vmul.f32 %v4021, %v3757
    %v4055 = vmul.f32 %v4023, %v3758
    %v4056 = vmul.f32 %v4009, %v4024
    %v4057 = vmul.f32 %v4011, %v4025
    %v4058 = vmul.f32 %v4017, %v4026
    %v4059 = vmul.f32 %v4019, %v4027
    %v4060 = vadd.f32 %v4052, %v4056
    %v4061 = vadd.f32 %v4053, %v4057
    %v4062 = vadd.f32 %v4054, %v4058
    %v4063 = vadd.f32 %v4055, %v4059
    %v4064 = vtanh.pop %v4060
    %v4065 = vtanh.pop %v4061
    %v4066 = vtanh.pop %v4062
    %v4067 = vtanh.pop %v4063
    %v4068 = vmul.f32 %v4045, %v4064
    %v4069 = vmul.f32 %v4047, %v4065
    %v4070 = vmul.f32 %v4049, %v4066
    %v4071 = vmul.f32 %v4051, %v4067
    %s4072 = smul.u32 14, 8
    %s4073 = smul.addr %s4072, 8
    %s4074 = scalar_lea.vmem [#allocation2], %s4073
    %v4075 = vld [vmem:[%s4074] sm:$0xff]
    %v4076 = vld [vmem:[%s4074 + $0x8] sm:$0xff]
    %v4077 = vld [vmem:[%s4074 + $0x10] sm:$0xff]
    %v4078 = vld [vmem:[%s4074 + $0x18] sm:$0xff]
    %v4079 = vld [vmem:[%s4074 + $0x20] sm:$0xff]
    %v4080 = vld [vmem:[%s4074 + $0x28] sm:$0xff]
    %v4081 = vld [vmem:[%s4074 + $0x30] sm:$0xff]
    %v4082 = vld [vmem:[%s4074 + $0x38] sm:$0xff]
    %v4083 = vld [vmem:[%s4074 + $0x40] sm:$0xff]
    %v4084 = vld [vmem:[%s4074 + $0x48] sm:$0xff]
    %v4085 = vld [vmem:[%s4074 + $0x50] sm:$0xff]
    %v4086 = vld [vmem:[%s4074 + $0x58] sm:$0xff]
    %v4087 = vld [vmem:[%s4074 + $0x60] sm:$0xff]
    %v4088 = vld [vmem:[%s4074 + $0x68] sm:$0xff]
    %v4089 = vld [vmem:[%s4074 + $0x70] sm:$0xff]
    %v4090 = vld [vmem:[%s4074 + $0x78] sm:$0xff]
    %v4091 = vpack.c.bf16 %v4070, %v4068
    %v4092 = vpack.c.bf16 %v4071, %v4069
    %4093 = vmatprep.subr.bf16.mxu0 %v1759
    %4094 = vmatpush1.bf16.msra.mxu0 %v1758
    %4095 = vmatprep.subr.bf16.mxu0 %v1751
    %4096 = vmatpush1.bf16.msra.mxu0 %v1750
    %4097 = vmatprep.subr.bf16.mxu0 %v1743
    %4098 = vmatpush1.bf16.msra.mxu0 %v1742
    %4099 = vmatprep.subr.bf16.mxu0 %v1735
    %4100 = vmatpush1.bf16.msra.mxu0 %v1734
    %4101 = vmatprep.subr.bf16.mxu0 %v1727
    %4102 = vmatpush1.bf16.msra.mxu0 %v1726
    %4103 = vmatprep.subr.bf16.mxu0 %v1719
    %4104 = vmatpush1.bf16.msra.mxu0 %v1718
    %4105 = vmatprep.subr.bf16.mxu0 %v1711
    %4106 = vmatpush1.bf16.msra.mxu0 %v1710
    %4107 = vmatprep.subr.bf16.mxu0 %v1703
    %4108 = vmatpush1.bf16.msra.mxu0 %v1702
    %4109 = vmatprep.subr.bf16.mxu0 %v1823
    %4110 = vmatpush2.bf16.msra.mxu0 %v1822
    %4111 = vmatprep.subr.bf16.mxu0 %v1815
    %4112 = vmatpush2.bf16.msra.mxu0 %v1814
    %4113 = vmatprep.subr.bf16.mxu0 %v1807
    %4114 = vmatpush2.bf16.msra.mxu0 %v1806
    %4115 = vmatprep.subr.bf16.mxu0 %v1799
    %4116 = vmatpush2.bf16.msra.mxu0 %v1798
    %4117 = vmatprep.subr.bf16.mxu0 %v1791
    %4118 = vmatpush2.bf16.msra.mxu0 %v1790
    %4119 = vmatprep.subr.bf16.mxu0 %v1783
    %4120 = vmatpush2.bf16.msra.mxu0 %v1782
    %4121 = vmatprep.subr.bf16.mxu0 %v1775
    %4122 = vmatpush2.bf16.msra.mxu0 %v1774
    %4123 = vmatprep.subr.bf16.mxu0 %v1767
    %4124 = vmatpush2.bf16.msra.mxu0 %v1766
    %4125 = vmatprep.mubr.bf16.mxu0 %v4092
    %4126 = vmatmul.mubr.bf16.gmra.mxu0 %v4091
    %v4127 = vpop.f32.mrf.mxu0
    %v4128 = vadd.f32 0.0, %v4127
    %v4129 = vpop.f32.mrf.mxu0
    %v4130 = vadd.f32 0.0, %v4129
    %v4131 = vpop.f32.mrf.mxu0
    %v4132 = vadd.f32 0.0, %v4131
    %v4133 = vpop.f32.mrf.mxu0
    %v4134 = vadd.f32 0.0, %v4133
    %4135 = vdwg.mxu0
    %4136 = vmatprep.subr.bf16.mxu0 %v1761
    %4137 = vmatpush1.bf16.msra.mxu0 %v1760
    %4138 = vmatprep.subr.bf16.mxu0 %v1753
    %4139 = vmatpush1.bf16.msra.mxu0 %v1752
    %4140 = vmatprep.subr.bf16.mxu0 %v1745
    %4141 = vmatpush1.bf16.msra.mxu0 %v1744
    %4142 = vmatprep.subr.bf16.mxu0 %v1737
    %4143 = vmatpush1.bf16.msra.mxu0 %v1736
    %4144 = vmatprep.subr.bf16.mxu0 %v1729
    %4145 = vmatpush1.bf16.msra.mxu0 %v1728
    %4146 = vmatprep.subr.bf16.mxu0 %v1721
    %4147 = vmatpush1.bf16.msra.mxu0 %v1720
    %4148 = vmatprep.subr.bf16.mxu0 %v1713
    %4149 = vmatpush1.bf16.msra.mxu0 %v1712
    %4150 = vmatprep.subr.bf16.mxu0 %v1705
    %4151 = vmatpush1.bf16.msra.mxu0 %v1704
    %4152 = vmatprep.subr.bf16.mxu0 %v1825
    %4153 = vmatpush2.bf16.msra.mxu0 %v1824
    %4154 = vmatprep.subr.bf16.mxu0 %v1817
    %4155 = vmatpush2.bf16.msra.mxu0 %v1816
    %4156 = vmatprep.subr.bf16.mxu0 %v1809
    %4157 = vmatpush2.bf16.msra.mxu0 %v1808
    %4158 = vmatprep.subr.bf16.mxu0 %v1801
    %4159 = vmatpush2.bf16.msra.mxu0 %v1800
    %4160 = vmatprep.subr.bf16.mxu0 %v1793
    %4161 = vmatpush2.bf16.msra.mxu0 %v1792
    %4162 = vmatprep.subr.bf16.mxu0 %v1785
    %4163 = vmatpush2.bf16.msra.mxu0 %v1784
    %4164 = vmatprep.subr.bf16.mxu0 %v1777
    %4165 = vmatpush2.bf16.msra.mxu0 %v1776
    %4166 = vmatprep.subr.bf16.mxu0 %v1769
    %4167 = vmatpush2.bf16.msra.mxu0 %v1768
    %4168 = vmatprep.mubr.bf16.mxu0 %v4092
    %4169 = vmatmul.mubr.bf16.gmra.mxu0 %v4091
    %v4170 = vpop.f32.mrf.mxu0
    %v4171 = vadd.f32 0.0, %v4170
    %v4172 = vpop.f32.mrf.mxu0
    %v4173 = vadd.f32 0.0, %v4172
    %v4174 = vpop.f32.mrf.mxu0
    %v4175 = vadd.f32 0.0, %v4174
    %v4176 = vpop.f32.mrf.mxu0
    %v4177 = vadd.f32 0.0, %v4176
    %4178 = vdwg.mxu0
    %4179 = vmatprep.subr.bf16.mxu0 %v1763
    %4180 = vmatpush1.bf16.msra.mxu0 %v1762
    %4181 = vmatprep.subr.bf16.mxu0 %v1755
    %4182 = vmatpush1.bf16.msra.mxu0 %v1754
    %4183 = vmatprep.subr.bf16.mxu0 %v1747
    %4184 = vmatpush1.bf16.msra.mxu0 %v1746
    %4185 = vmatprep.subr.bf16.mxu0 %v1739
    %4186 = vmatpush1.bf16.msra.mxu0 %v1738
    %4187 = vmatprep.subr.bf16.mxu0 %v1731
    %4188 = vmatpush1.bf16.msra.mxu0 %v1730
    %4189 = vmatprep.subr.bf16.mxu0 %v1723
    %4190 = vmatpush1.bf16.msra.mxu0 %v1722
    %4191 = vmatprep.subr.bf16.mxu0 %v1715
    %4192 = vmatpush1.bf16.msra.mxu0 %v1714
    %4193 = vmatprep.subr.bf16.mxu0 %v1707
    %4194 = vmatpush1.bf16.msra.mxu0 %v1706
    %4195 = vmatprep.subr.bf16.mxu0 %v1827
    %4196 = vmatpush2.bf16.msra.mxu0 %v1826
    %4197 = vmatprep.subr.bf16.mxu0 %v1819
    %4198 = vmatpush2.bf16.msra.mxu0 %v1818
    %4199 = vmatprep.subr.bf16.mxu0 %v1811
    %4200 = vmatpush2.bf16.msra.mxu0 %v1810
    %4201 = vmatprep.subr.bf16.mxu0 %v1803
    %4202 = vmatpush2.bf16.msra.mxu0 %v1802
    %4203 = vmatprep.subr.bf16.mxu0 %v1795
    %4204 = vmatpush2.bf16.msra.mxu0 %v1794
    %4205 = vmatprep.subr.bf16.mxu0 %v1787
    %4206 = vmatpush2.bf16.msra.mxu0 %v1786
    %4207 = vmatprep.subr.bf16.mxu0 %v1779
    %4208 = vmatpush2.bf16.msra.mxu0 %v1778
    %4209 = vmatprep.subr.bf16.mxu0 %v1771
    %4210 = vmatpush2.bf16.msra.mxu0 %v1770
    %4211 = vmatprep.mubr.bf16.mxu0 %v4092
    %4212 = vmatmul.mubr.bf16.gmra.mxu0 %v4091
    %v4213 = vpop.f32.mrf.mxu0
    %v4214 = vadd.f32 0.0, %v4213
    %v4215 = vpop.f32.mrf.mxu0
    %v4216 = vadd.f32 0.0, %v4215
    %v4217 = vpop.f32.mrf.mxu0
    %v4218 = vadd.f32 0.0, %v4217
    %v4219 = vpop.f32.mrf.mxu0
    %v4220 = vadd.f32 0.0, %v4219
    %4221 = vdwg.mxu0
    %4222 = vmatprep.subr.bf16.mxu0 %v1765
    %4223 = vmatpush1.bf16.msra.mxu0 %v1764
    %4224 = vmatprep.subr.bf16.mxu0 %v1757
    %4225 = vmatpush1.bf16.msra.mxu0 %v1756
    %4226 = vmatprep.subr.bf16.mxu0 %v1749
    %4227 = vmatpush1.bf16.msra.mxu0 %v1748
    %4228 = vmatprep.subr.bf16.mxu0 %v1741
    %4229 = vmatpush1.bf16.msra.mxu0 %v1740
    %4230 = vmatprep.subr.bf16.mxu0 %v1733
    %4231 = vmatpush1.bf16.msra.mxu0 %v1732
    %4232 = vmatprep.subr.bf16.mxu0 %v1725
    %4233 = vmatpush1.bf16.msra.mxu0 %v1724
    %4234 = vmatprep.subr.bf16.mxu0 %v1717
    %4235 = vmatpush1.bf16.msra.mxu0 %v1716
    %4236 = vmatprep.subr.bf16.mxu0 %v1709
    %4237 = vmatpush1.bf16.msra.mxu0 %v1708
    %4238 = vmatprep.subr.bf16.mxu0 %v1829
    %4239 = vmatpush2.bf16.msra.mxu0 %v1828
    %4240 = vmatprep.subr.bf16.mxu0 %v1821
    %4241 = vmatpush2.bf16.msra.mxu0 %v1820
    %4242 = vmatprep.subr.bf16.mxu0 %v1813
    %4243 = vmatpush2.bf16.msra.mxu0 %v1812
    %4244 = vmatprep.subr.bf16.mxu0 %v1805
    %4245 = vmatpush2.bf16.msra.mxu0 %v1804
    %4246 = vmatprep.subr.bf16.mxu0 %v1797
    %4247 = vmatpush2.bf16.msra.mxu0 %v1796
    %4248 = vmatprep.subr.bf16.mxu0 %v1789
    %4249 = vmatpush2.bf16.msra.mxu0 %v1788
    %4250 = vmatprep.subr.bf16.mxu0 %v1781
    %4251 = vmatpush2.bf16.msra.mxu0 %v1780
    %4252 = vmatprep.subr.bf16.mxu0 %v1773
    %4253 = vmatpush2.bf16.msra.mxu0 %v1772
    %4254 = vmatprep.mubr.bf16.mxu0 %v4092
    %4255 = vmatmul.mubr.bf16.gmra.mxu0 %v4091
    %v4256 = vpop.f32.mrf.mxu0
    %v4257 = vadd.f32 0.0, %v4256
    %v4258 = vpop.f32.mrf.mxu0
    %v4259 = vadd.f32 0.0, %v4258
    %v4260 = vpop.f32.mrf.mxu0
    %v4261 = vadd.f32 0.0, %v4260
    %v4262 = vpop.f32.mrf.mxu0
    %v4263 = vadd.f32 0.0, %v4262
    %4264 = vdwg.mxu0
    %v4265 = vadd.f32 %v4075, %v4128
    %v4266 = vadd.f32 %v4076, %v4130
    %v4267 = vadd.f32 %v4077, %v4171
    %v4268 = vadd.f32 %v4078, %v4173
    %v4269 = vadd.f32 %v4079, %v4214
    %v4270 = vadd.f32 %v4080, %v4216
    %v4271 = vadd.f32 %v4081, %v4257
    %v4272 = vadd.f32 %v4082, %v4259
    %v4273 = vadd.f32 %v4083, %v4132
    %v4274 = vadd.f32 %v4084, %v4134
    %v4275 = vadd.f32 %v4085, %v4175
    %v4276 = vadd.f32 %v4086, %v4177
    %v4277 = vadd.f32 %v4087, %v4218
    %v4278 = vadd.f32 %v4088, %v4220
    %v4279 = vadd.f32 %v4089, %v4261
    %v4280 = vadd.f32 %v4090, %v4263
    %v4281 = vxor.u32 %v4265, 2147483648
    %v4282 = vxor.u32 %v4266, 2147483648
    %v4283 = vxor.u32 %v4267, 2147483648
    %v4284 = vxor.u32 %v4268, 2147483648
    %v4285 = vxor.u32 %v4273, 2147483648
    %v4286 = vxor.u32 %v4274, 2147483648
    %v4287 = vxor.u32 %v4275, 2147483648
    %v4288 = vxor.u32 %v4276, 2147483648
    %v4289 = vmul.f32 %v4281, 1.442695
    %v4290 = vpow.pop %v4289
    %v4291 = vmul.f32 %v4282, 1.442695
    %v4292 = vpow.pop %v4291
    %v4293 = vmul.f32 %v4283, 1.442695
    %v4294 = vpow.pop %v4293
    %v4295 = vmul.f32 %v4284, 1.442695
    %v4296 = vpow.pop %v4295
    %v4297 = vmul.f32 %v4285, 1.442695
    %v4298 = vpow.pop %v4297
    %v4299 = vmul.f32 %v4286, 1.442695
    %v4300 = vpow.pop %v4299
    %v4301 = vmul.f32 %v4287, 1.442695
    %v4302 = vpow.pop %v4301
    %v4303 = vmul.f32 %v4288, 1.442695
    %v4304 = vpow.pop %v4303
    %v4305 = vadd.f32 %v4290, 1.0
    %v4306 = vadd.f32 %v4292, 1.0
    %v4307 = vadd.f32 %v4294, 1.0
    %v4308 = vadd.f32 %v4296, 1.0
    %v4309 = vadd.f32 %v4298, 1.0
    %v4310 = vadd.f32 %v4300, 1.0
    %v4311 = vadd.f32 %v4302, 1.0
    %v4312 = vadd.f32 %v4304, 1.0
    %v4313 = vrcp.pop %v4305
    %v4314 = vmul.f32 1.0, %v4313
    %v4315 = vrcp.pop %v4306
    %v4316 = vmul.f32 1.0, %v4315
    %v4317 = vrcp.pop %v4307
    %v4318 = vmul.f32 1.0, %v4317
    %v4319 = vrcp.pop %v4308
    %v4320 = vmul.f32 1.0, %v4319
    %v4321 = vrcp.pop %v4309
    %v4322 = vmul.f32 1.0, %v4321
    %v4323 = vrcp.pop %v4310
    %v4324 = vmul.f32 1.0, %v4323
    %v4325 = vrcp.pop %v4311
    %v4326 = vmul.f32 1.0, %v4325
    %v4327 = vrcp.pop %v4312
    %v4328 = vmul.f32 1.0, %v4327
    %v4329 = vtanh.pop %v4269
    %v4330 = vtanh.pop %v4270
    %v4331 = vtanh.pop %v4277
    %v4332 = vtanh.pop %v4278
    %v4333 = vxor.u32 %v4271, 2147483648
    %v4334 = vxor.u32 %v4272, 2147483648
    %v4335 = vxor.u32 %v4279, 2147483648
    %v4336 = vxor.u32 %v4280, 2147483648
    %v4337 = vmul.f32 %v4333, 1.442695
    %v4338 = vpow.pop %v4337
    %v4339 = vmul.f32 %v4334, 1.442695
    %v4340 = vpow.pop %v4339
    %v4341 = vmul.f32 %v4335, 1.442695
    %v4342 = vpow.pop %v4341
    %v4343 = vmul.f32 %v4336, 1.442695
    %v4344 = vpow.pop %v4343
    %v4345 = vadd.f32 %v4338, 1.0
    %v4346 = vadd.f32 %v4340, 1.0
    %v4347 = vadd.f32 %v4342, 1.0
    %v4348 = vadd.f32 %v4344, 1.0
    %v4349 = vrcp.pop %v4345
    %v4350 = vmul.f32 1.0, %v4349
    %v4351 = vrcp.pop %v4346
    %v4352 = vmul.f32 1.0, %v4351
    %v4353 = vrcp.pop %v4347
    %v4354 = vmul.f32 1.0, %v4353
    %v4355 = vrcp.pop %v4348
    %v4356 = vmul.f32 1.0, %v4355
    %v4357 = vmul.f32 %v4318, %v4060
    %v4358 = vmul.f32 %v4320, %v4061
    %v4359 = vmul.f32 %v4326, %v4062
    %v4360 = vmul.f32 %v4328, %v4063
    %v4361 = vmul.f32 %v4314, %v4329
    %v4362 = vmul.f32 %v4316, %v4330
    %v4363 = vmul.f32 %v4322, %v4331
    %v4364 = vmul.f32 %v4324, %v4332
    %v4365 = vadd.f32 %v4357, %v4361
    %v4366 = vadd.f32 %v4358, %v4362
    %v4367 = vadd.f32 %v4359, %v4363
    %v4368 = vadd.f32 %v4360, %v4364
    %v4369 = vtanh.pop %v4365
    %v4370 = vtanh.pop %v4366
    %v4371 = vtanh.pop %v4367
    %v4372 = vtanh.pop %v4368
    %v4373 = vmul.f32 %v4350, %v4369
    %v4374 = vmul.f32 %v4352, %v4370
    %v4375 = vmul.f32 %v4354, %v4371
    %v4376 = vmul.f32 %v4356, %v4372
    %4377 = vst [vmem:[#allocation3] sm:$0xff] %v4373
    %4378 = vst [vmem:[#allocation3 + $0x8] sm:$0xff] %v4374
    %4379 = vst [vmem:[#allocation3 + $0x10] sm:$0xff] %v4375
    %4380 = vst [vmem:[#allocation3 + $0x18] sm:$0xff] %v4376
    %4381 = vst [vmem:[#allocation4] sm:$0xff] %v4365
    %4382 = vst [vmem:[#allocation4 + $0x8] sm:$0xff] %v4366
    %4383 = vst [vmem:[#allocation4 + $0x10] sm:$0xff] %v4367
    %4384 = vst [vmem:[#allocation4 + $0x18] sm:$0xff] %v4368
    // Predicated region
    $region46: #{tpu_custom_call.1} parent=1 // pred_check
      %p4385 = pneg %p79
    $region47: #{tpu_custom_call.1} parent=1 // pred_check_branch
      %4387 = sbr.rel (%p4385) target = $region49
    $region48: #{tpu_custom_call.1} parent=1 // pred_region
      %v4388 = vld [vmem:[%s4] sm:$0x3]
      %v4390 = vlaneseq
      %v4391 = vshrl.u32 %v4390, 7
      %v4392 = vsub.s32 0, %v4391
      %v4393 = vrot.slane %v4388, %v4392
      %v4394 = vlaneseq
      %v4395 = vshrl.u32 %v4394, 7
      %v4396 = vsub.s32 1, %v4395
      %v4397 = vrot.slane %v4388, %v4396
      %v4400 = vmul.f32 %v4373, %v4393
      %v4401 = vmul.f32 %v4374, %v4397
      %v4402 = vmul.f32 %v4375, %v4393
      %v4403 = vmul.f32 %v4376, %v4397
      %v4404 = vadd.f32 %v4400, %v4401
      %4405 = vadd.xlane.f32.xlu0 %v4404
      %v4406 = vpop.xlane.xlu0 %4405
      %v4407 = vadd.f32 %v4402, %v4403
      %4408 = vadd.xlane.f32.xlu0 %v4407
      %v4409 = vpop.xlane.xlu0 %4408
      %v4410 = vld [vmem:[#allocation5] sm:$0x1]
      %v4412 = vlaneseq
      %v4413 = vshrl.u32 %v4412, 7
      %v4414 = vsub.s32 0, %v4413
      %v4415 = vrot.slane %v4410, %v4414
      %v4417 = vadd.f32 %v4406, %v4415
      %v4418 = vadd.f32 %v4409, %v4415
      %v4419 = vxor.u32 %v4417, 2147483648
      %v4420 = vxor.u32 %v4418, 2147483648
      %v4421 = vmul.f32 %v4419, 1.442695
      %v4422 = vpow.pop %v4421
      %v4423 = vmul.f32 %v4420, 1.442695
      %v4424 = vpow.pop %v4423
      %v4425 = vadd.f32 %v4422, 1.0
      %v4426 = vadd.f32 %v4424, 1.0
      %v4427 = vrcp.pop %v4425
      %v4428 = vmul.f32 1.0, %v4427
      %v4429 = vrcp.pop %v4426
      %v4430 = vmul.f32 1.0, %v4429
      %vm4431 = vcmask 7168
      %4432 = vst.msk [vmem:[%s6] sm:$0xff] %vm4431, %v4428
      %4433 = vst.msk [vmem:[%s6 + $0x8] sm:$0xff] %vm4431, %v4430
    $region49: #{tpu_custom_call.1} parent=1 // pred_fallthru
      _
    // Predicated region
    $region50: #{tpu_custom_call.1} parent=1 // pred_check
      _
    $region51: #{tpu_custom_call.1} parent=1 // pred_check_branch
      %4435 = sbr.rel (0) target = $region53
    $region52: #{tpu_custom_call.1} parent=1 // pred_region
      _
    $region53: #{tpu_custom_call.1} parent=1 // pred_fallthru
      _
    // Predicated region
    $region54: #{tpu_custom_call.1} parent=1 // pred_check
      _
    $region55: #{tpu_custom_call.1} parent=1 // pred_check_branch
      %4437 = sbr.rel (0) target = $region57
    $region56: #{tpu_custom_call.1} parent=1 // pred_region
      _
    $region57: #{tpu_custom_call.1} parent=1 // pred_fallthru
      _
    %4438 = vsyncpa [#allocation7], 1
    %4439 = vsyncpa [#allocation9], 1
    %4440 = vsyncpa [#allocation12], 1

</llo_original>
